<compile_context>
chip_gen: v7x
topology: tpu7x:2x2x1
jax: 0.10.0
libtpu: 0.0.40
codegen_flags: <defaults>
</compile_context>

<pallas_src>
import functools

import numpy as np
import jax
import jax.numpy as jnp
from jax.experimental import pallas as pl
from jax.experimental.pallas import tpu as pltpu


def _layernorm(x, gamma, beta, eps=1e-5):
    mu = jnp.mean(x, axis=-1, keepdims=True)
    var = jnp.mean((x - mu) ** 2, axis=-1, keepdims=True)
    return (x - mu) * jax.lax.rsqrt(var + eps) * gamma + beta


def encoder_layer_kernel(x_ref,
                         wqkv_ref, bqkv_ref,
                         wfc_ref, bfc_ref, g1_ref, be1_ref,
                         w1_ref, b1_ref, w2_ref, b2_ref, g2_ref, be2_ref,
                         out_ref, attn_ref,
                         head_buf,
                         *, n_head, d_k, d_v):
    TB, L, D = x_ref.shape
    mm = wqkv_ref.dtype                    # matmul operand dtype (f32 or bf16)

    # Flatten the batch tile: M = TB*L rows for every MXU matmul.
    x = x_ref[...].astype(jnp.float32).reshape(TB * L, D)
    xm = x.astype(mm)

    # ----- Multi-head self-attention -----
    # Single fused QKV projection; 1/sqrt(d_k) already folded into the Q slab.
    qkv = jnp.dot(xm, wqkv_ref[...],
                  preferred_element_type=jnp.float32) + bqkv_ref[...]

    q_off = 0
    k_off = n_head * d_k
    v_off = 2 * n_head * d_k

    for h in range(n_head):                # static, small n_head
        qh = qkv[:, q_off + h * d_k:q_off + (h + 1) * d_k].reshape(TB, L, d_k)
        kh = qkv[:, k_off + h * d_k:k_off + (h + 1) * d_k].reshape(TB, L, d_k)
        vh = qkv[:, v_off + h * d_v:v_off + (h + 1) * d_v].reshape(TB, L, d_v)

        # Contract last dims directly (no explicit transpose of K).
        s = jnp.einsum("bqd,bkd->bqk", qh.astype(mm), kh.astype(mm),
                       preferred_element_type=jnp.float32)       # (TB, L, L)
        s = s - jnp.max(s, axis=-1, keepdims=True)
        e = jnp.exp(s)
        a = e * pl.reciprocal(jnp.sum(e, axis=-1, keepdims=True), approx=True)

        # Write attention map in its final (n_head, B, L, L) layout.
        attn_ref[h] = a.astype(attn_ref.dtype)

        oh = jnp.einsum("bqk,bkd->bqd", a.astype(mm), vh.astype(mm),
                        preferred_element_type=jnp.float32)      # (TB, L, d_v)
        # Heads concatenated along the lane axis for one fused fc matmul.
        head_buf[:, h * d_v:(h + 1) * d_v] = oh.reshape(TB * L, d_v)

    o = jnp.dot(head_buf[...].astype(mm), wfc_ref[...],
                preferred_element_type=jnp.float32) + bfc_ref[...]
    # TODO(synk): nn.Dropout layers are identity here (eval/inference mode).
    a1 = _layernorm(o + x, g1_ref[...], be1_ref[...])            # attn LN

    # ----- Position-wise feed-forward (Conv1d k=1 == pointwise linear) -----
    h1 = jnp.maximum(
        jnp.dot(a1.astype(mm), w1_ref[...],
                preferred_element_type=jnp.float32) + b1_ref[...], 0.0)
    h2 = jnp.dot(h1.astype(mm), w2_ref[...],
                 preferred_element_type=jnp.float32) + b2_ref[...]
    out = _layernorm(h2 + a1, g2_ref[...], be2_ref[...])

    out_ref[...] = out.reshape(TB, L, D).astype(out_ref.dtype)


def _vmem_capacity_bytes():
    """Generation-aware VMEM capacity with a safe fallback."""
    try:
        info = pltpu.get_tpu_info()
        return int(getattr(info, "vmem_capacity_bytes", 64 * 1024 * 1024))
    except Exception:
        return 64 * 1024 * 1024


def encoder_layer(x, params, *, n_head, d_k, d_v,
                  matmul_dtype=jnp.float32, attn_dtype=jnp.float32,
                  batch_tile=None):
    B, L, D = x.shape
    d_inner = params["w1_t"].shape[1]
    inv_temp = 1.0 / (float(d_k) ** 0.5)

    # One fused (D, n_head*(2*d_k+d_v)) QKV slab; softmax temperature folded
    # into the Q columns AND the Q bias.  Head order matches PyTorch's
    # .view(B, L, n_head, d_k) of the Linear output (head-major columns).
    wqkv = jnp.concatenate(
        [params["wq_t"] * inv_temp, params["wk_t"], params["wv_t"]],
        axis=1).astype(matmul_dtype)
    bqkv = jnp.concatenate(
        [params["bq"] * inv_temp, params["bk"], params["bv"]],
        axis=1).astype(jnp.float32)
    wfc = params["wfc_t"].astype(matmul_dtype)       # (n_head*d_v, D)
    w1 = params["w1_t"].astype(matmul_dtype)
    w2 = params["w2_t"].astype(matmul_dtype)

    weights = [wqkv, bqkv, wfc, params["bfc"], params["g1"], params["be1"],
               w1, params["b1"], w2, params["b2"], params["g2"], params["be2"]]
    weight_bytes = sum(int(w.size) * w.dtype.itemsize for w in weights)

    # ----- Per-generation VMEM budget & batch-tile derivation -----
    vmem_cap = _vmem_capacity_bytes()
    vmem_limit = min(int(vmem_cap * 0.8), 100 * 1024 * 1024)
    block_budget = max(1, int(vmem_limit * 0.6) - weight_bytes)

    x_bytes = x.dtype.itemsize
    attn_bytes = np.dtype(attn_dtype).itemsize

    def vmem_estimate(tb):
        rows = tb * L
        io = 2 * tb * L * D * 2 * x_bytes                 # x in + out, dbl-buffered
        attn = 2 * n_head * tb * L * L * attn_bytes       # attn block, dbl-buffered
        inter = 4 * rows * (n_head * (2 * d_k + d_v)      # fused qkv
                            + n_head * d_v                # head_buf scratch
                            + d_inner                     # ffn hidden
                            + 6 * D)                      # x/o/a1/h2/out + slack
        return io + attn + inter

    if batch_tile is None:
        target_rows = 512                                 # amortize per-step overhead
        tb = min(B, max(1, target_rows // L))
        if B >= 2:
            tb = min(tb, max(1, B // 2))                  # >= 2 grid steps (v7x: 2 TCs)
        while tb > 1 and (B % tb or vmem_estimate(tb) > block_budget):
            tb -= 1
        batch_tile = max(1, tb)
    TB = batch_tile
    assert B % TB == 0

    kernel = functools.partial(encoder_layer_kernel,
                               n_head=n_head, d_k=d_k, d_v=d_v)

    def make_call(weight_pipeline_mode):
        def const_spec(a):
            nd = a.ndim
            if weight_pipeline_mode is None:
                return pl.BlockSpec(a.shape, lambda b, _nd=nd: (0,) * _nd)
            return pl.BlockSpec(a.shape, lambda b, _nd=nd: (0,) * _nd,
                                pipeline_mode=weight_pipeline_mode)

        weight_specs = [const_spec(w) for w in weights]
        return pl.pallas_call(
            kernel,
            out_shape=(
                jax.ShapeDtypeStruct((B, L, D), x.dtype),
                jax.ShapeDtypeStruct((n_head, B, L, L), attn_dtype),
            ),
            grid_spec=pltpu.PrefetchScalarGridSpec(
                num_scalar_prefetch=0,
                grid=(B // TB,),
                in_specs=[pl.BlockSpec((TB, L, D), lambda b: (b, 0, 0))]
                         + weight_specs,
                out_specs=(
                    pl.BlockSpec((TB, L, D), lambda b: (b, 0, 0)),
                    pl.BlockSpec((n_head, TB, L, L), lambda b: (0, b, 0, 0)),
                ),
                scratch_shapes=[pltpu.VMEM((TB * L, n_head * d_v), jnp.float32)],
            ),
            compiler_params=pltpu.CompilerParams(
                dimension_semantics=("parallel",),
                vmem_limit_bytes=vmem_limit,
            ),
        )

    try:
        # Constant index maps -> single-buffer the resident weights.
        out, attn = make_call(pl.Buffered(1))(x, *weights)
    except Exception:
        # Fallback for jax versions that reject buffer_count=1.
        out, attn = make_call(None)(x, *weights)

    # (n_head, B, L, L) -> (n_head*B, L, L): pure metadata reshape, index = h*B + b
    # (matches the PyTorch attention layout); no extra HBM transpose pass.
    return out, attn.reshape(n_head * B, L, L)


def make_params(key, d_model, d_inner, n_head, d_k, d_v):
    ks = jax.random.split(key, 12)
    std_qk = (2.0 / (d_model + d_k)) ** 0.5
    std_v = (2.0 / (d_model + d_v)) ** 0.5
    std_fc = (2.0 / (n_head * d_v + d_model)) ** 0.5    # xavier-normal std

    # PyTorch Linear: y = x @ W.T + b ; we pre-transpose weights to (in, out).
    wq = std_qk * jax.random.normal(ks[0], (n_head * d_k, d_model), jnp.float32)
    wk = std_qk * jax.random.normal(ks[1], (n_head * d_k, d_model), jnp.float32)
    wv = std_v * jax.random.normal(ks[2], (n_head * d_v, d_model), jnp.float32)
    wfc = std_fc * jax.random.normal(ks[3], (d_model, n_head * d_v), jnp.float32)
    bq = 0.01 * jax.random.normal(ks[4], (1, n_head * d_k), jnp.float32)
    bk = 0.01 * jax.random.normal(ks[5], (1, n_head * d_k), jnp.float32)
    bv = 0.01 * jax.random.normal(ks[6], (1, n_head * d_v), jnp.float32)
    bfc = 0.01 * jax.random.normal(ks[7], (1, d_model), jnp.float32)

    # Conv1d(kernel_size=1) weights: (out_ch, in_ch, 1) -> squeeze -> (out, in).
    w1 = (1.0 / d_model ** 0.5) * jax.random.normal(ks[8], (d_inner, d_model), jnp.float32)
    w2 = (1.0 / d_inner ** 0.5) * jax.random.normal(ks[9], (d_model, d_inner), jnp.float32)
    b1 = 0.01 * jax.random.normal(ks[10], (1, d_inner), jnp.float32)
    b2 = 0.01 * jax.random.normal(ks[11], (1, d_model), jnp.float32)

    return dict(
        wq_t=wq.T, bq=bq, wk_t=wk.T, bk=bk, wv_t=wv.T, bv=bv,
        wfc_t=wfc.T, bfc=bfc,
        g1=jnp.ones((1, d_model), jnp.float32), be1=jnp.zeros((1, d_model), jnp.float32),
        w1_t=w1.T, b1=b1, w2_t=w2.T, b2=b2,
        g2=jnp.ones((1, d_model), jnp.float32), be2=jnp.zeros((1, d_model), jnp.float32),
    )


def encoder_layer_ref(x, params, *, n_head, d_k, d_v):
    """Pure-JAX mirror of the PyTorch forward (dropout = identity)."""
    B, L, D = x.shape
    q = x @ params["wq_t"] + params["bq"]
    k = x @ params["wk_t"] + params["bk"]
    v = x @ params["wv_t"] + params["bv"]
    q = q.reshape(B, L, n_head, d_k).transpose(2, 0, 1, 3).reshape(-1, L, d_k)
    k = k.reshape(B, L, n_head, d_k).transpose(2, 0, 1, 3).reshape(-1, L, d_k)
    v = v.reshape(B, L, n_head, d_v).transpose(2, 0, 1, 3).reshape(-1, L, d_v)
    s = jnp.einsum("bqd,bkd->bqk", q, k) / (d_k ** 0.5)
    attn = jax.nn.softmax(s, axis=2)
    o = jnp.einsum("bqk,bkd->bqd", attn, v)
    o = o.reshape(n_head, B, L, d_v).transpose(1, 2, 0, 3).reshape(B, L, -1)
    o = o @ params["wfc_t"] + params["bfc"]
    a1 = _layernorm(o + x, params["g1"], params["be1"])
    h1 = jnp.maximum(a1 @ params["w1_t"] + params["b1"], 0.0)
    h2 = h1 @ params["w2_t"] + params["b2"]
    out = _layernorm(h2 + a1, params["g2"], params["be2"])
    return out, attn


if __name__ == "__main__":
    B, L = 2, 8
    d_model, d_inner, n_head, d_k, d_v = 32, 64, 4, 8, 8

    key = jax.random.PRNGKey(0)
    kx, kp = jax.random.split(key)
    x = jax.random.normal(kx, (B, L, d_model), jnp.float32)
    params = make_params(kp, d_model, d_inner, n_head, d_k, d_v)

    out_ref, attn_ref = encoder_layer_ref(x, params, n_head=n_head, d_k=d_k, d_v=d_v)

    # f32 matmul path (tight-ish check; approx reciprocal in the softmax).
    out, attn = encoder_layer(x, params, n_head=n_head, d_k=d_k, d_v=d_v)
    jax.block_until_ready((out, attn))
    assert jnp.allclose(out, out_ref, atol=1e-2, rtol=1e-2)
    assert jnp.allclose(attn, attn_ref, atol=1e-2, rtol=1e-2)

    # bf16 matmul-operand path with bf16 attention writeback (f32 accumulation,
    # f32 softmax/layernorm); looser tolerances.
    out_bf, attn_bf = encoder_layer(x, params, n_head=n_head, d_k=d_k, d_v=d_v,
                                    matmul_dtype=jnp.bfloat16,
                                    attn_dtype=jnp.bfloat16)
    jax.block_until_ready((out_bf, attn_bf))
    assert jnp.allclose(out_bf, out_ref, atol=1.5e-1, rtol=1.5e-1)
    assert jnp.allclose(attn_bf.astype(jnp.float32), attn_ref, atol=5e-2, rtol=5e-2)

    print("KERNEL_OK")
</pallas_src>

<mosaic_0001>
module attributes {stable_mosaic.version = 11 : i64} {
  func.func @encoder_layer_kernel(%arg0: i32, %arg1: memref<1x8x32xf32, #tpu.memory_space<vmem>>, %arg2: memref<32x96xf32, #tpu.memory_space<vmem>>, %arg3: memref<1x96xf32, #tpu.memory_space<vmem>>, %arg4: memref<32x32xf32, #tpu.memory_space<vmem>>, %arg5: memref<1x32xf32, #tpu.memory_space<vmem>>, %arg6: memref<1x32xf32, #tpu.memory_space<vmem>>, %arg7: memref<1x32xf32, #tpu.memory_space<vmem>>, %arg8: memref<32x64xf32, #tpu.memory_space<vmem>>, %arg9: memref<1x64xf32, #tpu.memory_space<vmem>>, %arg10: memref<64x32xf32, #tpu.memory_space<vmem>>, %arg11: memref<1x32xf32, #tpu.memory_space<vmem>>, %arg12: memref<1x32xf32, #tpu.memory_space<vmem>>, %arg13: memref<1x32xf32, #tpu.memory_space<vmem>>, %arg14: memref<1x8x32xf32, #tpu.memory_space<vmem>>, %arg15: memref<4x1x8x8xf32, #tpu.memory_space<vmem>>, %arg16: memref<8x32xf32, #tpu.memory_space<vmem>>) attributes {dimension_semantics = [#tpu.dimension_semantics<parallel>], iteration_bounds = array<i64: 2>, scalar_prefetch = 0 : i64, scratch_operands = 1 : i64, tpu.core_type = #tpu.core_type<tc>, window_params = [{transform_indices = @transform_0, window_bounds = array<i64: 1, 8, 32>}, {pipeline_mode = #tpu.pipeline_mode<synchronous>, transform_indices = @transform_1, window_bounds = array<i64: 32, 96>}, {pipeline_mode = #tpu.pipeline_mode<synchronous>, transform_indices = @transform_2, window_bounds = array<i64: 1, 96>}, {pipeline_mode = #tpu.pipeline_mode<synchronous>, transform_indices = @transform_3, window_bounds = array<i64: 32, 32>}, {pipeline_mode = #tpu.pipeline_mode<synchronous>, transform_indices = @transform_4, window_bounds = array<i64: 1, 32>}, {pipeline_mode = #tpu.pipeline_mode<synchronous>, transform_indices = @transform_5, window_bounds = array<i64: 1, 32>}, {pipeline_mode = #tpu.pipeline_mode<synchronous>, transform_indices = @transform_6, window_bounds = array<i64: 1, 32>}, {pipeline_mode = #tpu.pipeline_mode<synchronous>, transform_indices = @transform_7, window_bounds = array<i64: 32, 64>}, {pipeline_mode = #tpu.pipeline_mode<synchronous>, transform_indices = @transform_8, window_bounds = array<i64: 1, 64>}, {pipeline_mode = #tpu.pipeline_mode<synchronous>, transform_indices = @transform_9, window_bounds = array<i64: 64, 32>}, {pipeline_mode = #tpu.pipeline_mode<synchronous>, transform_indices = @transform_10, window_bounds = array<i64: 1, 32>}, {pipeline_mode = #tpu.pipeline_mode<synchronous>, transform_indices = @transform_11, window_bounds = array<i64: 1, 32>}, {pipeline_mode = #tpu.pipeline_mode<synchronous>, transform_indices = @transform_12, window_bounds = array<i64: 1, 32>}, {transform_indices = @transform_13, window_bounds = array<i64: 1, 8, 32>}, {transform_indices = @transform_14, window_bounds = array<i64: 4, 1, 8, 8>}]} {
    %c0 = arith.constant 0 : index
    %c0_0 = arith.constant 0 : index
    %c0_1 = arith.constant 0 : index
    %0 = vector.load %arg1[%c0, %c0_0, %c0_1] : memref<1x8x32xf32, #tpu.memory_space<vmem>>, vector<1x8x32xf32>
    %1 = vector.shape_cast %0 : vector<1x8x32xf32> to vector<8x32xf32>
    %c0_2 = arith.constant 0 : index
    %c0_3 = arith.constant 0 : index
    %2 = vector.load %arg2[%c0_2, %c0_3] : memref<32x96xf32, #tpu.memory_space<vmem>>, vector<32x96xf32>
    %cst = arith.constant dense<0.000000e+00> : vector<8x96xf32>
    %3 = tpu.matmul %1, %2, %cst {dimension_numbers = #tpu.dot_dimension_numbers<[1], [0], [0], [1], [0, 0, 1, 1], [], []>} : vector<8x32xf32>, vector<32x96xf32>, vector<8x96xf32> -> vector<8x96xf32>
    %c0_4 = arith.constant 0 : index
    %c0_5 = arith.constant 0 : index
    %4 = vector.load %arg3[%c0_4, %c0_5] : memref<1x96xf32, #tpu.memory_space<vmem>>, vector<1x96xf32>
    %5 = vector.broadcast %4 : vector<1x96xf32> to vector<8x96xf32>
    %6 = arith.addf %3, %5 : vector<8x96xf32>
    %7 = vector.extract_strided_slice %6 {offsets = [0, 0], sizes = [8, 8], strides = [1, 1]} : vector<8x96xf32> to vector<8x8xf32>
    %8 = vector.shape_cast %7 : vector<8x8xf32> to vector<1x8x8xf32>
    %9 = vector.extract_strided_slice %6 {offsets = [0, 32], sizes = [8, 8], strides = [1, 1]} : vector<8x96xf32> to vector<8x8xf32>
    %10 = vector.shape_cast %9 : vector<8x8xf32> to vector<1x8x8xf32>
    %11 = vector.extract_strided_slice %6 {offsets = [0, 64], sizes = [8, 8], strides = [1, 1]} : vector<8x96xf32> to vector<8x8xf32>
    %12 = vector.shape_cast %11 : vector<8x8xf32> to vector<1x8x8xf32>
    "tpu.trace_start"() <{level = 10 : i32, message = "bqd,bkd->bqk"}> : () -> ()
    %cst_6 = arith.constant dense<0.000000e+00> : vector<1x8x8xf32>
    %13 = tpu.matmul %8, %10, %cst_6 {dimension_numbers = #tpu.dot_dimension_numbers<[2], [2], [1], [1], [0, 0, 0, 1, 1, 1], [0], [0]>} : vector<1x8x8xf32>, vector<1x8x8xf32>, vector<1x8x8xf32> -> vector<1x8x8xf32>
    "tpu.trace_stop"() : () -> ()
    %cst_7 = arith.constant dense<0xFF800000> : vector<1x8xf32>
    %14 = vector.multi_reduction <maximumf>, %13, %cst_7 [2] : vector<1x8x8xf32> to vector<1x8xf32>
    %15 = vector.shape_cast %14 : vector<1x8xf32> to vector<1x8x1xf32>
    %16 = vector.broadcast %15 : vector<1x8x1xf32> to vector<1x8x8xf32>
    %17 = arith.subf %13, %16 : vector<1x8x8xf32>
    %18 = math.exp %17 : vector<1x8x8xf32>
    %cst_8 = arith.constant dense<0.000000e+00> : vector<1x8xf32>
    %19 = vector.multi_reduction <add>, %18, %cst_8 [2] : vector<1x8x8xf32> to vector<1x8xf32>
    %20 = vector.shape_cast %19 : vector<1x8xf32> to vector<1x8x1xf32>
    %21 = tpu.reciprocal %20 {approx = true} : vector<1x8x1xf32> -> vector<1x8x1xf32>
    %22 = vector.broadcast %21 : vector<1x8x1xf32> to vector<1x8x8xf32>
    %23 = arith.mulf %18, %22 : vector<1x8x8xf32>
    %c0_9 = arith.constant 0 : index
    %c0_10 = arith.constant 0 : index
    %c0_11 = arith.constant 0 : index
    %c0_12 = arith.constant 0 : index
    %24 = vector.load %arg15[%c0_9, %c0_10, %c0_11, %c0_12] : memref<4x1x8x8xf32, #tpu.memory_space<vmem>>, vector<1x1x8x8xf32>
    %25 = vector.shape_cast %24 : vector<1x1x8x8xf32> to vector<1x8x8xf32>
    %26 = vector.shape_cast %23 : vector<1x8x8xf32> to vector<1x1x8x8xf32>
    tpu.vector_store %arg15[%c0_9, %c0_10, %c0_11, %c0_12], %26 {strides = array<i32>} : memref<4x1x8x8xf32, #tpu.memory_space<vmem>>, vector<1x1x8x8xf32>,
    "tpu.trace_start"() <{level = 10 : i32, message = "bqk,bkd->bqd"}> : () -> ()
    %cst_13 = arith.constant dense<0.000000e+00> : vector<1x8x8xf32>
    %27 = tpu.matmul %23, %12, %cst_13 {dimension_numbers = #tpu.dot_dimension_numbers<[2], [1], [1], [2], [0, 0, 0, 1, 1, 2], [0], [0]>} : vector<1x8x8xf32>, vector<1x8x8xf32>, vector<1x8x8xf32> -> vector<1x8x8xf32>
    "tpu.trace_stop"() : () -> ()
    %28 = vector.shape_cast %27 : vector<1x8x8xf32> to vector<8x8xf32>
    %c0_14 = arith.constant 0 : index
    %c0_15 = arith.constant 0 : index
    %29 = vector.load %arg16[%c0_14, %c0_15] : memref<8x32xf32, #tpu.memory_space<vmem>>, vector<8x8xf32>
    tpu.vector_store %arg16[%c0_14, %c0_15], %28 {strides = array<i32>} : memref<8x32xf32, #tpu.memory_space<vmem>>, vector<8x8xf32>,
    %30 = vector.extract_strided_slice %6 {offsets = [0, 8], sizes = [8, 8], strides = [1, 1]} : vector<8x96xf32> to vector<8x8xf32>
    %31 = vector.shape_cast %30 : vector<8x8xf32> to vector<1x8x8xf32>
    %32 = vector.extract_strided_slice %6 {offsets = [0, 40], sizes = [8, 8], strides = [1, 1]} : vector<8x96xf32> to vector<8x8xf32>
    %33 = vector.shape_cast %32 : vector<8x8xf32> to vector<1x8x8xf32>
    %34 = vector.extract_strided_slice %6 {offsets = [0, 72], sizes = [8, 8], strides = [1, 1]} : vector<8x96xf32> to vector<8x8xf32>
    %35 = vector.shape_cast %34 : vector<8x8xf32> to vector<1x8x8xf32>
    "tpu.trace_start"() <{level = 10 : i32, message = "bqd,bkd->bqk"}> : () -> ()
    %cst_16 = arith.constant dense<0.000000e+00> : vector<1x8x8xf32>
    %36 = tpu.matmul %31, %33, %cst_16 {dimension_numbers = #tpu.dot_dimension_numbers<[2], [2], [1], [1], [0, 0, 0, 1, 1, 1], [0], [0]>} : vector<1x8x8xf32>, vector<1x8x8xf32>, vector<1x8x8xf32> -> vector<1x8x8xf32>
    "tpu.trace_stop"() : () -> ()
    %cst_17 = arith.constant dense<0xFF800000> : vector<1x8xf32>
    %37 = vector.multi_reduction <maximumf>, %36, %cst_17 [2] : vector<1x8x8xf32> to vector<1x8xf32>
    %38 = vector.shape_cast %37 : vector<1x8xf32> to vector<1x8x1xf32>
    %39 = vector.broadcast %38 : vector<1x8x1xf32> to vector<1x8x8xf32>
    %40 = arith.subf %36, %39 : vector<1x8x8xf32>
    %41 = math.exp %40 : vector<1x8x8xf32>
    %cst_18 = arith.constant dense<0.000000e+00> : vector<1x8xf32>
    %42 = vector.multi_reduction <add>, %41, %cst_18 [2] : vector<1x8x8xf32> to vector<1x8xf32>
    %43 = vector.shape_cast %42 : vector<1x8xf32> to vector<1x8x1xf32>
    %44 = tpu.reciprocal %43 {approx = true} : vector<1x8x1xf32> -> vector<1x8x1xf32>
    %45 = vector.broadcast %44 : vector<1x8x1xf32> to vector<1x8x8xf32>
    %46 = arith.mulf %41, %45 : vector<1x8x8xf32>
    %c1 = arith.constant 1 : index
    %c0_19 = arith.constant 0 : index
    %c0_20 = arith.constant 0 : index
    %c0_21 = arith.constant 0 : index
    %47 = vector.load %arg15[%c1, %c0_19, %c0_20, %c0_21] : memref<4x1x8x8xf32, #tpu.memory_space<vmem>>, vector<1x1x8x8xf32>
    %48 = vector.shape_cast %47 : vector<1x1x8x8xf32> to vector<1x8x8xf32>
    %49 = vector.shape_cast %46 : vector<1x8x8xf32> to vector<1x1x8x8xf32>
    tpu.vector_store %arg15[%c1, %c0_19, %c0_20, %c0_21], %49 {strides = array<i32>} : memref<4x1x8x8xf32, #tpu.memory_space<vmem>>, vector<1x1x8x8xf32>,
    "tpu.trace_start"() <{level = 10 : i32, message = "bqk,bkd->bqd"}> : () -> ()
    %cst_22 = arith.constant dense<0.000000e+00> : vector<1x8x8xf32>
    %50 = tpu.matmul %46, %35, %cst_22 {dimension_numbers = #tpu.dot_dimension_numbers<[2], [1], [1], [2], [0, 0, 0, 1, 1, 2], [0], [0]>} : vector<1x8x8xf32>, vector<1x8x8xf32>, vector<1x8x8xf32> -> vector<1x8x8xf32>
    "tpu.trace_stop"() : () -> ()
    %51 = vector.shape_cast %50 : vector<1x8x8xf32> to vector<8x8xf32>
    %c0_23 = arith.constant 0 : index
    %c8 = arith.constant 8 : index
    %52 = vector.load %arg16[%c0_23, %c8] : memref<8x32xf32, #tpu.memory_space<vmem>>, vector<8x8xf32>
    tpu.vector_store %arg16[%c0_23, %c8], %51 {strides = array<i32>} : memref<8x32xf32, #tpu.memory_space<vmem>>, vector<8x8xf32>,
    %53 = vector.extract_strided_slice %6 {offsets = [0, 16], sizes = [8, 8], strides = [1, 1]} : vector<8x96xf32> to vector<8x8xf32>
    %54 = vector.shape_cast %53 : vector<8x8xf32> to vector<1x8x8xf32>
    %55 = vector.extract_strided_slice %6 {offsets = [0, 48], sizes = [8, 8], strides = [1, 1]} : vector<8x96xf32> to vector<8x8xf32>
    %56 = vector.shape_cast %55 : vector<8x8xf32> to vector<1x8x8xf32>
    %57 = vector.extract_strided_slice %6 {offsets = [0, 80], sizes = [8, 8], strides = [1, 1]} : vector<8x96xf32> to vector<8x8xf32>
    %58 = vector.shape_cast %57 : vector<8x8xf32> to vector<1x8x8xf32>
    "tpu.trace_start"() <{level = 10 : i32, message = "bqd,bkd->bqk"}> : () -> ()
    %cst_24 = arith.constant dense<0.000000e+00> : vector<1x8x8xf32>
    %59 = tpu.matmul %54, %56, %cst_24 {dimension_numbers = #tpu.dot_dimension_numbers<[2], [2], [1], [1], [0, 0, 0, 1, 1, 1], [0], [0]>} : vector<1x8x8xf32>, vector<1x8x8xf32>, vector<1x8x8xf32> -> vector<1x8x8xf32>
    "tpu.trace_stop"() : () -> ()
    %cst_25 = arith.constant dense<0xFF800000> : vector<1x8xf32>
    %60 = vector.multi_reduction <maximumf>, %59, %cst_25 [2] : vector<1x8x8xf32> to vector<1x8xf32>
    %61 = vector.shape_cast %60 : vector<1x8xf32> to vector<1x8x1xf32>
    %62 = vector.broadcast %61 : vector<1x8x1xf32> to vector<1x8x8xf32>
    %63 = arith.subf %59, %62 : vector<1x8x8xf32>
    %64 = math.exp %63 : vector<1x8x8xf32>
    %cst_26 = arith.constant dense<0.000000e+00> : vector<1x8xf32>
    %65 = vector.multi_reduction <add>, %64, %cst_26 [2] : vector<1x8x8xf32> to vector<1x8xf32>
    %66 = vector.shape_cast %65 : vector<1x8xf32> to vector<1x8x1xf32>
    %67 = tpu.reciprocal %66 {approx = true} : vector<1x8x1xf32> -> vector<1x8x1xf32>
    %68 = vector.broadcast %67 : vector<1x8x1xf32> to vector<1x8x8xf32>
    %69 = arith.mulf %64, %68 : vector<1x8x8xf32>
    %c2 = arith.constant 2 : index
    %c0_27 = arith.constant 0 : index
    %c0_28 = arith.constant 0 : index
    %c0_29 = arith.constant 0 : index
    %70 = vector.load %arg15[%c2, %c0_27, %c0_28, %c0_29] : memref<4x1x8x8xf32, #tpu.memory_space<vmem>>, vector<1x1x8x8xf32>
    %71 = vector.shape_cast %70 : vector<1x1x8x8xf32> to vector<1x8x8xf32>
    %72 = vector.shape_cast %69 : vector<1x8x8xf32> to vector<1x1x8x8xf32>
    tpu.vector_store %arg15[%c2, %c0_27, %c0_28, %c0_29], %72 {strides = array<i32>} : memref<4x1x8x8xf32, #tpu.memory_space<vmem>>, vector<1x1x8x8xf32>,
    "tpu.trace_start"() <{level = 10 : i32, message = "bqk,bkd->bqd"}> : () -> ()
    %cst_30 = arith.constant dense<0.000000e+00> : vector<1x8x8xf32>
    %73 = tpu.matmul %69, %58, %cst_30 {dimension_numbers = #tpu.dot_dimension_numbers<[2], [1], [1], [2], [0, 0, 0, 1, 1, 2], [0], [0]>} : vector<1x8x8xf32>, vector<1x8x8xf32>, vector<1x8x8xf32> -> vector<1x8x8xf32>
    "tpu.trace_stop"() : () -> ()
    %74 = vector.shape_cast %73 : vector<1x8x8xf32> to vector<8x8xf32>
    %c0_31 = arith.constant 0 : index
    %c16 = arith.constant 16 : index
    %75 = vector.load %arg16[%c0_31, %c16] : memref<8x32xf32, #tpu.memory_space<vmem>>, vector<8x8xf32>
    tpu.vector_store %arg16[%c0_31, %c16], %74 {strides = array<i32>} : memref<8x32xf32, #tpu.memory_space<vmem>>, vector<8x8xf32>,
    %76 = vector.extract_strided_slice %6 {offsets = [0, 24], sizes = [8, 8], strides = [1, 1]} : vector<8x96xf32> to vector<8x8xf32>
    %77 = vector.shape_cast %76 : vector<8x8xf32> to vector<1x8x8xf32>
    %78 = vector.extract_strided_slice %6 {offsets = [0, 56], sizes = [8, 8], strides = [1, 1]} : vector<8x96xf32> to vector<8x8xf32>
    %79 = vector.shape_cast %78 : vector<8x8xf32> to vector<1x8x8xf32>
    %80 = vector.extract_strided_slice %6 {offsets = [0, 88], sizes = [8, 8], strides = [1, 1]} : vector<8x96xf32> to vector<8x8xf32>
    %81 = vector.shape_cast %80 : vector<8x8xf32> to vector<1x8x8xf32>
    "tpu.trace_start"() <{level = 10 : i32, message = "bqd,bkd->bqk"}> : () -> ()
    %cst_32 = arith.constant dense<0.000000e+00> : vector<1x8x8xf32>
    %82 = tpu.matmul %77, %79, %cst_32 {dimension_numbers = #tpu.dot_dimension_numbers<[2], [2], [1], [1], [0, 0, 0, 1, 1, 1], [0], [0]>} : vector<1x8x8xf32>, vector<1x8x8xf32>, vector<1x8x8xf32> -> vector<1x8x8xf32>
    "tpu.trace_stop"() : () -> ()
    %cst_33 = arith.constant dense<0xFF800000> : vector<1x8xf32>
    %83 = vector.multi_reduction <maximumf>, %82, %cst_33 [2] : vector<1x8x8xf32> to vector<1x8xf32>
    %84 = vector.shape_cast %83 : vector<1x8xf32> to vector<1x8x1xf32>
    %85 = vector.broadcast %84 : vector<1x8x1xf32> to vector<1x8x8xf32>
    %86 = arith.subf %82, %85 : vector<1x8x8xf32>
    %87 = math.exp %86 : vector<1x8x8xf32>
    %cst_34 = arith.constant dense<0.000000e+00> : vector<1x8xf32>
    %88 = vector.multi_reduction <add>, %87, %cst_34 [2] : vector<1x8x8xf32> to vector<1x8xf32>
    %89 = vector.shape_cast %88 : vector<1x8xf32> to vector<1x8x1xf32>
    %90 = tpu.reciprocal %89 {approx = true} : vector<1x8x1xf32> -> vector<1x8x1xf32>
    %91 = vector.broadcast %90 : vector<1x8x1xf32> to vector<1x8x8xf32>
    %92 = arith.mulf %87, %91 : vector<1x8x8xf32>
    %c3 = arith.constant 3 : index
    %c0_35 = arith.constant 0 : index
    %c0_36 = arith.constant 0 : index
    %c0_37 = arith.constant 0 : index
    %93 = vector.load %arg15[%c3, %c0_35, %c0_36, %c0_37] : memref<4x1x8x8xf32, #tpu.memory_space<vmem>>, vector<1x1x8x8xf32>
    %94 = vector.shape_cast %93 : vector<1x1x8x8xf32> to vector<1x8x8xf32>
    %95 = vector.shape_cast %92 : vector<1x8x8xf32> to vector<1x1x8x8xf32>
    tpu.vector_store %arg15[%c3, %c0_35, %c0_36, %c0_37], %95 {strides = array<i32>} : memref<4x1x8x8xf32, #tpu.memory_space<vmem>>, vector<1x1x8x8xf32>,
    "tpu.trace_start"() <{level = 10 : i32, message = "bqk,bkd->bqd"}> : () -> ()
    %cst_38 = arith.constant dense<0.000000e+00> : vector<1x8x8xf32>
    %96 = tpu.matmul %92, %81, %cst_38 {dimension_numbers = #tpu.dot_dimension_numbers<[2], [1], [1], [2], [0, 0, 0, 1, 1, 2], [0], [0]>} : vector<1x8x8xf32>, vector<1x8x8xf32>, vector<1x8x8xf32> -> vector<1x8x8xf32>
    "tpu.trace_stop"() : () -> ()
    %97 = vector.shape_cast %96 : vector<1x8x8xf32> to vector<8x8xf32>
    %c0_39 = arith.constant 0 : index
    %c24 = arith.constant 24 : index
    %98 = vector.load %arg16[%c0_39, %c24] : memref<8x32xf32, #tpu.memory_space<vmem>>, vector<8x8xf32>
    tpu.vector_store %arg16[%c0_39, %c24], %97 {strides = array<i32>} : memref<8x32xf32, #tpu.memory_space<vmem>>, vector<8x8xf32>,
    %c0_40 = arith.constant 0 : index
    %c0_41 = arith.constant 0 : index
    %99 = vector.load %arg16[%c0_40, %c0_41] : memref<8x32xf32, #tpu.memory_space<vmem>>, vector<8x32xf32>
    %c0_42 = arith.constant 0 : index
    %c0_43 = arith.constant 0 : index
    %100 = vector.load %arg4[%c0_42, %c0_43] : memref<32x32xf32, #tpu.memory_space<vmem>>, vector<32x32xf32>
    %cst_44 = arith.constant dense<0.000000e+00> : vector<8x32xf32>
    %101 = tpu.matmul %99, %100, %cst_44 {dimension_numbers = #tpu.dot_dimension_numbers<[1], [0], [0], [1], [0, 0, 1, 1], [], []>} : vector<8x32xf32>, vector<32x32xf32>, vector<8x32xf32> -> vector<8x32xf32>
    %c0_45 = arith.constant 0 : index
    %c0_46 = arith.constant 0 : index
    %102 = vector.load %arg5[%c0_45, %c0_46] : memref<1x32xf32, #tpu.memory_space<vmem>>, vector<1x32xf32>
    %103 = vector.broadcast %102 : vector<1x32xf32> to vector<8x32xf32>
    %104 = arith.addf %101, %103 : vector<8x32xf32>
    %105 = arith.addf %104, %1 : vector<8x32xf32>
    %c0_47 = arith.constant 0 : index
    %c0_48 = arith.constant 0 : index
    %106 = vector.load %arg6[%c0_47, %c0_48] : memref<1x32xf32, #tpu.memory_space<vmem>>, vector<1x32xf32>
    %c0_49 = arith.constant 0 : index
    %c0_50 = arith.constant 0 : index
    %107 = vector.load %arg7[%c0_49, %c0_50] : memref<1x32xf32, #tpu.memory_space<vmem>>, vector<1x32xf32>
    %cst_51 = arith.constant dense<0.000000e+00> : vector<8xf32>
    %108 = vector.multi_reduction <add>, %105, %cst_51 [1] : vector<8x32xf32> to vector<8xf32>
    %109 = vector.shape_cast %108 : vector<8xf32> to vector<8x1xf32>
    %cst_52 = arith.constant 3.200000e+01 : f32
    %110 = vector.broadcast %cst_52 : f32 to vector<8x1xf32>
    %111 = arith.divf %109, %110 : vector<8x1xf32>
    %112 = vector.broadcast %111 : vector<8x1xf32> to vector<8x32xf32>
    %113 = arith.subf %105, %112 : vector<8x32xf32>
    %114 = arith.mulf %113, %113 : vector<8x32xf32>
    %cst_53 = arith.constant dense<0.000000e+00> : vector<8xf32>
    %115 = vector.multi_reduction <add>, %114, %cst_53 [1] : vector<8x32xf32> to vector<8xf32>
    %116 = vector.shape_cast %115 : vector<8xf32> to vector<8x1xf32>
    %cst_54 = arith.constant 3.200000e+01 : f32
    %117 = vector.broadcast %cst_54 : f32 to vector<8x1xf32>
    %118 = arith.divf %116, %117 : vector<8x1xf32>
    %119 = vector.broadcast %111 : vector<8x1xf32> to vector<8x32xf32>
    %120 = arith.subf %105, %119 : vector<8x32xf32>
    %cst_55 = arith.constant 9.99999974E-6 : f32
    %121 = vector.broadcast %cst_55 : f32 to vector<8x1xf32>
    %122 = arith.addf %118, %121 : vector<8x1xf32>
    %123 = math.rsqrt %122 : vector<8x1xf32>
    %124 = vector.broadcast %123 : vector<8x1xf32> to vector<8x32xf32>
    %125 = arith.mulf %120, %124 : vector<8x32xf32>
    %126 = vector.broadcast %106 : vector<1x32xf32> to vector<8x32xf32>
    %127 = arith.mulf %125, %126 : vector<8x32xf32>
    %128 = vector.broadcast %107 : vector<1x32xf32> to vector<8x32xf32>
    %129 = arith.addf %127, %128 : vector<8x32xf32>
    %c0_56 = arith.constant 0 : index
    %c0_57 = arith.constant 0 : index
    %130 = vector.load %arg8[%c0_56, %c0_57] : memref<32x64xf32, #tpu.memory_space<vmem>>, vector<32x64xf32>
    %cst_58 = arith.constant dense<0.000000e+00> : vector<8x64xf32>
    %131 = tpu.matmul %129, %130, %cst_58 {dimension_numbers = #tpu.dot_dimension_numbers<[1], [0], [0], [1], [0, 0, 1, 1], [], []>} : vector<8x32xf32>, vector<32x64xf32>, vector<8x64xf32> -> vector<8x64xf32>
    %c0_59 = arith.constant 0 : index
    %c0_60 = arith.constant 0 : index
    %132 = vector.load %arg9[%c0_59, %c0_60] : memref<1x64xf32, #tpu.memory_space<vmem>>, vector<1x64xf32>
    %133 = vector.broadcast %132 : vector<1x64xf32> to vector<8x64xf32>
    %134 = arith.addf %131, %133 : vector<8x64xf32>
    %cst_61 = arith.constant 0.000000e+00 : f32
    %135 = vector.broadcast %cst_61 : f32 to vector<8x64xf32>
    %136 = arith.maximumf %134, %135 : vector<8x64xf32>
    %c0_62 = arith.constant 0 : index
    %c0_63 = arith.constant 0 : index
    %137 = vector.load %arg10[%c0_62, %c0_63] : memref<64x32xf32, #tpu.memory_space<vmem>>, vector<64x32xf32>
    %cst_64 = arith.constant dense<0.000000e+00> : vector<8x32xf32>
    %138 = tpu.matmul %136, %137, %cst_64 {dimension_numbers = #tpu.dot_dimension_numbers<[1], [0], [0], [1], [0, 0, 1, 1], [], []>} : vector<8x64xf32>, vector<64x32xf32>, vector<8x32xf32> -> vector<8x32xf32>
    %c0_65 = arith.constant 0 : index
    %c0_66 = arith.constant 0 : index
    %139 = vector.load %arg11[%c0_65, %c0_66] : memref<1x32xf32, #tpu.memory_space<vmem>>, vector<1x32xf32>
    %140 = vector.broadcast %139 : vector<1x32xf32> to vector<8x32xf32>
    %141 = arith.addf %138, %140 : vector<8x32xf32>
    %142 = arith.addf %141, %129 : vector<8x32xf32>
    %c0_67 = arith.constant 0 : index
    %c0_68 = arith.constant 0 : index
    %143 = vector.load %arg12[%c0_67, %c0_68] : memref<1x32xf32, #tpu.memory_space<vmem>>, vector<1x32xf32>
    %c0_69 = arith.constant 0 : index
    %c0_70 = arith.constant 0 : index
    %144 = vector.load %arg13[%c0_69, %c0_70] : memref<1x32xf32, #tpu.memory_space<vmem>>, vector<1x32xf32>
    %cst_71 = arith.constant dense<0.000000e+00> : vector<8xf32>
    %145 = vector.multi_reduction <add>, %142, %cst_71 [1] : vector<8x32xf32> to vector<8xf32>
    %146 = vector.shape_cast %145 : vector<8xf32> to vector<8x1xf32>
    %cst_72 = arith.constant 3.200000e+01 : f32
    %147 = vector.broadcast %cst_72 : f32 to vector<8x1xf32>
    %148 = arith.divf %146, %147 : vector<8x1xf32>
    %149 = vector.broadcast %148 : vector<8x1xf32> to vector<8x32xf32>
    %150 = arith.subf %142, %149 : vector<8x32xf32>
    %151 = arith.mulf %150, %150 : vector<8x32xf32>
    %cst_73 = arith.constant dense<0.000000e+00> : vector<8xf32>
    %152 = vector.multi_reduction <add>, %151, %cst_73 [1] : vector<8x32xf32> to vector<8xf32>
    %153 = vector.shape_cast %152 : vector<8xf32> to vector<8x1xf32>
    %cst_74 = arith.constant 3.200000e+01 : f32
    %154 = vector.broadcast %cst_74 : f32 to vector<8x1xf32>
    %155 = arith.divf %153, %154 : vector<8x1xf32>
    %156 = vector.broadcast %148 : vector<8x1xf32> to vector<8x32xf32>
    %157 = arith.subf %142, %156 : vector<8x32xf32>
    %cst_75 = arith.constant 9.99999974E-6 : f32
    %158 = vector.broadcast %cst_75 : f32 to vector<8x1xf32>
    %159 = arith.addf %155, %158 : vector<8x1xf32>
    %160 = math.rsqrt %159 : vector<8x1xf32>
    %161 = vector.broadcast %160 : vector<8x1xf32> to vector<8x32xf32>
    %162 = arith.mulf %157, %161 : vector<8x32xf32>
    %163 = vector.broadcast %143 : vector<1x32xf32> to vector<8x32xf32>
    %164 = arith.mulf %162, %163 : vector<8x32xf32>
    %165 = vector.broadcast %144 : vector<1x32xf32> to vector<8x32xf32>
    %166 = arith.addf %164, %165 : vector<8x32xf32>
    %167 = vector.shape_cast %166 : vector<8x32xf32> to vector<1x8x32xf32>
    %c0_76 = arith.constant 0 : index
    %c0_77 = arith.constant 0 : index
    %c0_78 = arith.constant 0 : index
    %168 = vector.load %arg14[%c0_76, %c0_77, %c0_78] : memref<1x8x32xf32, #tpu.memory_space<vmem>>, vector<1x8x32xf32>
    tpu.vector_store %arg14[%c0_76, %c0_77, %c0_78], %167 {strides = array<i32>} : memref<1x8x32xf32, #tpu.memory_space<vmem>>, vector<1x8x32xf32>,
    return
  }
  func.func @transform_0(%arg0: i32) -> (i32, i32, i32) {
    %c0_i32 = arith.constant 0 : i32
    %c0_i32_0 = arith.constant 0 : i32
    %c0_i32_1 = arith.constant 0 : i32
    return %arg0, %c0_i32, %c0_i32_0 : i32, i32, i32
  }
  func.func @transform_1(%arg0: i32) -> (i32, i32) {
    %c0_i32 = arith.constant 0 : i32
    %c0_i32_0 = arith.constant 0 : i32
    %c0_i32_1 = arith.constant 0 : i32
    return %c0_i32, %c0_i32_0 : i32, i32
  }
  func.func @transform_2(%arg0: i32) -> (i32, i32) {
    %c0_i32 = arith.constant 0 : i32
    %c0_i32_0 = arith.constant 0 : i32
    %c0_i32_1 = arith.constant 0 : i32
    return %c0_i32, %c0_i32_0 : i32, i32
  }
  func.func @transform_3(%arg0: i32) -> (i32, i32) {
    %c0_i32 = arith.constant 0 : i32
    %c0_i32_0 = arith.constant 0 : i32
    %c0_i32_1 = arith.constant 0 : i32
    return %c0_i32, %c0_i32_0 : i32, i32
  }
  func.func @transform_4(%arg0: i32) -> (i32, i32) {
    %c0_i32 = arith.constant 0 : i32
    %c0_i32_0 = arith.constant 0 : i32
    %c0_i32_1 = arith.constant 0 : i32
    return %c0_i32, %c0_i32_0 : i32, i32
  }
  func.func @transform_5(%arg0: i32) -> (i32, i32) {
    %c0_i32 = arith.constant 0 : i32
    %c0_i32_0 = arith.constant 0 : i32
    %c0_i32_1 = arith.constant 0 : i32
    return %c0_i32, %c0_i32_0 : i32, i32
  }
  func.func @transform_6(%arg0: i32) -> (i32, i32) {
    %c0_i32 = arith.constant 0 : i32
    %c0_i32_0 = arith.constant 0 : i32
    %c0_i32_1 = arith.constant 0 : i32
    return %c0_i32, %c0_i32_0 : i32, i32
  }
  func.func @transform_7(%arg0: i32) -> (i32, i32) {
    %c0_i32 = arith.constant 0 : i32
    %c0_i32_0 = arith.constant 0 : i32
    %c0_i32_1 = arith.constant 0 : i32
    return %c0_i32, %c0_i32_0 : i32, i32
  }
  func.func @transform_8(%arg0: i32) -> (i32, i32) {
    %c0_i32 = arith.constant 0 : i32
    %c0_i32_0 = arith.constant 0 : i32
    %c0_i32_1 = arith.constant 0 : i32
    return %c0_i32, %c0_i32_0 : i32, i32
  }
  func.func @transform_9(%arg0: i32) -> (i32, i32) {
    %c0_i32 = arith.constant 0 : i32
    %c0_i32_0 = arith.constant 0 : i32
    %c0_i32_1 = arith.constant 0 : i32
    return %c0_i32, %c0_i32_0 : i32, i32
  }
  func.func @transform_10(%arg0: i32) -> (i32, i32) {
    %c0_i32 = arith.constant 0 : i32
    %c0_i32_0 = arith.constant 0 : i32
    %c0_i32_1 = arith.constant 0 : i32
    return %c0_i32, %c0_i32_0 : i32, i32
  }
  func.func @transform_11(%arg0: i32) -> (i32, i32) {
    %c0_i32 = arith.constant 0 : i32
    %c0_i32_0 = arith.constant 0 : i32
    %c0_i32_1 = arith.constant 0 : i32
    return %c0_i32, %c0_i32_0 : i32, i32
  }
  func.func @transform_12(%arg0: i32) -> (i32, i32) {
    %c0_i32 = arith.constant 0 : i32
    %c0_i32_0 = arith.constant 0 : i32
    %c0_i32_1 = arith.constant 0 : i32
    return %c0_i32, %c0_i32_0 : i32, i32
  }
  func.func @transform_13(%arg0: i32) -> (i32, i32, i32) {
    %c0_i32 = arith.constant 0 : i32
    %c0_i32_0 = arith.constant 0 : i32
    %c0_i32_1 = arith.constant 0 : i32
    return %arg0, %c0_i32, %c0_i32_0 : i32, i32, i32
  }
  func.func @transform_14(%arg0: i32) -> (i32, i32, i32, i32) {
    %c0_i32 = arith.constant 0 : i32
    %c0_i32_0 = arith.constant 0 : i32
    %c0_i32_1 = arith.constant 0 : i32
    %c0_i32_2 = arith.constant 0 : i32
    return %c0_i32, %arg0, %c0_i32_0, %c0_i32_1 : i32, i32, i32, i32
  }
}

module attributes {stable_mosaic.version = 11 : i64} {
  func.func @encoder_layer_kernel(%arg0: i32, %arg1: memref<1x8x32xf32, #tpu.memory_space<vmem>>, %arg2: memref<32x96xf32, #tpu.memory_space<vmem>>, %arg3: memref<1x96xf32, #tpu.memory_space<vmem>>, %arg4: memref<32x32xf32, #tpu.memory_space<vmem>>, %arg5: memref<1x32xf32, #tpu.memory_space<vmem>>, %arg6: memref<1x32xf32, #tpu.memory_space<vmem>>, %arg7: memref<1x32xf32, #tpu.memory_space<vmem>>, %arg8: memref<32x64xf32, #tpu.memory_space<vmem>>, %arg9: memref<1x64xf32, #tpu.memory_space<vmem>>, %arg10: memref<64x32xf32, #tpu.memory_space<vmem>>, %arg11: memref<1x32xf32, #tpu.memory_space<vmem>>, %arg12: memref<1x32xf32, #tpu.memory_space<vmem>>, %arg13: memref<1x32xf32, #tpu.memory_space<vmem>>, %arg14: memref<1x8x32xf32, #tpu.memory_space<vmem>>, %arg15: memref<4x1x8x8xf32, #tpu.memory_space<vmem>>, %arg16: memref<8x32xf32, #tpu.memory_space<vmem>>) attributes {dimension_semantics = [#tpu.dimension_semantics<parallel>], iteration_bounds = array<i64: 2>, scalar_prefetch = 0 : i64, scratch_operands = 1 : i64, tpu.core_type = #tpu.core_type<tc>, window_params = [{transform_indices = @transform_0, window_bounds = array<i64: 1, 8, 32>}, {pipeline_mode = #tpu.pipeline_mode<synchronous>, transform_indices = @transform_1, window_bounds = array<i64: 32, 96>}, {pipeline_mode = #tpu.pipeline_mode<synchronous>, transform_indices = @transform_2, window_bounds = array<i64: 1, 96>}, {pipeline_mode = #tpu.pipeline_mode<synchronous>, transform_indices = @transform_3, window_bounds = array<i64: 32, 32>}, {pipeline_mode = #tpu.pipeline_mode<synchronous>, transform_indices = @transform_4, window_bounds = array<i64: 1, 32>}, {pipeline_mode = #tpu.pipeline_mode<synchronous>, transform_indices = @transform_5, window_bounds = array<i64: 1, 32>}, {pipeline_mode = #tpu.pipeline_mode<synchronous>, transform_indices = @transform_6, window_bounds = array<i64: 1, 32>}, {pipeline_mode = #tpu.pipeline_mode<synchronous>, transform_indices = @transform_7, window_bounds = array<i64: 32, 64>}, {pipeline_mode = #tpu.pipeline_mode<synchronous>, transform_indices = @transform_8, window_bounds = array<i64: 1, 64>}, {pipeline_mode = #tpu.pipeline_mode<synchronous>, transform_indices = @transform_9, window_bounds = array<i64: 64, 32>}, {pipeline_mode = #tpu.pipeline_mode<synchronous>, transform_indices = @transform_10, window_bounds = array<i64: 1, 32>}, {pipeline_mode = #tpu.pipeline_mode<synchronous>, transform_indices = @transform_11, window_bounds = array<i64: 1, 32>}, {pipeline_mode = #tpu.pipeline_mode<synchronous>, transform_indices = @transform_12, window_bounds = array<i64: 1, 32>}, {transform_indices = @transform_13, window_bounds = array<i64: 1, 8, 32>}, {transform_indices = @transform_14, window_bounds = array<i64: 4, 1, 8, 8>}]} {
    %c0 = arith.constant 0 : index
    %c0_0 = arith.constant 0 : index
    %c0_1 = arith.constant 0 : index
    %0 = vector.load %arg1[%c0, %c0_0, %c0_1] : memref<1x8x32xf32, #tpu.memory_space<vmem>>, vector<1x8x32xf32>
    %1 = vector.shape_cast %0 : vector<1x8x32xf32> to vector<8x32xf32>
    %c0_2 = arith.constant 0 : index
    %c0_3 = arith.constant 0 : index
    %2 = vector.load %arg2[%c0_2, %c0_3] : memref<32x96xf32, #tpu.memory_space<vmem>>, vector<32x96xf32>
    %cst = arith.constant dense<0.000000e+00> : vector<8x96xf32>
    %3 = tpu.matmul %1, %2, %cst {dimension_numbers = #tpu.dot_dimension_numbers<[1], [0], [0], [1], [0, 0, 1, 1], [], []>} : vector<8x32xf32>, vector<32x96xf32>, vector<8x96xf32> -> vector<8x96xf32>
    %c0_4 = arith.constant 0 : index
    %c0_5 = arith.constant 0 : index
    %4 = vector.load %arg3[%c0_4, %c0_5] : memref<1x96xf32, #tpu.memory_space<vmem>>, vector<1x96xf32>
    %5 = vector.broadcast %4 : vector<1x96xf32> to vector<8x96xf32>
    %6 = arith.addf %3, %5 : vector<8x96xf32>
    %7 = vector.extract_strided_slice %6 {offsets = [0, 0], sizes = [8, 8], strides = [1, 1]} : vector<8x96xf32> to vector<8x8xf32>
    %8 = vector.shape_cast %7 : vector<8x8xf32> to vector<1x8x8xf32>
    %9 = vector.extract_strided_slice %6 {offsets = [0, 32], sizes = [8, 8], strides = [1, 1]} : vector<8x96xf32> to vector<8x8xf32>
    %10 = vector.shape_cast %9 : vector<8x8xf32> to vector<1x8x8xf32>
    %11 = vector.extract_strided_slice %6 {offsets = [0, 64], sizes = [8, 8], strides = [1, 1]} : vector<8x96xf32> to vector<8x8xf32>
    %12 = vector.shape_cast %11 : vector<8x8xf32> to vector<1x8x8xf32>
    "tpu.trace_start"() <{level = 10 : i32, message = "bqd,bkd->bqk"}> : () -> ()
    %cst_6 = arith.constant dense<0.000000e+00> : vector<1x8x8xf32>
    %13 = tpu.matmul %8, %10, %cst_6 {dimension_numbers = #tpu.dot_dimension_numbers<[2], [2], [1], [1], [0, 0, 0, 1, 1, 1], [0], [0]>} : vector<1x8x8xf32>, vector<1x8x8xf32>, vector<1x8x8xf32> -> vector<1x8x8xf32>
    "tpu.trace_stop"() : () -> ()
    %cst_7 = arith.constant dense<0xFF800000> : vector<1x8xf32>
    %14 = vector.multi_reduction <maximumf>, %13, %cst_7 [2] : vector<1x8x8xf32> to vector<1x8xf32>
    %15 = vector.shape_cast %14 : vector<1x8xf32> to vector<1x8x1xf32>
    %16 = vector.broadcast %15 : vector<1x8x1xf32> to vector<1x8x8xf32>
    %17 = arith.subf %13, %16 : vector<1x8x8xf32>
    %18 = math.exp %17 : vector<1x8x8xf32>
    %cst_8 = arith.constant dense<0.000000e+00> : vector<1x8xf32>
    %19 = vector.multi_reduction <add>, %18, %cst_8 [2] : vector<1x8x8xf32> to vector<1x8xf32>
    %20 = vector.shape_cast %19 : vector<1x8xf32> to vector<1x8x1xf32>
    %21 = tpu.reciprocal %20 {approx = true} : vector<1x8x1xf32> -> vector<1x8x1xf32>
    %22 = vector.broadcast %21 : vector<1x8x1xf32> to vector<1x8x8xf32>
    %23 = arith.mulf %18, %22 : vector<1x8x8xf32>
    %c0_9 = arith.constant 0 : index
    %c0_10 = arith.constant 0 : index
    %c0_11 = arith.constant 0 : index
    %c0_12 = arith.constant 0 : index
    %24 = vector.load %arg15[%c0_9, %c0_10, %c0_11, %c0_12] : memref<4x1x8x8xf32, #tpu.memory_space<vmem>>, vector<1x1x8x8xf32>
    %25 = vector.shape_cast %24 : vector<1x1x8x8xf32> to vector<1x8x8xf32>
    %26 = vector.shape_cast %23 : vector<1x8x8xf32> to vector<1x1x8x8xf32>
    tpu.vector_store %arg15[%c0_9, %c0_10, %c0_11, %c0_12], %26 {strides = array<i32>} : memref<4x1x8x8xf32, #tpu.memory_space<vmem>>, vector<1x1x8x8xf32>,
    "tpu.trace_start"() <{level = 10 : i32, message = "bqk,bkd->bqd"}> : () -> ()
    %cst_13 = arith.constant dense<0.000000e+00> : vector<1x8x8xf32>
    %27 = tpu.matmul %23, %12, %cst_13 {dimension_numbers = #tpu.dot_dimension_numbers<[2], [1], [1], [2], [0, 0, 0, 1, 1, 2], [0], [0]>} : vector<1x8x8xf32>, vector<1x8x8xf32>, vector<1x8x8xf32> -> vector<1x8x8xf32>
    "tpu.trace_stop"() : () -> ()
    %28 = vector.shape_cast %27 : vector<1x8x8xf32> to vector<8x8xf32>
    %c0_14 = arith.constant 0 : index
    %c0_15 = arith.constant 0 : index
    %29 = vector.load %arg16[%c0_14, %c0_15] : memref<8x32xf32, #tpu.memory_space<vmem>>, vector<8x8xf32>
    tpu.vector_store %arg16[%c0_14, %c0_15], %28 {strides = array<i32>} : memref<8x32xf32, #tpu.memory_space<vmem>>, vector<8x8xf32>,
    %30 = vector.extract_strided_slice %6 {offsets = [0, 8], sizes = [8, 8], strides = [1, 1]} : vector<8x96xf32> to vector<8x8xf32>
    %31 = vector.shape_cast %30 : vector<8x8xf32> to vector<1x8x8xf32>
    %32 = vector.extract_strided_slice %6 {offsets = [0, 40], sizes = [8, 8], strides = [1, 1]} : vector<8x96xf32> to vector<8x8xf32>
    %33 = vector.shape_cast %32 : vector<8x8xf32> to vector<1x8x8xf32>
    %34 = vector.extract_strided_slice %6 {offsets = [0, 72], sizes = [8, 8], strides = [1, 1]} : vector<8x96xf32> to vector<8x8xf32>
    %35 = vector.shape_cast %34 : vector<8x8xf32> to vector<1x8x8xf32>
    "tpu.trace_start"() <{level = 10 : i32, message = "bqd,bkd->bqk"}> : () -> ()
    %cst_16 = arith.constant dense<0.000000e+00> : vector<1x8x8xf32>
    %36 = tpu.matmul %31, %33, %cst_16 {dimension_numbers = #tpu.dot_dimension_numbers<[2], [2], [1], [1], [0, 0, 0, 1, 1, 1], [0], [0]>} : vector<1x8x8xf32>, vector<1x8x8xf32>, vector<1x8x8xf32> -> vector<1x8x8xf32>
    "tpu.trace_stop"() : () -> ()
    %cst_17 = arith.constant dense<0xFF800000> : vector<1x8xf32>
    %37 = vector.multi_reduction <maximumf>, %36, %cst_17 [2] : vector<1x8x8xf32> to vector<1x8xf32>
    %38 = vector.shape_cast %37 : vector<1x8xf32> to vector<1x8x1xf32>
    %39 = vector.broadcast %38 : vector<1x8x1xf32> to vector<1x8x8xf32>
    %40 = arith.subf %36, %39 : vector<1x8x8xf32>
    %41 = math.exp %40 : vector<1x8x8xf32>
    %cst_18 = arith.constant dense<0.000000e+00> : vector<1x8xf32>
    %42 = vector.multi_reduction <add>, %41, %cst_18 [2] : vector<1x8x8xf32> to vector<1x8xf32>
    %43 = vector.shape_cast %42 : vector<1x8xf32> to vector<1x8x1xf32>
    %44 = tpu.reciprocal %43 {approx = true} : vector<1x8x1xf32> -> vector<1x8x1xf32>
    %45 = vector.broadcast %44 : vector<1x8x1xf32> to vector<1x8x8xf32>
    %46 = arith.mulf %41, %45 : vector<1x8x8xf32>
    %c1 = arith.constant 1 : index
    %c0_19 = arith.constant 0 : index
    %c0_20 = arith.constant 0 : index
    %c0_21 = arith.constant 0 : index
    %47 = vector.load %arg15[%c1, %c0_19, %c0_20, %c0_21] : memref<4x1x8x8xf32, #tpu.memory_space<vmem>>, vector<1x1x8x8xf32>
    %48 = vector.shape_cast %47 : vector<1x1x8x8xf32> to vector<1x8x8xf32>
    %49 = vector.shape_cast %46 : vector<1x8x8xf32> to vector<1x1x8x8xf32>
    tpu.vector_store %arg15[%c1, %c0_19, %c0_20, %c0_21], %49 {strides = array<i32>} : memref<4x1x8x8xf32, #tpu.memory_space<vmem>>, vector<1x1x8x8xf32>,
    "tpu.trace_start"() <{level = 10 : i32, message = "bqk,bkd->bqd"}> : () -> ()
    %cst_22 = arith.constant dense<0.000000e+00> : vector<1x8x8xf32>
    %50 = tpu.matmul %46, %35, %cst_22 {dimension_numbers = #tpu.dot_dimension_numbers<[2], [1], [1], [2], [0, 0, 0, 1, 1, 2], [0], [0]>} : vector<1x8x8xf32>, vector<1x8x8xf32>, vector<1x8x8xf32> -> vector<1x8x8xf32>
    "tpu.trace_stop"() : () -> ()
    %51 = vector.shape_cast %50 : vector<1x8x8xf32> to vector<8x8xf32>
    %c0_23 = arith.constant 0 : index
    %c8 = arith.constant 8 : index
    %52 = vector.load %arg16[%c0_23, %c8] : memref<8x32xf32, #tpu.memory_space<vmem>>, vector<8x8xf32>
    tpu.vector_store %arg16[%c0_23, %c8], %51 {strides = array<i32>} : memref<8x32xf32, #tpu.memory_space<vmem>>, vector<8x8xf32>,
    %53 = vector.extract_strided_slice %6 {offsets = [0, 16], sizes = [8, 8], strides = [1, 1]} : vector<8x96xf32> to vector<8x8xf32>
    %54 = vector.shape_cast %53 : vector<8x8xf32> to vector<1x8x8xf32>
    %55 = vector.extract_strided_slice %6 {offsets = [0, 48], sizes = [8, 8], strides = [1, 1]} : vector<8x96xf32> to vector<8x8xf32>
    %56 = vector.shape_cast %55 : vector<8x8xf32> to vector<1x8x8xf32>
    %57 = vector.extract_strided_slice %6 {offsets = [0, 80], sizes = [8, 8], strides = [1, 1]} : vector<8x96xf32> to vector<8x8xf32>
    %58 = vector.shape_cast %57 : vector<8x8xf32> to vector<1x8x8xf32>
    "tpu.trace_start"() <{level = 10 : i32, message = "bqd,bkd->bqk"}> : () -> ()
    %cst_24 = arith.constant dense<0.000000e+00> : vector<1x8x8xf32>
    %59 = tpu.matmul %54, %56, %cst_24 {dimension_numbers = #tpu.dot_dimension_numbers<[2], [2], [1], [1], [0, 0, 0, 1, 1, 1], [0], [0]>} : vector<1x8x8xf32>, vector<1x8x8xf32>, vector<1x8x8xf32> -> vector<1x8x8xf32>
    "tpu.trace_stop"() : () -> ()
    %cst_25 = arith.constant dense<0xFF800000> : vector<1x8xf32>
    %60 = vector.multi_reduction <maximumf>, %59, %cst_25 [2] : vector<1x8x8xf32> to vector<1x8xf32>
    %61 = vector.shape_cast %60 : vector<1x8xf32> to vector<1x8x1xf32>
    %62 = vector.broadcast %61 : vector<1x8x1xf32> to vector<1x8x8xf32>
    %63 = arith.subf %59, %62 : vector<1x8x8xf32>
    %64 = math.exp %63 : vector<1x8x8xf32>
    %cst_26 = arith.constant dense<0.000000e+00> : vector<1x8xf32>
    %65 = vector.multi_reduction <add>, %64, %cst_26 [2] : vector<1x8x8xf32> to vector<1x8xf32>
    %66 = vector.shape_cast %65 : vector<1x8xf32> to vector<1x8x1xf32>
    %67 = tpu.reciprocal %66 {approx = true} : vector<1x8x1xf32> -> vector<1x8x1xf32>
    %68 = vector.broadcast %67 : vector<1x8x1xf32> to vector<1x8x8xf32>
    %69 = arith.mulf %64, %68 : vector<1x8x8xf32>
    %c2 = arith.constant 2 : index
    %c0_27 = arith.constant 0 : index
    %c0_28 = arith.constant 0 : index
    %c0_29 = arith.constant 0 : index
    %70 = vector.load %arg15[%c2, %c0_27, %c0_28, %c0_29] : memref<4x1x8x8xf32, #tpu.memory_space<vmem>>, vector<1x1x8x8xf32>
    %71 = vector.shape_cast %70 : vector<1x1x8x8xf32> to vector<1x8x8xf32>
    %72 = vector.shape_cast %69 : vector<1x8x8xf32> to vector<1x1x8x8xf32>
    tpu.vector_store %arg15[%c2, %c0_27, %c0_28, %c0_29], %72 {strides = array<i32>} : memref<4x1x8x8xf32, #tpu.memory_space<vmem>>, vector<1x1x8x8xf32>,
    "tpu.trace_start"() <{level = 10 : i32, message = "bqk,bkd->bqd"}> : () -> ()
    %cst_30 = arith.constant dense<0.000000e+00> : vector<1x8x8xf32>
    %73 = tpu.matmul %69, %58, %cst_30 {dimension_numbers = #tpu.dot_dimension_numbers<[2], [1], [1], [2], [0, 0, 0, 1, 1, 2], [0], [0]>} : vector<1x8x8xf32>, vector<1x8x8xf32>, vector<1x8x8xf32> -> vector<1x8x8xf32>
    "tpu.trace_stop"() : () -> ()
    %74 = vector.shape_cast %73 : vector<1x8x8xf32> to vector<8x8xf32>
    %c0_31 = arith.constant 0 : index
    %c16 = arith.constant 16 : index
    %75 = vector.load %arg16[%c0_31, %c16] : memref<8x32xf32, #tpu.memory_space<vmem>>, vector<8x8xf32>
    tpu.vector_store %arg16[%c0_31, %c16], %74 {strides = array<i32>} : memref<8x32xf32, #tpu.memory_space<vmem>>, vector<8x8xf32>,
    %76 = vector.extract_strided_slice %6 {offsets = [0, 24], sizes = [8, 8], strides = [1, 1]} : vector<8x96xf32> to vector<8x8xf32>
    %77 = vector.shape_cast %76 : vector<8x8xf32> to vector<1x8x8xf32>
    %78 = vector.extract_strided_slice %6 {offsets = [0, 56], sizes = [8, 8], strides = [1, 1]} : vector<8x96xf32> to vector<8x8xf32>
    %79 = vector.shape_cast %78 : vector<8x8xf32> to vector<1x8x8xf32>
    %80 = vector.extract_strided_slice %6 {offsets = [0, 88], sizes = [8, 8], strides = [1, 1]} : vector<8x96xf32> to vector<8x8xf32>
    %81 = vector.shape_cast %80 : vector<8x8xf32> to vector<1x8x8xf32>
    "tpu.trace_start"() <{level = 10 : i32, message = "bqd,bkd->bqk"}> : () -> ()
    %cst_32 = arith.constant dense<0.000000e+00> : vector<1x8x8xf32>
    %82 = tpu.matmul %77, %79, %cst_32 {dimension_numbers = #tpu.dot_dimension_numbers<[2], [2], [1], [1], [0, 0, 0, 1, 1, 1], [0], [0]>} : vector<1x8x8xf32>, vector<1x8x8xf32>, vector<1x8x8xf32> -> vector<1x8x8xf32>
    "tpu.trace_stop"() : () -> ()
    %cst_33 = arith.constant dense<0xFF800000> : vector<1x8xf32>
    %83 = vector.multi_reduction <maximumf>, %82, %cst_33 [2] : vector<1x8x8xf32> to vector<1x8xf32>
    %84 = vector.shape_cast %83 : vector<1x8xf32> to vector<1x8x1xf32>
    %85 = vector.broadcast %84 : vector<1x8x1xf32> to vector<1x8x8xf32>
    %86 = arith.subf %82, %85 : vector<1x8x8xf32>
    %87 = math.exp %86 : vector<1x8x8xf32>
    %cst_34 = arith.constant dense<0.000000e+00> : vector<1x8xf32>
    %88 = vector.multi_reduction <add>, %87, %cst_34 [2] : vector<1x8x8xf32> to vector<1x8xf32>
    %89 = vector.shape_cast %88 : vector<1x8xf32> to vector<1x8x1xf32>
    %90 = tpu.reciprocal %89 {approx = true} : vector<1x8x1xf32> -> vector<1x8x1xf32>
    %91 = vector.broadcast %90 : vector<1x8x1xf32> to vector<1x8x8xf32>
    %92 = arith.mulf %87, %91 : vector<1x8x8xf32>
    %c3 = arith.constant 3 : index
    %c0_35 = arith.constant 0 : index
    %c0_36 = arith.constant 0 : index
    %c0_37 = arith.constant 0 : index
    %93 = vector.load %arg15[%c3, %c0_35, %c0_36, %c0_37] : memref<4x1x8x8xf32, #tpu.memory_space<vmem>>, vector<1x1x8x8xf32>
    %94 = vector.shape_cast %93 : vector<1x1x8x8xf32> to vector<1x8x8xf32>
    %95 = vector.shape_cast %92 : vector<1x8x8xf32> to vector<1x1x8x8xf32>
    tpu.vector_store %arg15[%c3, %c0_35, %c0_36, %c0_37], %95 {strides = array<i32>} : memref<4x1x8x8xf32, #tpu.memory_space<vmem>>, vector<1x1x8x8xf32>,
    "tpu.trace_start"() <{level = 10 : i32, message = "bqk,bkd->bqd"}> : () -> ()
    %cst_38 = arith.constant dense<0.000000e+00> : vector<1x8x8xf32>
    %96 = tpu.matmul %92, %81, %cst_38 {dimension_numbers = #tpu.dot_dimension_numbers<[2], [1], [1], [2], [0, 0, 0, 1, 1, 2], [0], [0]>} : vector<1x8x8xf32>, vector<1x8x8xf32>, vector<1x8x8xf32> -> vector<1x8x8xf32>
    "tpu.trace_stop"() : () -> ()
    %97 = vector.shape_cast %96 : vector<1x8x8xf32> to vector<8x8xf32>
    %c0_39 = arith.constant 0 : index
    %c24 = arith.constant 24 : index
    %98 = vector.load %arg16[%c0_39, %c24] : memref<8x32xf32, #tpu.memory_space<vmem>>, vector<8x8xf32>
    tpu.vector_store %arg16[%c0_39, %c24], %97 {strides = array<i32>} : memref<8x32xf32, #tpu.memory_space<vmem>>, vector<8x8xf32>,
    %c0_40 = arith.constant 0 : index
    %c0_41 = arith.constant 0 : index
    %99 = vector.load %arg16[%c0_40, %c0_41] : memref<8x32xf32, #tpu.memory_space<vmem>>, vector<8x32xf32>
    %c0_42 = arith.constant 0 : index
    %c0_43 = arith.constant 0 : index
    %100 = vector.load %arg4[%c0_42, %c0_43] : memref<32x32xf32, #tpu.memory_space<vmem>>, vector<32x32xf32>
    %cst_44 = arith.constant dense<0.000000e+00> : vector<8x32xf32>
    %101 = tpu.matmul %99, %100, %cst_44 {dimension_numbers = #tpu.dot_dimension_numbers<[1], [0], [0], [1], [0, 0, 1, 1], [], []>} : vector<8x32xf32>, vector<32x32xf32>, vector<8x32xf32> -> vector<8x32xf32>
    %c0_45 = arith.constant 0 : index
    %c0_46 = arith.constant 0 : index
    %102 = vector.load %arg5[%c0_45, %c0_46] : memref<1x32xf32, #tpu.memory_space<vmem>>, vector<1x32xf32>
    %103 = vector.broadcast %102 : vector<1x32xf32> to vector<8x32xf32>
    %104 = arith.addf %101, %103 : vector<8x32xf32>
    %105 = arith.addf %104, %1 : vector<8x32xf32>
    %c0_47 = arith.constant 0 : index
    %c0_48 = arith.constant 0 : index
    %106 = vector.load %arg6[%c0_47, %c0_48] : memref<1x32xf32, #tpu.memory_space<vmem>>, vector<1x32xf32>
    %c0_49 = arith.constant 0 : index
    %c0_50 = arith.constant 0 : index
    %107 = vector.load %arg7[%c0_49, %c0_50] : memref<1x32xf32, #tpu.memory_space<vmem>>, vector<1x32xf32>
    %cst_51 = arith.constant dense<0.000000e+00> : vector<8xf32>
    %108 = vector.multi_reduction <add>, %105, %cst_51 [1] : vector<8x32xf32> to vector<8xf32>
    %109 = vector.shape_cast %108 : vector<8xf32> to vector<8x1xf32>
    %cst_52 = arith.constant 3.200000e+01 : f32
    %110 = vector.broadcast %cst_52 : f32 to vector<8x1xf32>
    %111 = arith.divf %109, %110 : vector<8x1xf32>
    %112 = vector.broadcast %111 : vector<8x1xf32> to vector<8x32xf32>
    %113 = arith.subf %105, %112 : vector<8x32xf32>
    %114 = arith.mulf %113, %113 : vector<8x32xf32>
    %cst_53 = arith.constant dense<0.000000e+00> : vector<8xf32>
    %115 = vector.multi_reduction <add>, %114, %cst_53 [1] : vector<8x32xf32> to vector<8xf32>
    %116 = vector.shape_cast %115 : vector<8xf32> to vector<8x1xf32>
    %cst_54 = arith.constant 3.200000e+01 : f32
    %117 = vector.broadcast %cst_54 : f32 to vector<8x1xf32>
    %118 = arith.divf %116, %117 : vector<8x1xf32>
    %119 = vector.broadcast %111 : vector<8x1xf32> to vector<8x32xf32>
    %120 = arith.subf %105, %119 : vector<8x32xf32>
    %cst_55 = arith.constant 9.99999974E-6 : f32
    %121 = vector.broadcast %cst_55 : f32 to vector<8x1xf32>
    %122 = arith.addf %118, %121 : vector<8x1xf32>
    %123 = math.rsqrt %122 : vector<8x1xf32>
    %124 = vector.broadcast %123 : vector<8x1xf32> to vector<8x32xf32>
    %125 = arith.mulf %120, %124 : vector<8x32xf32>
    %126 = vector.broadcast %106 : vector<1x32xf32> to vector<8x32xf32>
    %127 = arith.mulf %125, %126 : vector<8x32xf32>
    %128 = vector.broadcast %107 : vector<1x32xf32> to vector<8x32xf32>
    %129 = arith.addf %127, %128 : vector<8x32xf32>
    %c0_56 = arith.constant 0 : index
    %c0_57 = arith.constant 0 : index
    %130 = vector.load %arg8[%c0_56, %c0_57] : memref<32x64xf32, #tpu.memory_space<vmem>>, vector<32x64xf32>
    %cst_58 = arith.constant dense<0.000000e+00> : vector<8x64xf32>
    %131 = tpu.matmul %129, %130, %cst_58 {dimension_numbers = #tpu.dot_dimension_numbers<[1], [0], [0], [1], [0, 0, 1, 1], [], []>} : vector<8x32xf32>, vector<32x64xf32>, vector<8x64xf32> -> vector<8x64xf32>
    %c0_59 = arith.constant 0 : index
    %c0_60 = arith.constant 0 : index
    %132 = vector.load %arg9[%c0_59, %c0_60] : memref<1x64xf32, #tpu.memory_space<vmem>>, vector<1x64xf32>
    %133 = vector.broadcast %132 : vector<1x64xf32> to vector<8x64xf32>
    %134 = arith.addf %131, %133 : vector<8x64xf32>
    %cst_61 = arith.constant 0.000000e+00 : f32
    %135 = vector.broadcast %cst_61 : f32 to vector<8x64xf32>
    %136 = arith.maximumf %134, %135 : vector<8x64xf32>
    %c0_62 = arith.constant 0 : index
    %c0_63 = arith.constant 0 : index
    %137 = vector.load %arg10[%c0_62, %c0_63] : memref<64x32xf32, #tpu.memory_space<vmem>>, vector<64x32xf32>
    %cst_64 = arith.constant dense<0.000000e+00> : vector<8x32xf32>
    %138 = tpu.matmul %136, %137, %cst_64 {dimension_numbers = #tpu.dot_dimension_numbers<[1], [0], [0], [1], [0, 0, 1, 1], [], []>} : vector<8x64xf32>, vector<64x32xf32>, vector<8x32xf32> -> vector<8x32xf32>
    %c0_65 = arith.constant 0 : index
    %c0_66 = arith.constant 0 : index
    %139 = vector.load %arg11[%c0_65, %c0_66] : memref<1x32xf32, #tpu.memory_space<vmem>>, vector<1x32xf32>
    %140 = vector.broadcast %139 : vector<1x32xf32> to vector<8x32xf32>
    %141 = arith.addf %138, %140 : vector<8x32xf32>
    %142 = arith.addf %141, %129 : vector<8x32xf32>
    %c0_67 = arith.constant 0 : index
    %c0_68 = arith.constant 0 : index
    %143 = vector.load %arg12[%c0_67, %c0_68] : memref<1x32xf32, #tpu.memory_space<vmem>>, vector<1x32xf32>
    %c0_69 = arith.constant 0 : index
    %c0_70 = arith.constant 0 : index
    %144 = vector.load %arg13[%c0_69, %c0_70] : memref<1x32xf32, #tpu.memory_space<vmem>>, vector<1x32xf32>
    %cst_71 = arith.constant dense<0.000000e+00> : vector<8xf32>
    %145 = vector.multi_reduction <add>, %142, %cst_71 [1] : vector<8x32xf32> to vector<8xf32>
    %146 = vector.shape_cast %145 : vector<8xf32> to vector<8x1xf32>
    %cst_72 = arith.constant 3.200000e+01 : f32
    %147 = vector.broadcast %cst_72 : f32 to vector<8x1xf32>
    %148 = arith.divf %146, %147 : vector<8x1xf32>
    %149 = vector.broadcast %148 : vector<8x1xf32> to vector<8x32xf32>
    %150 = arith.subf %142, %149 : vector<8x32xf32>
    %151 = arith.mulf %150, %150 : vector<8x32xf32>
    %cst_73 = arith.constant dense<0.000000e+00> : vector<8xf32>
    %152 = vector.multi_reduction <add>, %151, %cst_73 [1] : vector<8x32xf32> to vector<8xf32>
    %153 = vector.shape_cast %152 : vector<8xf32> to vector<8x1xf32>
    %cst_74 = arith.constant 3.200000e+01 : f32
    %154 = vector.broadcast %cst_74 : f32 to vector<8x1xf32>
    %155 = arith.divf %153, %154 : vector<8x1xf32>
    %156 = vector.broadcast %148 : vector<8x1xf32> to vector<8x32xf32>
    %157 = arith.subf %142, %156 : vector<8x32xf32>
    %cst_75 = arith.constant 9.99999974E-6 : f32
    %158 = vector.broadcast %cst_75 : f32 to vector<8x1xf32>
    %159 = arith.addf %155, %158 : vector<8x1xf32>
    %160 = math.rsqrt %159 : vector<8x1xf32>
    %161 = vector.broadcast %160 : vector<8x1xf32> to vector<8x32xf32>
    %162 = arith.mulf %157, %161 : vector<8x32xf32>
    %163 = vector.broadcast %143 : vector<1x32xf32> to vector<8x32xf32>
    %164 = arith.mulf %162, %163 : vector<8x32xf32>
    %165 = vector.broadcast %144 : vector<1x32xf32> to vector<8x32xf32>
    %166 = arith.addf %164, %165 : vector<8x32xf32>
    %167 = vector.shape_cast %166 : vector<8x32xf32> to vector<1x8x32xf32>
    %c0_76 = arith.constant 0 : index
    %c0_77 = arith.constant 0 : index
    %c0_78 = arith.constant 0 : index
    %168 = vector.load %arg14[%c0_76, %c0_77, %c0_78] : memref<1x8x32xf32, #tpu.memory_space<vmem>>, vector<1x8x32xf32>
    tpu.vector_store %arg14[%c0_76, %c0_77, %c0_78], %167 {strides = array<i32>} : memref<1x8x32xf32, #tpu.memory_space<vmem>>, vector<1x8x32xf32>,
    return
  }
  func.func @transform_0(%arg0: i32) -> (i32, i32, i32) {
    %c0_i32 = arith.constant 0 : i32
    %c0_i32_0 = arith.constant 0 : i32
    %c0_i32_1 = arith.constant 0 : i32
    return %arg0, %c0_i32, %c0_i32_0 : i32, i32, i32
  }
  func.func @transform_1(%arg0: i32) -> (i32, i32) {
    %c0_i32 = arith.constant 0 : i32
    %c0_i32_0 = arith.constant 0 : i32
    %c0_i32_1 = arith.constant 0 : i32
    return %c0_i32, %c0_i32_0 : i32, i32
  }
  func.func @transform_2(%arg0: i32) -> (i32, i32) {
    %c0_i32 = arith.constant 0 : i32
    %c0_i32_0 = arith.constant 0 : i32
    %c0_i32_1 = arith.constant 0 : i32
    return %c0_i32, %c0_i32_0 : i32, i32
  }
  func.func @transform_3(%arg0: i32) -> (i32, i32) {
    %c0_i32 = arith.constant 0 : i32
    %c0_i32_0 = arith.constant 0 : i32
    %c0_i32_1 = arith.constant 0 : i32
    return %c0_i32, %c0_i32_0 : i32, i32
  }
  func.func @transform_4(%arg0: i32) -> (i32, i32) {
    %c0_i32 = arith.constant 0 : i32
    %c0_i32_0 = arith.constant 0 : i32
    %c0_i32_1 = arith.constant 0 : i32
    return %c0_i32, %c0_i32_0 : i32, i32
  }
  func.func @transform_5(%arg0: i32) -> (i32, i32) {
    %c0_i32 = arith.constant 0 : i32
    %c0_i32_0 = arith.constant 0 : i32
    %c0_i32_1 = arith.constant 0 : i32
    return %c0_i32, %c0_i32_0 : i32, i32
  }
  func.func @transform_6(%arg0: i32) -> (i32, i32) {
    %c0_i32 = arith.constant 0 : i32
    %c0_i32_0 = arith.constant 0 : i32
    %c0_i32_1 = arith.constant 0 : i32
    return %c0_i32, %c0_i32_0 : i32, i32
  }
  func.func @transform_7(%arg0: i32) -> (i32, i32) {
    %c0_i32 = arith.constant 0 : i32
    %c0_i32_0 = arith.constant 0 : i32
    %c0_i32_1 = arith.constant 0 : i32
    return %c0_i32, %c0_i32_0 : i32, i32
  }
  func.func @transform_8(%arg0: i32) -> (i32, i32) {
    %c0_i32 = arith.constant 0 : i32
    %c0_i32_0 = arith.constant 0 : i32
    %c0_i32_1 = arith.constant 0 : i32
    return %c0_i32, %c0_i32_0 : i32, i32
  }
  func.func @transform_9(%arg0: i32) -> (i32, i32) {
    %c0_i32 = arith.constant 0 : i32
    %c0_i32_0 = arith.constant 0 : i32
    %c0_i32_1 = arith.constant 0 : i32
    return %c0_i32, %c0_i32_0 : i32, i32
  }
  func.func @transform_10(%arg0: i32) -> (i32, i32) {
    %c0_i32 = arith.constant 0 : i32
    %c0_i32_0 = arith.constant 0 : i32
    %c0_i32_1 = arith.constant 0 : i32
    return %c0_i32, %c0_i32_0 : i32, i32
  }
  func.func @transform_11(%arg0: i32) -> (i32, i32) {
    %c0_i32 = arith.constant 0 : i32
    %c0_i32_0 = arith.constant 0 : i32
    %c0_i32_1 = arith.constant 0 : i32
    return %c0_i32, %c0_i32_0 : i32, i32
  }
  func.func @transform_12(%arg0: i32) -> (i32, i32) {
    %c0_i32 = arith.constant 0 : i32
    %c0_i32_0 = arith.constant 0 : i32
    %c0_i32_1 = arith.constant 0 : i32
    return %c0_i32, %c0_i32_0 : i32, i32
  }
  func.func @transform_13(%arg0: i32) -> (i32, i32, i32) {
    %c0_i32 = arith.constant 0 : i32
    %c0_i32_0 = arith.constant 0 : i32
    %c0_i32_1 = arith.constant 0 : i32
    return %arg0, %c0_i32, %c0_i32_0 : i32, i32, i32
  }
  func.func @transform_14(%arg0: i32) -> (i32, i32, i32, i32) {
    %c0_i32 = arith.constant 0 : i32
    %c0_i32_0 = arith.constant 0 : i32
    %c0_i32_1 = arith.constant 0 : i32
    %c0_i32_2 = arith.constant 0 : i32
    return %c0_i32, %arg0, %c0_i32_0, %c0_i32_1 : i32, i32, i32, i32
  }
}

</mosaic_0001>

<llo_original>
// kernel: tpu_custom_call.1
$region0: #{tpu_custom_call.1}
  #allocation0 [shape = 'u32[]', space=smem, size = 0x4, offset = 0x4, fixed_abs, tag = 'smem constant byte address 0x4 - core index']
  #allocation1 [shape = 'u32[144,128]{1,0:T(1,128)}', space=vmem, size = 0x12000, scoped, tag = 'internal scratch']
  #allocation2 [shape = 'f32[8,32]{1,0:T(8,128)}', space=vmem, size = 0x1000, scoped, tag = 'scratch operand']
  %s0 = inlined_call_operand.hbm [shape: f32[2,8,32], index: 0, kind: input, shape index: {}]
  %s1 = inlined_call_operand.vmem [shape: f32[32,96], index: 1, kind: input, shape index: {}]
  %s2 = inlined_call_operand.vmem [shape: f32[1,96], index: 2, kind: input, shape index: {}]
  %s3 = inlined_call_operand.vmem [shape: f32[32,32], index: 3, kind: input, shape index: {}]
  %s4 = inlined_call_operand.vmem [shape: f32[1,32], index: 4, kind: input, shape index: {}]
  %s5 = inlined_call_operand.hbm [shape: f32[1,32], index: 5, kind: input, shape index: {}]
  %s6 = inlined_call_operand.hbm [shape: f32[1,32], index: 6, kind: input, shape index: {}]
  %s7 = inlined_call_operand.vmem [shape: f32[32,64], index: 7, kind: input, shape index: {}]
  %s8 = inlined_call_operand.hbm [shape: f32[1,64], index: 8, kind: input, shape index: {}]
  %s9 = inlined_call_operand.vmem [shape: f32[64,32], index: 9, kind: input, shape index: {}]
  %s10 = inlined_call_operand.vmem [shape: f32[1,32], index: 10, kind: input, shape index: {}]
  %s11 = inlined_call_operand.vmem [shape: f32[1,32], index: 11, kind: input, shape index: {}]
  %s12 = inlined_call_operand.vmem [shape: f32[1,32], index: 12, kind: input, shape index: {}]
  %s13 = inlined_call_operand.hbm [shape: f32[2,8,32], index: 13, kind: output, shape index: {0}]
  %s14 = inlined_call_operand.hbm [shape: f32[4,2,8,8], index: 14, kind: output, shape index: {1}]
  %15 = xla_tuple %s13, %s14
  %s16 = sld [smem:[#allocation0]]
  $region109: #{tpu_custom_call.1} parent=0
    _
  %s18 = ssub.s32 1, %s16
  %s19 = scalar_select 0, %s18, %s16
  $region1: #{tpu_custom_call.1} parent=0
    #allocation3 [shape = 'u8[8192]{0}', space=vmem, size = 0x2000, scoped, tag = 'input window, operand 0']
    #allocation4 [shape = 's32[2]{0}', space=sflag, size = 0x8, scoped, tag = 'scoped memory for tpu_custom_call.1']
    #allocation5 [shape = 's32[2]{0}', space=sflag, size = 0x8, scoped, tag = 'scoped memory for tpu_custom_call.1']
    #allocation6 [shape = 'u8[512]{0}', space=vmem, size = 0x400, scoped, tag = 'input window, operand 5, single buffered']
    #allocation7 [shape = 's32[1]{0}', space=sflag, size = 0x4, scoped, tag = 'scoped memory for tpu_custom_call.1']
    #allocation8 [shape = 'u8[512]{0}', space=vmem, size = 0x400, scoped, tag = 'input window, operand 6, single buffered']
    #allocation9 [shape = 'u8[512]{0}', space=vmem, size = 0x400, scoped, tag = 'input window, operand 8, single buffered']
    #allocation10 [shape = 's32[1]{0}', space=sflag, size = 0x4, scoped, tag = 'scoped memory for tpu_custom_call.1']
    #allocation11 [shape = 'u8[8192]{0}', space=vmem, size = 0x2000, scoped, tag = 'output window, operand 0']
    #allocation12 [shape = 'u8[32768]{0}', space=vmem, size = 0x8000, scoped, tag = 'output window, operand 1']
    #allocation13 [shape = 's32[2]{0}', space=sflag, size = 0x8, scoped, tag = 'scoped memory for tpu_custom_call.1']
    %20 = vsyncpa [#allocation4], 0
    %s21 = scalar_lea.sflag [#allocation4], 1
    %22 = vsyncpa %s21, 0
    %23 = vsyncpa [#allocation7], 0
    %24 = vsyncpa [#allocation10], 0
    %25 = vsyncpa [#allocation5], 0
    %s26 = scalar_lea.sflag [#allocation5], 1
    %27 = vsyncpa %s26, 0
    %28 = vsyncpa [#allocation13], 0
    %s29 = scalar_lea.sflag [#allocation13], 1
    %30 = vsyncpa %s29, 0
    loop: start=0, step=1, limit=4
    $region2: #{tpu_custom_call.1} parent=1 // loop_pre_header
      _
    $region3: #{tpu_custom_call.1} parent=1 // loop_header
      %s32 = sphi 0, %s36
      %p33 = scmp.ge.s32.totalorder %s32, 4
      %s42 = sphi 0, %s44
      %s45 = sphi 0, %s42
      %s46 = sphi 0, %s45
      %s62 = sphi 0, %s46
      %s66 = sphi 0, %s66
      %s68 = sphi 0, %s66
      %s69 = sphi 0, %s68
      %s83 = sphi 0, %s69
      %s87 = sphi 0, %s87
      %s89 = sphi 0, %s87
      %s90 = sphi 0, %s89
      %s104 = sphi 0, %s90
      %s108 = sphi 0, %s108
      %s110 = sphi 0, %s108
      %s111 = sphi 0, %s110
      %s125 = sphi 0, %s111
      %s129 = sphi 0, %s129
      %s131 = sphi 0, %s129
      %s132 = sphi 0, %s131
      %s146 = sphi 0, %s132
      %s150 = sphi 0, %s150
      %s152 = sphi 0, %s150
      %s153 = sphi 0, %s152
      %s167 = sphi 0, %s153
      %s171 = sphi 0, %s171
      %s173 = sphi 0, %s171
      %s174 = sphi 0, %s173
      %s188 = sphi 0, %s174
      %s192 = sphi 0, %s192
      %s194 = sphi 0, %s192
      %s195 = sphi 0, %s194
      %s209 = sphi 0, %s195
      %s213 = sphi 0, %s213
      %s215 = sphi 0, %s213
      %s216 = sphi 0, %s215
      %s230 = sphi 0, %s216
      %s234 = sphi 0, %s234
      %s236 = sphi 0, %s234
      %s237 = sphi 0, %s236
      %s251 = sphi 0, %s237
      %s255 = sphi 0, %s255
      %s257 = sphi 0, %s255
      %s258 = sphi 0, %s257
      %s272 = sphi 0, %s258
      %s276 = sphi 0, %s276
      %s278 = sphi 0, %s276
      %s279 = sphi 0, %s278
      %s293 = sphi 0, %s279
      %s297 = sphi 0, %s297
      %s299 = sphi 0, %s297
      %s300 = sphi 0, %s299
      %s314 = sphi 0, %s300
      %s320 = sphi 0, %s322
      %s323 = sphi 0, %s320
      %s324 = sphi 0, %s323
      %s340 = sphi 0, %s324
      %s346 = sphi 0, %s348
      %s349 = sphi 0, %s346
      %s350 = sphi 0, %s349
      %s366 = sphi 0, %s350
    $region4: #{tpu_custom_call.1} parent=1 // loop_header_branch
      %35 = sbr.rel (%p33) target = $region8
    $region5: #{tpu_custom_call.1} parent=1 // loop_body
      %s37 = ssub.s32 %s32, 1
      %s38 = ssub.s32 %s32, 2
      %s39 = sadd.s32 %s32, 1
      %s40 = ssub.s32 %s32, %s39
      %p41 = scmp.eq.s32.totalorder %s40, 0
      %s43 = sadd.s32 %s42, 1
      %s44 = scalar_select %p41, %s42, %s43
      %p47 = pneg %p41
      %p48 = scmp.eq.s32.totalorder %s32, 1
      %p49 = por %p47, %p48
      %p50 = scmp.ne.s32.totalorder %s42, %s45
      %p51 = scmp.eq.s32.totalorder %s32, 0
      %p52 = por %p50, %p51
      %p53 = scmp.ne.s32.totalorder %s42, %s45
      %p54 = scmp.eq.s32.totalorder %s37, 1
      %p55 = por %p53, %p54
      %p56 = scmp.ne.s32.totalorder %s45, %s46
      %p57 = scmp.eq.s32.totalorder %s37, 0
      %p58 = por %p56, %p57
      %p59 = scmp.ne.s32.totalorder %s45, %s46
      %p60 = scmp.eq.s32.totalorder %s38, 1
      %p61 = por %p59, %p60
      %p63 = scmp.ne.s32.totalorder %s46, %s62
      %p64 = scmp.eq.s32.totalorder %s38, 0
      %p65 = por %p63, %p64
      %s67 = sadd.s32 %s66, 1
      %p70 = scmp.eq.s32.totalorder %s32, 1
      %p71 = scmp.ne.s32.totalorder %s66, %s68
      %p72 = scmp.eq.s32.totalorder %s32, 0
      %p73 = por %p71, %p72
      %p74 = scmp.ne.s32.totalorder %s66, %s68
      %p75 = scmp.eq.s32.totalorder %s37, 1
      %p76 = por %p74, %p75
      %p77 = scmp.ne.s32.totalorder %s68, %s69
      %p78 = scmp.eq.s32.totalorder %s37, 0
      %p79 = por %p77, %p78
      %p80 = scmp.ne.s32.totalorder %s68, %s69
      %p81 = scmp.eq.s32.totalorder %s38, 1
      %p82 = por %p80, %p81
      %p84 = scmp.ne.s32.totalorder %s69, %s83
      %p85 = scmp.eq.s32.totalorder %s38, 0
      %p86 = por %p84, %p85
      %s88 = sadd.s32 %s87, 1
      %p91 = scmp.eq.s32.totalorder %s32, 1
      %p92 = scmp.ne.s32.totalorder %s87, %s89
      %p93 = scmp.eq.s32.totalorder %s32, 0
      %p94 = por %p92, %p93
      %p95 = scmp.ne.s32.totalorder %s87, %s89
      %p96 = scmp.eq.s32.totalorder %s37, 1
      %p97 = por %p95, %p96
      %p98 = scmp.ne.s32.totalorder %s89, %s90
      %p99 = scmp.eq.s32.totalorder %s37, 0
      %p100 = por %p98, %p99
      %p101 = scmp.ne.s32.totalorder %s89, %s90
      %p102 = scmp.eq.s32.totalorder %s38, 1
      %p103 = por %p101, %p102
      %p105 = scmp.ne.s32.totalorder %s90, %s104
      %p106 = scmp.eq.s32.totalorder %s38, 0
      %p107 = por %p105, %p106
      %s109 = sadd.s32 %s108, 1
      %p112 = scmp.eq.s32.totalorder %s32, 1
      %p113 = scmp.ne.s32.totalorder %s108, %s110
      %p114 = scmp.eq.s32.totalorder %s32, 0
      %p115 = por %p113, %p114
      %p116 = scmp.ne.s32.totalorder %s108, %s110
      %p117 = scmp.eq.s32.totalorder %s37, 1
      %p118 = por %p116, %p117
      %p119 = scmp.ne.s32.totalorder %s110, %s111
      %p120 = scmp.eq.s32.totalorder %s37, 0
      %p121 = por %p119, %p120
      %p122 = scmp.ne.s32.totalorder %s110, %s111
      %p123 = scmp.eq.s32.totalorder %s38, 1
      %p124 = por %p122, %p123
      %p126 = scmp.ne.s32.totalorder %s111, %s125
      %p127 = scmp.eq.s32.totalorder %s38, 0
      %p128 = por %p126, %p127
      %s130 = sadd.s32 %s129, 1
      %p133 = scmp.eq.s32.totalorder %s32, 1
      %p134 = scmp.ne.s32.totalorder %s129, %s131
      %p135 = scmp.eq.s32.totalorder %s32, 0
      %p136 = por %p134, %p135
      %p137 = scmp.ne.s32.totalorder %s129, %s131
      %p138 = scmp.eq.s32.totalorder %s37, 1
      %p139 = por %p137, %p138
      %p140 = scmp.ne.s32.totalorder %s131, %s132
      %p141 = scmp.eq.s32.totalorder %s37, 0
      %p142 = por %p140, %p141
      %p143 = scmp.ne.s32.totalorder %s131, %s132
      %p144 = scmp.eq.s32.totalorder %s38, 1
      %p145 = por %p143, %p144
      %p147 = scmp.ne.s32.totalorder %s132, %s146
      %p148 = scmp.eq.s32.totalorder %s38, 0
      %p149 = por %p147, %p148
      %s151 = sadd.s32 %s150, 1
      %p154 = scmp.eq.s32.totalorder %s32, 1
      %p155 = scmp.ne.s32.totalorder %s150, %s152
      %p156 = scmp.eq.s32.totalorder %s32, 0
      %p157 = por %p155, %p156
      %p158 = scmp.ne.s32.totalorder %s150, %s152
      %p159 = scmp.eq.s32.totalorder %s37, 1
      %p160 = por %p158, %p159
      %p161 = scmp.ne.s32.totalorder %s152, %s153
      %p162 = scmp.eq.s32.totalorder %s37, 0
      %p163 = por %p161, %p162
      %p164 = scmp.ne.s32.totalorder %s152, %s153
      %p165 = scmp.eq.s32.totalorder %s38, 1
      %p166 = por %p164, %p165
      %p168 = scmp.ne.s32.totalorder %s153, %s167
      %p169 = scmp.eq.s32.totalorder %s38, 0
      %p170 = por %p168, %p169
      %s172 = sadd.s32 %s171, 1
      %p175 = scmp.eq.s32.totalorder %s32, 1
      %p176 = scmp.ne.s32.totalorder %s171, %s173
      %p177 = scmp.eq.s32.totalorder %s32, 0
      %p178 = por %p176, %p177
      %p179 = scmp.ne.s32.totalorder %s171, %s173
      %p180 = scmp.eq.s32.totalorder %s37, 1
      %p181 = por %p179, %p180
      %p182 = scmp.ne.s32.totalorder %s173, %s174
      %p183 = scmp.eq.s32.totalorder %s37, 0
      %p184 = por %p182, %p183
      %p185 = scmp.ne.s32.totalorder %s173, %s174
      %p186 = scmp.eq.s32.totalorder %s38, 1
      %p187 = por %p185, %p186
      %p189 = scmp.ne.s32.totalorder %s174, %s188
      %p190 = scmp.eq.s32.totalorder %s38, 0
      %p191 = por %p189, %p190
      %s193 = sadd.s32 %s192, 1
      %p196 = scmp.eq.s32.totalorder %s32, 1
      %p197 = scmp.ne.s32.totalorder %s192, %s194
      %p198 = scmp.eq.s32.totalorder %s32, 0
      %p199 = por %p197, %p198
      %p200 = scmp.ne.s32.totalorder %s192, %s194
      %p201 = scmp.eq.s32.totalorder %s37, 1
      %p202 = por %p200, %p201
      %p203 = scmp.ne.s32.totalorder %s194, %s195
      %p204 = scmp.eq.s32.totalorder %s37, 0
      %p205 = por %p203, %p204
      %p206 = scmp.ne.s32.totalorder %s194, %s195
      %p207 = scmp.eq.s32.totalorder %s38, 1
      %p208 = por %p206, %p207
      %p210 = scmp.ne.s32.totalorder %s195, %s209
      %p211 = scmp.eq.s32.totalorder %s38, 0
      %p212 = por %p210, %p211
      %s214 = sadd.s32 %s213, 1
      %p217 = scmp.eq.s32.totalorder %s32, 1
      %p218 = scmp.ne.s32.totalorder %s213, %s215
      %p219 = scmp.eq.s32.totalorder %s32, 0
      %p220 = por %p218, %p219
      %p221 = scmp.ne.s32.totalorder %s213, %s215
      %p222 = scmp.eq.s32.totalorder %s37, 1
      %p223 = por %p221, %p222
      %p224 = scmp.ne.s32.totalorder %s215, %s216
      %p225 = scmp.eq.s32.totalorder %s37, 0
      %p226 = por %p224, %p225
      %p227 = scmp.ne.s32.totalorder %s215, %s216
      %p228 = scmp.eq.s32.totalorder %s38, 1
      %p229 = por %p227, %p228
      %p231 = scmp.ne.s32.totalorder %s216, %s230
      %p232 = scmp.eq.s32.totalorder %s38, 0
      %p233 = por %p231, %p232
      %s235 = sadd.s32 %s234, 1
      %p238 = scmp.eq.s32.totalorder %s32, 1
      %p239 = scmp.ne.s32.totalorder %s234, %s236
      %p240 = scmp.eq.s32.totalorder %s32, 0
      %p241 = por %p239, %p240
      %p242 = scmp.ne.s32.totalorder %s234, %s236
      %p243 = scmp.eq.s32.totalorder %s37, 1
      %p244 = por %p242, %p243
      %p245 = scmp.ne.s32.totalorder %s236, %s237
      %p246 = scmp.eq.s32.totalorder %s37, 0
      %p247 = por %p245, %p246
      %p248 = scmp.ne.s32.totalorder %s236, %s237
      %p249 = scmp.eq.s32.totalorder %s38, 1
      %p250 = por %p248, %p249
      %p252 = scmp.ne.s32.totalorder %s237, %s251
      %p253 = scmp.eq.s32.totalorder %s38, 0
      %p254 = por %p252, %p253
      %s256 = sadd.s32 %s255, 1
      %p259 = scmp.eq.s32.totalorder %s32, 1
      %p260 = scmp.ne.s32.totalorder %s255, %s257
      %p261 = scmp.eq.s32.totalorder %s32, 0
      %p262 = por %p260, %p261
      %p263 = scmp.ne.s32.totalorder %s255, %s257
      %p264 = scmp.eq.s32.totalorder %s37, 1
      %p265 = por %p263, %p264
      %p266 = scmp.ne.s32.totalorder %s257, %s258
      %p267 = scmp.eq.s32.totalorder %s37, 0
      %p268 = por %p266, %p267
      %p269 = scmp.ne.s32.totalorder %s257, %s258
      %p270 = scmp.eq.s32.totalorder %s38, 1
      %p271 = por %p269, %p270
      %p273 = scmp.ne.s32.totalorder %s258, %s272
      %p274 = scmp.eq.s32.totalorder %s38, 0
      %p275 = por %p273, %p274
      %s277 = sadd.s32 %s276, 1
      %p280 = scmp.eq.s32.totalorder %s32, 1
      %p281 = scmp.ne.s32.totalorder %s276, %s278
      %p282 = scmp.eq.s32.totalorder %s32, 0
      %p283 = por %p281, %p282
      %p284 = scmp.ne.s32.totalorder %s276, %s278
      %p285 = scmp.eq.s32.totalorder %s37, 1
      %p286 = por %p284, %p285
      %p287 = scmp.ne.s32.totalorder %s278, %s279
      %p288 = scmp.eq.s32.totalorder %s37, 0
      %p289 = por %p287, %p288
      %p290 = scmp.ne.s32.totalorder %s278, %s279
      %p291 = scmp.eq.s32.totalorder %s38, 1
      %p292 = por %p290, %p291
      %p294 = scmp.ne.s32.totalorder %s279, %s293
      %p295 = scmp.eq.s32.totalorder %s38, 0
      %p296 = por %p294, %p295
      %s298 = sadd.s32 %s297, 1
      %p301 = scmp.eq.s32.totalorder %s32, 1
      %p302 = scmp.ne.s32.totalorder %s297, %s299
      %p303 = scmp.eq.s32.totalorder %s32, 0
      %p304 = por %p302, %p303
      %p305 = scmp.ne.s32.totalorder %s297, %s299
      %p306 = scmp.eq.s32.totalorder %s37, 1
      %p307 = por %p305, %p306
      %p308 = scmp.ne.s32.totalorder %s299, %s300
      %p309 = scmp.eq.s32.totalorder %s37, 0
      %p310 = por %p308, %p309
      %p311 = scmp.ne.s32.totalorder %s299, %s300
      %p312 = scmp.eq.s32.totalorder %s38, 1
      %p313 = por %p311, %p312
      %p315 = scmp.ne.s32.totalorder %s300, %s314
      %p316 = scmp.eq.s32.totalorder %s38, 0
      %p317 = por %p315, %p316
      %s318 = ssub.s32 %s32, %s39
      %p319 = scmp.eq.s32.totalorder %s318, 0
      %s321 = sadd.s32 %s320, 1
      %s322 = scalar_select %p319, %s320, %s321
      %p325 = pneg %p319
      %p326 = scmp.eq.s32.totalorder %s32, 1
      %p327 = por %p325, %p326
      %p328 = scmp.ne.s32.totalorder %s320, %s323
      %p329 = scmp.eq.s32.totalorder %s32, 0
      %p330 = por %p328, %p329
      %p331 = scmp.ne.s32.totalorder %s320, %s323
      %p332 = scmp.eq.s32.totalorder %s37, 1
      %p333 = por %p331, %p332
      %p334 = scmp.ne.s32.totalorder %s323, %s324
      %p335 = scmp.eq.s32.totalorder %s37, 0
      %p336 = por %p334, %p335
      %p337 = scmp.ne.s32.totalorder %s323, %s324
      %p338 = scmp.eq.s32.totalorder %s38, 1
      %p339 = por %p337, %p338
      %p341 = scmp.ne.s32.totalorder %s324, %s340
      %p342 = scmp.eq.s32.totalorder %s38, 0
      %p343 = por %p341, %p342
      %s344 = ssub.s32 %s32, %s39
      %p345 = scmp.eq.s32.totalorder %s344, 0
      %s347 = sadd.s32 %s346, 1
      %s348 = scalar_select %p345, %s346, %s347
      %p351 = pneg %p345
      %p352 = scmp.eq.s32.totalorder %s32, 1
      %p353 = por %p351, %p352
      %p354 = scmp.ne.s32.totalorder %s346, %s349
      %p355 = scmp.eq.s32.totalorder %s32, 0
      %p356 = por %p354, %p355
      %p357 = scmp.ne.s32.totalorder %s346, %s349
      %p358 = scmp.eq.s32.totalorder %s37, 1
      %p359 = por %p357, %p358
      %p360 = scmp.ne.s32.totalorder %s349, %s350
      %p361 = scmp.eq.s32.totalorder %s37, 0
      %p362 = por %p360, %p361
      %p363 = scmp.ne.s32.totalorder %s349, %s350
      %p364 = scmp.eq.s32.totalorder %s38, 1
      %p365 = por %p363, %p364
      %p367 = scmp.ne.s32.totalorder %s350, %s366
      %p368 = scmp.eq.s32.totalorder %s38, 0
      %p369 = por %p367, %p368
      %p370 = scmp.le.s32.totalorder 1, %s32
      %p371 = scmp.lt.s32.totalorder %s32, 3
      %p372 = pnand %p370, %p371
      %p373 = pneg %p372
      // Predicated region
      $region9: #{tpu_custom_call.1} parent=5 // pred_check
        _
      $region10: #{tpu_custom_call.1} parent=5 // pred_check_branch
        %375 = sbr.rel (%p372) target = $region12
      $region11: #{tpu_custom_call.1} parent=5 // pred_region
        %s376 = ssub.s32 %s32, 1
        // Predicated region
        $region13: #{tpu_custom_call.1} parent=11 // pred_check
          %p377 = pneg %p79
        $region14: #{tpu_custom_call.1} parent=11 // pred_check_branch
          %379 = sbr.rel (%p377) target = $region16
        $region15: #{tpu_custom_call.1} parent=11 // pred_region
          _
        $region16: #{tpu_custom_call.1} parent=11 // pred_fallthru
          _
        // Predicated region
        $region17: #{tpu_custom_call.1} parent=11 // pred_check
          %p380 = pneg %p100
        $region18: #{tpu_custom_call.1} parent=11 // pred_check_branch
          %382 = sbr.rel (%p380) target = $region20
        $region19: #{tpu_custom_call.1} parent=11 // pred_region
          _
        $region20: #{tpu_custom_call.1} parent=11 // pred_fallthru
          _
        // Predicated region
        $region21: #{tpu_custom_call.1} parent=11 // pred_check
          %p383 = pneg %p121
        $region22: #{tpu_custom_call.1} parent=11 // pred_check_branch
          %385 = sbr.rel (%p383) target = $region24
        $region23: #{tpu_custom_call.1} parent=11 // pred_region
          _
        $region24: #{tpu_custom_call.1} parent=11 // pred_fallthru
          _
        // Predicated region
        $region25: #{tpu_custom_call.1} parent=11 // pred_check
          %p386 = pneg %p142
        $region26: #{tpu_custom_call.1} parent=11 // pred_check_branch
          %388 = sbr.rel (%p386) target = $region28
        $region27: #{tpu_custom_call.1} parent=11 // pred_region
          _
        $region28: #{tpu_custom_call.1} parent=11 // pred_fallthru
          _
        // Predicated region
        $region29: #{tpu_custom_call.1} parent=11 // pred_check
          %p389 = pneg %p163
        $region30: #{tpu_custom_call.1} parent=11 // pred_check_branch
          %391 = sbr.rel (%p389) target = $region32
        $region31: #{tpu_custom_call.1} parent=11 // pred_region
          %s393 = ssub.s32 16, 16
          %394 = vsyncadd [#allocation7], %s393
          %s396 = sshll.u32 [#allocation6], 4
          %s397 = int_to_ptr.vmem [resolvable:$true] %s396
          %399 = dma.hbm_to_vmem [thread:$0]  %s5, 16, %s397, [#allocation7]
        $region32: #{tpu_custom_call.1} parent=11 // pred_fallthru
          _
        // Predicated region
        $region33: #{tpu_custom_call.1} parent=11 // pred_check
          %p400 = pneg %p184
        $region34: #{tpu_custom_call.1} parent=11 // pred_check_branch
          %402 = sbr.rel (%p400) target = $region36
        $region35: #{tpu_custom_call.1} parent=11 // pred_region
          %s404 = ssub.s32 16, 16
          %405 = vsyncadd [#allocation7], %s404
          %s407 = sshll.u32 [#allocation8], 4
          %s408 = int_to_ptr.vmem [resolvable:$true] %s407
          %410 = dma.hbm_to_vmem [thread:$0]  %s6, 16, %s408, [#allocation7]
        $region36: #{tpu_custom_call.1} parent=11 // pred_fallthru
          _
        // Predicated region
        $region37: #{tpu_custom_call.1} parent=11 // pred_check
          %p411 = pneg %p205
        $region38: #{tpu_custom_call.1} parent=11 // pred_check_branch
          %413 = sbr.rel (%p411) target = $region40
        $region39: #{tpu_custom_call.1} parent=11 // pred_region
          _
        $region40: #{tpu_custom_call.1} parent=11 // pred_fallthru
          _
        // Predicated region
        $region41: #{tpu_custom_call.1} parent=11 // pred_check
          %p414 = pneg %p226
        $region42: #{tpu_custom_call.1} parent=11 // pred_check_branch
          %416 = sbr.rel (%p414) target = $region44
        $region43: #{tpu_custom_call.1} parent=11 // pred_region
          %s418 = ssub.s32 16, 16
          %419 = vsyncadd [#allocation10], %s418
          %s421 = sshll.u32 [#allocation9], 4
          %s422 = int_to_ptr.vmem [resolvable:$true] %s421
          %424 = dma.hbm_to_vmem [thread:$0]  %s8, 16, %s422, [#allocation10]
        $region44: #{tpu_custom_call.1} parent=11 // pred_fallthru
          _
        // Predicated region
        $region45: #{tpu_custom_call.1} parent=11 // pred_check
          %p425 = pneg %p247
        $region46: #{tpu_custom_call.1} parent=11 // pred_check_branch
          %427 = sbr.rel (%p425) target = $region48
        $region47: #{tpu_custom_call.1} parent=11 // pred_region
          _
        $region48: #{tpu_custom_call.1} parent=11 // pred_fallthru
          _
        // Predicated region
        $region49: #{tpu_custom_call.1} parent=11 // pred_check
          %p428 = pneg %p268
        $region50: #{tpu_custom_call.1} parent=11 // pred_check_branch
          %430 = sbr.rel (%p428) target = $region52
        $region51: #{tpu_custom_call.1} parent=11 // pred_region
          _
        $region52: #{tpu_custom_call.1} parent=11 // pred_fallthru
          _
        // Predicated region
        $region53: #{tpu_custom_call.1} parent=11 // pred_check
          %p431 = pneg %p289
        $region54: #{tpu_custom_call.1} parent=11 // pred_check_branch
          %433 = sbr.rel (%p431) target = $region56
        $region55: #{tpu_custom_call.1} parent=11 // pred_region
          _
        $region56: #{tpu_custom_call.1} parent=11 // pred_fallthru
          _
        // Predicated region
        $region57: #{tpu_custom_call.1} parent=11 // pred_check
          %p434 = pneg %p310
        $region58: #{tpu_custom_call.1} parent=11 // pred_check_branch
          %436 = sbr.rel (%p434) target = $region60
        $region59: #{tpu_custom_call.1} parent=11 // pred_region
          _
        $region60: #{tpu_custom_call.1} parent=11 // pred_fallthru
          _
      $region12: #{tpu_custom_call.1} parent=5 // pred_fallthru
        _
      %p437 = scmp.lt.s32.totalorder %s32, 2
      // Predicated region
      $region61: #{tpu_custom_call.1} parent=5 // pred_check
        %p438 = pneg %p437
      $region62: #{tpu_custom_call.1} parent=5 // pred_check_branch
        %440 = sbr.rel (%p438) target = $region64
      $region63: #{tpu_custom_call.1} parent=5 // pred_region
        // Predicated region
        $region65: #{tpu_custom_call.1} parent=63 // pred_check
          %p441 = pneg %p52
        $region66: #{tpu_custom_call.1} parent=63 // pred_check_branch
          %443 = sbr.rel (%p441) target = $region68
        $region67: #{tpu_custom_call.1} parent=63 // pred_region
          %s444 = sand.u32 %s42, 1
          %s445 = scalar_lea.sflag [#allocation4], %s444
          %s446 = sand.u32 %s42, 1
          %s447 = smul.addr %s446, 8
          %s448 = scalar_lea.vmem [#allocation3], %s447
          %s450 = ssub.s32 128, 128
          %451 = vsyncadd %s445, %s450
          %s452 = smul.addr %s32, 128
          %s453 = scalar_lea.hbm %s0, %s452
          %s455 = sshll.u32 %s448, 4
          %s456 = int_to_ptr.vmem [resolvable:$true] %s455
          %458 = dma.hbm_to_vmem [thread:$0]  %s453, 128, %s456, %s445
        $region68: #{tpu_custom_call.1} parent=63 // pred_fallthru
          _
      $region64: #{tpu_custom_call.1} parent=5 // pred_fallthru
        _
      %p459 = scmp.le.s32.totalorder 1, %s32
      %p460 = scmp.lt.s32.totalorder %s32, 3
      %p461 = pnand %p459, %p460
      %p462 = pneg %p461
      // Predicated region
      $region69: #{tpu_custom_call.1} parent=5 // pred_check
        _
      $region70: #{tpu_custom_call.1} parent=5 // pred_check_branch
        %464 = sbr.rel (%p461) target = $region72
      $region71: #{tpu_custom_call.1} parent=5 // pred_region
        %s465 = ssub.s32 %s32, 1
        %s466 = sand.u32 %s45, 1
        %s467 = scalar_lea.sflag [#allocation4], %s466
        %s468 = sand.u32 %s45, 1
        %s469 = smul.addr %s468, 8
        %s470 = scalar_lea.vmem [#allocation3], %s469
        // Predicated region
        $region73: #{tpu_custom_call.1} parent=71 // pred_check
          %p471 = pneg %p58
        $region74: #{tpu_custom_call.1} parent=71 // pred_check_branch
          %473 = sbr.rel (%p471) target = $region76
        $region75: #{tpu_custom_call.1} parent=71 // pred_region
          %474 = dma.done %s467, 128
        $region76: #{tpu_custom_call.1} parent=71 // pred_fallthru
          _
        // Predicated region
        $region77: #{tpu_custom_call.1} parent=71 // pred_check
          %p475 = pneg %p163
        $region78: #{tpu_custom_call.1} parent=71 // pred_check_branch
          %477 = sbr.rel (%p475) target = $region80
        $region79: #{tpu_custom_call.1} parent=71 // pred_region
          %478 = dma.done [#allocation7], 16
        $region80: #{tpu_custom_call.1} parent=71 // pred_fallthru
          _
        // Predicated region
        $region81: #{tpu_custom_call.1} parent=71 // pred_check
          %p479 = pneg %p184
        $region82: #{tpu_custom_call.1} parent=71 // pred_check_branch
          %481 = sbr.rel (%p479) target = $region84
        $region83: #{tpu_custom_call.1} parent=71 // pred_region
          %482 = dma.done [#allocation7], 16
        $region84: #{tpu_custom_call.1} parent=71 // pred_fallthru
          _
        // Predicated region
        $region85: #{tpu_custom_call.1} parent=71 // pred_check
          %p483 = pneg %p226
        $region86: #{tpu_custom_call.1} parent=71 // pred_check_branch
          %485 = sbr.rel (%p483) target = $region88
        $region87: #{tpu_custom_call.1} parent=71 // pred_region
          %486 = dma.done [#allocation10], 16
        $region88: #{tpu_custom_call.1} parent=71 // pred_fallthru
          _
        %s487 = sand.u32 %s45, 1
        %s488 = scalar_lea.sflag [#allocation4], %s487
        %s489 = sand.u32 %s45, 1
        %s490 = smul.addr %s489, 8
        %s491 = scalar_lea.vmem [#allocation3], %s490
        %p492 = pneg %p58
        %p493 = pneg %p55
        %p494 = pneg %p79
        %p495 = pneg %p76
        %p496 = pneg %p100
        %p497 = pneg %p97
        %p498 = pneg %p121
        %p499 = pneg %p118
        %p500 = pneg %p142
        %p501 = pneg %p139
        %p502 = pneg %p163
        %p503 = pneg %p160
        %p504 = pneg %p184
        %p505 = pneg %p181
        %p506 = pneg %p205
        %p507 = pneg %p202
        %p508 = pneg %p226
        %p509 = pneg %p223
        %p510 = pneg %p247
        %p511 = pneg %p244
        %p512 = pneg %p268
        %p513 = pneg %p265
        %p514 = pneg %p289
        %p515 = pneg %p286
        %p516 = pneg %p310
        %p517 = pneg %p307
        %p518 = pneg %p336
        %p519 = pneg %p333
        %s520 = sand.u32 %s323, 1
        %s521 = scalar_lea.sflag [#allocation5], %s520
        %s522 = sand.u32 %s323, 1
        %s523 = smul.addr %s522, 8
        %s524 = scalar_lea.vmem [#allocation11], %s523
        %p525 = pneg %p362
        %p526 = pneg %p359
        %s527 = sand.u32 %s349, 1
        %s528 = scalar_lea.sflag [#allocation13], %s527
        %s529 = sand.u32 %s349, 1
        %s530 = smul.addr %s529, 32
        %s531 = scalar_lea.vmem [#allocation12], %s530
        %v532 = vld [vmem:[%s470] sm:$0xff]
        %v533 = vld [vmem:[%s1] sm:$0xff]
        %v534 = vld [vmem:[%s1 + $0x8] sm:$0xff]
        %v535 = vld [vmem:[%s1 + $0x10] sm:$0xff]
        %v536 = vld [vmem:[%s1 + $0x18] sm:$0xff]
        %v537 = vld [vmem:[%s2] sm:$0x1]
        %v539 = vlaneseq
        %v540 = vshrl.u32 %v539, 7
        %v541 = vsub.s32 0, %v540
        %v542 = vrot.slane %v537, %v541
        %vm544 = vcmask 261120
        %v546 = vsel %vm544, %v532, 0
        %548 = vmatprep.subr.mxu0 0.0
        %549 = vmatpush1.msra.mxu0 %v533
        %550 = vmatprep.subr.mxu0 0.0
        %551 = vmatpush1.msra.mxu0 %v534
        %552 = vmatprep.subr.mxu0 0.0
        %553 = vmatpush1.msra.mxu0 %v535
        %554 = vmatprep.subr.mxu0 0.0
        %555 = vmatpush1.msra.mxu0 %v536
        %556 = vmatprep.subr.mxu0 0.0
        %557 = vmatpush1.msra.mxu0 0.0
        %558 = vmatprep.subr.mxu0 0.0
        %559 = vmatpush1.msra.mxu0 0.0
        %560 = vmatprep.subr.mxu0 0.0
        %561 = vmatpush1.msra.mxu0 0.0
        %562 = vmatprep.subr.mxu0 0.0
        %563 = vmatpush1.msra.mxu0 0.0
        %564 = vmatprep.subr.mxu0 0.0
        %565 = vmatpush1.msra.mxu0 0.0
        %566 = vmatprep.subr.mxu0 0.0
        %567 = vmatpush1.msra.mxu0 0.0
        %568 = vmatprep.subr.mxu0 0.0
        %569 = vmatpush1.msra.mxu0 0.0
        %570 = vmatprep.subr.mxu0 0.0
        %571 = vmatpush1.msra.mxu0 0.0
        %572 = vmatprep.subr.mxu0 0.0
        %573 = vmatpush1.msra.mxu0 0.0
        %574 = vmatprep.subr.mxu0 0.0
        %575 = vmatpush1.msra.mxu0 0.0
        %576 = vmatprep.subr.mxu0 0.0
        %577 = vmatpush1.msra.mxu0 0.0
        %578 = vmatprep.subr.mxu0 0.0
        %579 = vmatpush1.msra.mxu0 0.0
        %580 = vmatprep.subr.mxu0 0.0
        %581 = vmatpush1.msra.mxu0 0.0
        %582 = vmatprep.subr.mxu0 0.0
        %583 = vmatpush1.msra.mxu0 0.0
        %584 = vmatprep.subr.mxu0 0.0
        %585 = vmatpush1.msra.mxu0 0.0
        %586 = vmatprep.subr.mxu0 0.0
        %587 = vmatpush1.msra.mxu0 0.0
        %588 = vmatprep.subr.mxu0 0.0
        %589 = vmatpush1.msra.mxu0 0.0
        %590 = vmatprep.subr.mxu0 0.0
        %591 = vmatpush1.msra.mxu0 0.0
        %592 = vmatprep.subr.mxu0 0.0
        %593 = vmatpush1.msra.mxu0 0.0
        %594 = vmatprep.subr.mxu0 0.0
        %595 = vmatpush1.msra.mxu0 0.0
        %596 = vmatprep.subr.mxu0 0.0
        %597 = vmatpush1.msra.mxu0 0.0
        %598 = vmatprep.subr.mxu0 0.0
        %599 = vmatpush1.msra.mxu0 0.0
        %600 = vmatprep.subr.mxu0 0.0
        %601 = vmatpush1.msra.mxu0 0.0
        %602 = vmatprep.subr.mxu0 0.0
        %603 = vmatpush1.msra.mxu0 0.0
        %604 = vmatprep.subr.mxu0 0.0
        %605 = vmatpush1.msra.mxu0 0.0
        %606 = vmatprep.subr.mxu0 0.0
        %607 = vmatpush1.msra.mxu0 0.0
        %608 = vmatprep.subr.mxu0 0.0
        %609 = vmatpush1.msra.mxu0 0.0
        %610 = vmatprep.subr.mxu0 0.0
        %611 = vmatpush1.msra.mxu0 0.0
        %612 = vmatprep.mubr.f32.mxu0 0.0
        %613 = vmatmul.mubr.f32.gmra.mrb[0].mxu0 %v546
        %v614 = vpop.f32.mrb[0].mxu0
        %v615 = vadd.f32 %v542, %v614
        %v616 = vpop.f32.mrb[0].mxu0
        %617 = vdwg.mxu0
        %619 = vrot.lane.b32.xlu0 %v615, 96
        %v620 = vpop.permute.xlu0 %619
        %vm621 = vcmask 64512
        %v622 = vsel %vm621, %v615, 0
        %v624 = vsel %vm621, %v620, 0
        %626 = vmatprep.subr.mxu0 0.0
        %627 = vmatpush1.xpose.msra.mxu0 %v624
        %628 = vmatprep.subr.mxu0 0.0
        %629 = vmatpush1.xpose.msra.mxu0 0.0
        %630 = vmatprep.subr.mxu0 0.0
        %631 = vmatpush1.xpose.msra.mxu0 0.0
        %632 = vmatprep.subr.mxu0 0.0
        %633 = vmatpush1.xpose.msra.mxu0 0.0
        %634 = vmatprep.subr.mxu0 0.0
        %635 = vmatpush1.xpose.msra.mxu0 0.0
        %636 = vmatprep.subr.mxu0 0.0
        %637 = vmatpush1.xpose.msra.mxu0 0.0
        %638 = vmatprep.subr.mxu0 0.0
        %639 = vmatpush1.xpose.msra.mxu0 0.0
        %640 = vmatprep.subr.mxu0 0.0
        %641 = vmatpush1.xpose.msra.mxu0 0.0
        %642 = vmatprep.subr.mxu0 0.0
        %643 = vmatpush1.xpose.msra.mxu0 0.0
        %644 = vmatprep.subr.mxu0 0.0
        %645 = vmatpush1.xpose.msra.mxu0 0.0
        %646 = vmatprep.subr.mxu0 0.0
        %647 = vmatpush1.xpose.msra.mxu0 0.0
        %648 = vmatprep.subr.mxu0 0.0
        %649 = vmatpush1.xpose.msra.mxu0 0.0
        %650 = vmatprep.subr.mxu0 0.0
        %651 = vmatpush1.xpose.msra.mxu0 0.0
        %652 = vmatprep.subr.mxu0 0.0
        %653 = vmatpush1.xpose.msra.mxu0 0.0
        %654 = vmatprep.subr.mxu0 0.0
        %655 = vmatpush1.xpose.msra.mxu0 0.0
        %656 = vmatprep.subr.mxu0 0.0
        %657 = vmatpush1.xpose.msra.mxu0 0.0
        %658 = vmatprep.subr.mxu0 0.0
        %659 = vmatpush1.xpose.msra.mxu0 0.0
        %660 = vmatprep.subr.mxu0 0.0
        %661 = vmatpush1.xpose.msra.mxu0 0.0
        %662 = vmatprep.subr.mxu0 0.0
        %663 = vmatpush1.xpose.msra.mxu0 0.0
        %664 = vmatprep.subr.mxu0 0.0
        %665 = vmatpush1.xpose.msra.mxu0 0.0
        %666 = vmatprep.subr.mxu0 0.0
        %667 = vmatpush1.xpose.msra.mxu0 0.0
        %668 = vmatprep.subr.mxu0 0.0
        %669 = vmatpush1.xpose.msra.mxu0 0.0
        %670 = vmatprep.subr.mxu0 0.0
        %671 = vmatpush1.xpose.msra.mxu0 0.0
        %672 = vmatprep.subr.mxu0 0.0
        %673 = vmatpush1.xpose.msra.mxu0 0.0
        %674 = vmatprep.subr.mxu0 0.0
        %675 = vmatpush1.xpose.msra.mxu0 0.0
        %676 = vmatprep.subr.mxu0 0.0
        %677 = vmatpush1.xpose.msra.mxu0 0.0
        %678 = vmatprep.subr.mxu0 0.0
        %679 = vmatpush1.xpose.msra.mxu0 0.0
        %680 = vmatprep.subr.mxu0 0.0
        %681 = vmatpush1.xpose.msra.mxu0 0.0
        %682 = vmatprep.subr.mxu0 0.0
        %683 = vmatpush1.xpose.msra.mxu0 0.0
        %684 = vmatprep.subr.mxu0 0.0
        %685 = vmatpush1.xpose.msra.mxu0 0.0
        %686 = vmatprep.subr.mxu0 0.0
        %687 = vmatpush1.xpose.msra.mxu0 0.0
        %688 = vmatprep.subr.mxu0 0.0
        %689 = vmatpush1.xpose.msra.mxu0 0.0
        %690 = vmatprep.mubr.f32.mxu0 0.0
        %691 = vmatmul.mubr.f32.gmra.mrb[0].mxu0 %v622
        %v692 = vpop.f32.mrb[0].mxu0
        %v693 = vadd.f32 0.0, %v692
        %v694 = vpop.f32.mrb[0].mxu0
        %695 = vdwg.mxu0
        %v696 = vsel %vm621, %v693, -inf
        %697 = vmax.xlane.f32.xlu0 %v696
        %v698 = vpop.xlane.xlu0 %697
        %v699 = vsub.f32 %v693, %v698
        %v700 = vmul.f32 %v699, 1.442695
        %v701 = vpow.pop %v700
        %v702 = vsel %vm621, %v701, 0.0
        %703 = vadd.xlane.f32.xlu0 %v702
        %v704 = vpop.xlane.xlu0 %703
        %v705 = vrcp.pop %v704
        %v706 = vmul.f32 %v701, %v705
        %707 = vst.msk [vmem:[%s531] sm:$0xff] %vm621, %v706
        %708 = vrot.lane.b32.xlu0 %v615, 64
        %v709 = vpop.permute.xlu0 %708
        %v712 = vsel %vm621, %v706, 0
        %714 = vmatprep.subr.mxu0 0.0
        %715 = vmatpush1.msra.mxu0 %v709
        %716 = vmatprep.subr.mxu0 0.0
        %717 = vmatpush1.msra.mxu0 0.0
        %718 = vmatprep.subr.mxu0 0.0
        %719 = vmatpush1.msra.mxu0 0.0
        %720 = vmatprep.subr.mxu0 0.0
        %721 = vmatpush1.msra.mxu0 0.0
        %722 = vmatprep.subr.mxu0 0.0
        %723 = vmatpush1.msra.mxu0 0.0
        %724 = vmatprep.subr.mxu0 0.0
        %725 = vmatpush1.msra.mxu0 0.0
        %726 = vmatprep.subr.mxu0 0.0
        %727 = vmatpush1.msra.mxu0 0.0
        %728 = vmatprep.subr.mxu0 0.0
        %729 = vmatpush1.msra.mxu0 0.0
        %730 = vmatprep.subr.mxu0 0.0
        %731 = vmatpush1.msra.mxu0 0.0
        %732 = vmatprep.subr.mxu0 0.0
        %733 = vmatpush1.msra.mxu0 0.0
        %734 = vmatprep.subr.mxu0 0.0
        %735 = vmatpush1.msra.mxu0 0.0
        %736 = vmatprep.subr.mxu0 0.0
        %737 = vmatpush1.msra.mxu0 0.0
        %738 = vmatprep.subr.mxu0 0.0
        %739 = vmatpush1.msra.mxu0 0.0
        %740 = vmatprep.subr.mxu0 0.0
        %741 = vmatpush1.msra.mxu0 0.0
        %742 = vmatprep.subr.mxu0 0.0
        %743 = vmatpush1.msra.mxu0 0.0
        %744 = vmatprep.subr.mxu0 0.0
        %745 = vmatpush1.msra.mxu0 0.0
        %746 = vmatprep.subr.mxu0 0.0
        %747 = vmatpush1.msra.mxu0 0.0
        %748 = vmatprep.subr.mxu0 0.0
        %749 = vmatpush1.msra.mxu0 0.0
        %750 = vmatprep.subr.mxu0 0.0
        %751 = vmatpush1.msra.mxu0 0.0
        %752 = vmatprep.subr.mxu0 0.0
        %753 = vmatpush1.msra.mxu0 0.0
        %754 = vmatprep.subr.mxu0 0.0
        %755 = vmatpush1.msra.mxu0 0.0
        %756 = vmatprep.subr.mxu0 0.0
        %757 = vmatpush1.msra.mxu0 0.0
        %758 = vmatprep.subr.mxu0 0.0
        %759 = vmatpush1.msra.mxu0 0.0
        %760 = vmatprep.subr.mxu0 0.0
        %761 = vmatpush1.msra.mxu0 0.0
        %762 = vmatprep.subr.mxu0 0.0
        %763 = vmatpush1.msra.mxu0 0.0
        %764 = vmatprep.subr.mxu0 0.0
        %765 = vmatpush1.msra.mxu0 0.0
        %766 = vmatprep.subr.mxu0 0.0
        %767 = vmatpush1.msra.mxu0 0.0
        %768 = vmatprep.subr.mxu0 0.0
        %769 = vmatpush1.msra.mxu0 0.0
        %770 = vmatprep.subr.mxu0 0.0
        %771 = vmatpush1.msra.mxu0 0.0
        %772 = vmatprep.subr.mxu0 0.0
        %773 = vmatpush1.msra.mxu0 0.0
        %774 = vmatprep.subr.mxu0 0.0
        %775 = vmatpush1.msra.mxu0 0.0
        %776 = vmatprep.subr.mxu0 0.0
        %777 = vmatpush1.msra.mxu0 0.0
        %778 = vmatprep.mubr.f32.mxu0 0.0
        %779 = vmatmul.mubr.f32.gmra.mrb[0].mxu0 %v712
        %v780 = vpop.f32.mrb[0].mxu0
        %v781 = vadd.f32 0.0, %v780
        %v782 = vpop.f32.mrb[0].mxu0
        %783 = vdwg.mxu0
        %784 = vst.msk [vmem:[#allocation2] sm:$0xff] %vm621, %v781
        %785 = vrot.lane.b32.xlu0 %v615, 120
        %v786 = vpop.permute.xlu0 %785
        %787 = vrot.lane.b32.xlu0 %v615, 88
        %v788 = vpop.permute.xlu0 %787
        %v789 = vsel %vm621, %v786, 0
        %v791 = vsel %vm621, %v788, 0
        %793 = vmatprep.subr.mxu0 0.0
        %794 = vmatpush1.xpose.msra.mxu0 %v791
        %795 = vmatprep.subr.mxu0 0.0
        %796 = vmatpush1.xpose.msra.mxu0 0.0
        %797 = vmatprep.subr.mxu0 0.0
        %798 = vmatpush1.xpose.msra.mxu0 0.0
        %799 = vmatprep.subr.mxu0 0.0
        %800 = vmatpush1.xpose.msra.mxu0 0.0
        %801 = vmatprep.subr.mxu0 0.0
        %802 = vmatpush1.xpose.msra.mxu0 0.0
        %803 = vmatprep.subr.mxu0 0.0
        %804 = vmatpush1.xpose.msra.mxu0 0.0
        %805 = vmatprep.subr.mxu0 0.0
        %806 = vmatpush1.xpose.msra.mxu0 0.0
        %807 = vmatprep.subr.mxu0 0.0
        %808 = vmatpush1.xpose.msra.mxu0 0.0
        %809 = vmatprep.subr.mxu0 0.0
        %810 = vmatpush1.xpose.msra.mxu0 0.0
        %811 = vmatprep.subr.mxu0 0.0
        %812 = vmatpush1.xpose.msra.mxu0 0.0
        %813 = vmatprep.subr.mxu0 0.0
        %814 = vmatpush1.xpose.msra.mxu0 0.0
        %815 = vmatprep.subr.mxu0 0.0
        %816 = vmatpush1.xpose.msra.mxu0 0.0
        %817 = vmatprep.subr.mxu0 0.0
        %818 = vmatpush1.xpose.msra.mxu0 0.0
        %819 = vmatprep.subr.mxu0 0.0
        %820 = vmatpush1.xpose.msra.mxu0 0.0
        %821 = vmatprep.subr.mxu0 0.0
        %822 = vmatpush1.xpose.msra.mxu0 0.0
        %823 = vmatprep.subr.mxu0 0.0
        %824 = vmatpush1.xpose.msra.mxu0 0.0
        %825 = vmatprep.subr.mxu0 0.0
        %826 = vmatpush1.xpose.msra.mxu0 0.0
        %827 = vmatprep.subr.mxu0 0.0
        %828 = vmatpush1.xpose.msra.mxu0 0.0
        %829 = vmatprep.subr.mxu0 0.0
        %830 = vmatpush1.xpose.msra.mxu0 0.0
        %831 = vmatprep.subr.mxu0 0.0
        %832 = vmatpush1.xpose.msra.mxu0 0.0
        %833 = vmatprep.subr.mxu0 0.0
        %834 = vmatpush1.xpose.msra.mxu0 0.0
        %835 = vmatprep.subr.mxu0 0.0
        %836 = vmatpush1.xpose.msra.mxu0 0.0
        %837 = vmatprep.subr.mxu0 0.0
        %838 = vmatpush1.xpose.msra.mxu0 0.0
        %839 = vmatprep.subr.mxu0 0.0
        %840 = vmatpush1.xpose.msra.mxu0 0.0
        %841 = vmatprep.subr.mxu0 0.0
        %842 = vmatpush1.xpose.msra.mxu0 0.0
        %843 = vmatprep.subr.mxu0 0.0
        %844 = vmatpush1.xpose.msra.mxu0 0.0
        %845 = vmatprep.subr.mxu0 0.0
        %846 = vmatpush1.xpose.msra.mxu0 0.0
        %847 = vmatprep.subr.mxu0 0.0
        %848 = vmatpush1.xpose.msra.mxu0 0.0
        %849 = vmatprep.subr.mxu0 0.0
        %850 = vmatpush1.xpose.msra.mxu0 0.0
        %851 = vmatprep.subr.mxu0 0.0
        %852 = vmatpush1.xpose.msra.mxu0 0.0
        %853 = vmatprep.subr.mxu0 0.0
        %854 = vmatpush1.xpose.msra.mxu0 0.0
        %855 = vmatprep.subr.mxu0 0.0
        %856 = vmatpush1.xpose.msra.mxu0 0.0
        %857 = vmatprep.mubr.f32.mxu0 0.0
        %858 = vmatmul.mubr.f32.gmra.mrb[0].mxu0 %v789
        %v859 = vpop.f32.mrb[0].mxu0
        %v860 = vadd.f32 0.0, %v859
        %v861 = vpop.f32.mrb[0].mxu0
        %862 = vdwg.mxu0
        %v863 = vsel %vm621, %v860, -inf
        %864 = vmax.xlane.f32.xlu0 %v863
        %v865 = vpop.xlane.xlu0 %864
        %v866 = vsub.f32 %v860, %v865
        %v867 = vmul.f32 %v866, 1.442695
        %v868 = vpow.pop %v867
        %v869 = vsel %vm621, %v868, 0.0
        %870 = vadd.xlane.f32.xlu0 %v869
        %v871 = vpop.xlane.xlu0 %870
        %v872 = vrcp.pop %v871
        %v873 = vmul.f32 %v868, %v872
        %s874 = scalar_lea.vmem %s531, 8 [#allocation12]
        %875 = vst.msk [vmem:[%s874] sm:$0xff] %vm621, %v873
        %876 = vrot.lane.b32.xlu0 %v615, 56
        %v877 = vpop.permute.xlu0 %876
        %v880 = vsel %vm621, %v873, 0
        %882 = vmatprep.subr.mxu0 0.0
        %883 = vmatpush1.msra.mxu0 %v877
        %884 = vmatprep.subr.mxu0 0.0
        %885 = vmatpush1.msra.mxu0 0.0
        %886 = vmatprep.subr.mxu0 0.0
        %887 = vmatpush1.msra.mxu0 0.0
        %888 = vmatprep.subr.mxu0 0.0
        %889 = vmatpush1.msra.mxu0 0.0
        %890 = vmatprep.subr.mxu0 0.0
        %891 = vmatpush1.msra.mxu0 0.0
        %892 = vmatprep.subr.mxu0 0.0
        %893 = vmatpush1.msra.mxu0 0.0
        %894 = vmatprep.subr.mxu0 0.0
        %895 = vmatpush1.msra.mxu0 0.0
        %896 = vmatprep.subr.mxu0 0.0
        %897 = vmatpush1.msra.mxu0 0.0
        %898 = vmatprep.subr.mxu0 0.0
        %899 = vmatpush1.msra.mxu0 0.0
        %900 = vmatprep.subr.mxu0 0.0
        %901 = vmatpush1.msra.mxu0 0.0
        %902 = vmatprep.subr.mxu0 0.0
        %903 = vmatpush1.msra.mxu0 0.0
        %904 = vmatprep.subr.mxu0 0.0
        %905 = vmatpush1.msra.mxu0 0.0
        %906 = vmatprep.subr.mxu0 0.0
        %907 = vmatpush1.msra.mxu0 0.0
        %908 = vmatprep.subr.mxu0 0.0
        %909 = vmatpush1.msra.mxu0 0.0
        %910 = vmatprep.subr.mxu0 0.0
        %911 = vmatpush1.msra.mxu0 0.0
        %912 = vmatprep.subr.mxu0 0.0
        %913 = vmatpush1.msra.mxu0 0.0
        %914 = vmatprep.subr.mxu0 0.0
        %915 = vmatpush1.msra.mxu0 0.0
        %916 = vmatprep.subr.mxu0 0.0
        %917 = vmatpush1.msra.mxu0 0.0
        %918 = vmatprep.subr.mxu0 0.0
        %919 = vmatpush1.msra.mxu0 0.0
        %920 = vmatprep.subr.mxu0 0.0
        %921 = vmatpush1.msra.mxu0 0.0
        %922 = vmatprep.subr.mxu0 0.0
        %923 = vmatpush1.msra.mxu0 0.0
        %924 = vmatprep.subr.mxu0 0.0
        %925 = vmatpush1.msra.mxu0 0.0
        %926 = vmatprep.subr.mxu0 0.0
        %927 = vmatpush1.msra.mxu0 0.0
        %928 = vmatprep.subr.mxu0 0.0
        %929 = vmatpush1.msra.mxu0 0.0
        %930 = vmatprep.subr.mxu0 0.0
        %931 = vmatpush1.msra.mxu0 0.0
        %932 = vmatprep.subr.mxu0 0.0
        %933 = vmatpush1.msra.mxu0 0.0
        %934 = vmatprep.subr.mxu0 0.0
        %935 = vmatpush1.msra.mxu0 0.0
        %936 = vmatprep.subr.mxu0 0.0
        %937 = vmatpush1.msra.mxu0 0.0
        %938 = vmatprep.subr.mxu0 0.0
        %939 = vmatpush1.msra.mxu0 0.0
        %940 = vmatprep.subr.mxu0 0.0
        %941 = vmatpush1.msra.mxu0 0.0
        %942 = vmatprep.subr.mxu0 0.0
        %943 = vmatpush1.msra.mxu0 0.0
        %944 = vmatprep.subr.mxu0 0.0
        %945 = vmatpush1.msra.mxu0 0.0
        %946 = vmatprep.mubr.f32.mxu0 0.0
        %947 = vmatmul.mubr.f32.gmra.mrb[0].mxu0 %v880
        %v948 = vpop.f32.mrb[0].mxu0
        %v949 = vadd.f32 0.0, %v948
        %v950 = vpop.f32.mrb[0].mxu0
        %951 = vdwg.mxu0
        %953 = vrot.lane.b32.xlu0 %v949, 8
        %v954 = vpop.permute.xlu0 %953
        %vm956 = vcmask 130112
        %957 = vst.msk [vmem:[#allocation2] sm:$0xff] %vm956, %v954
        %958 = vrot.lane.b32.xlu0 %v615, 112
        %v959 = vpop.permute.xlu0 %958
        %960 = vrot.lane.b32.xlu0 %v615, 80
        %v961 = vpop.permute.xlu0 %960
        %v962 = vsel %vm621, %v959, 0
        %v964 = vsel %vm621, %v961, 0
        %966 = vmatprep.subr.mxu0 0.0
        %967 = vmatpush1.xpose.msra.mxu0 %v964
        %968 = vmatprep.subr.mxu0 0.0
        %969 = vmatpush1.xpose.msra.mxu0 0.0
        %970 = vmatprep.subr.mxu0 0.0
        %971 = vmatpush1.xpose.msra.mxu0 0.0
        %972 = vmatprep.subr.mxu0 0.0
        %973 = vmatpush1.xpose.msra.mxu0 0.0
        %974 = vmatprep.subr.mxu0 0.0
        %975 = vmatpush1.xpose.msra.mxu0 0.0
        %976 = vmatprep.subr.mxu0 0.0
        %977 = vmatpush1.xpose.msra.mxu0 0.0
        %978 = vmatprep.subr.mxu0 0.0
        %979 = vmatpush1.xpose.msra.mxu0 0.0
        %980 = vmatprep.subr.mxu0 0.0
        %981 = vmatpush1.xpose.msra.mxu0 0.0
        %982 = vmatprep.subr.mxu0 0.0
        %983 = vmatpush1.xpose.msra.mxu0 0.0
        %984 = vmatprep.subr.mxu0 0.0
        %985 = vmatpush1.xpose.msra.mxu0 0.0
        %986 = vmatprep.subr.mxu0 0.0
        %987 = vmatpush1.xpose.msra.mxu0 0.0
        %988 = vmatprep.subr.mxu0 0.0
        %989 = vmatpush1.xpose.msra.mxu0 0.0
        %990 = vmatprep.subr.mxu0 0.0
        %991 = vmatpush1.xpose.msra.mxu0 0.0
        %992 = vmatprep.subr.mxu0 0.0
        %993 = vmatpush1.xpose.msra.mxu0 0.0
        %994 = vmatprep.subr.mxu0 0.0
        %995 = vmatpush1.xpose.msra.mxu0 0.0
        %996 = vmatprep.subr.mxu0 0.0
        %997 = vmatpush1.xpose.msra.mxu0 0.0
        %998 = vmatprep.subr.mxu0 0.0
        %999 = vmatpush1.xpose.msra.mxu0 0.0
        %1000 = vmatprep.subr.mxu0 0.0
        %1001 = vmatpush1.xpose.msra.mxu0 0.0
        %1002 = vmatprep.subr.mxu0 0.0
        %1003 = vmatpush1.xpose.msra.mxu0 0.0
        %1004 = vmatprep.subr.mxu0 0.0
        %1005 = vmatpush1.xpose.msra.mxu0 0.0
        %1006 = vmatprep.subr.mxu0 0.0
        %1007 = vmatpush1.xpose.msra.mxu0 0.0
        %1008 = vmatprep.subr.mxu0 0.0
        %1009 = vmatpush1.xpose.msra.mxu0 0.0
        %1010 = vmatprep.subr.mxu0 0.0
        %1011 = vmatpush1.xpose.msra.mxu0 0.0
        %1012 = vmatprep.subr.mxu0 0.0
        %1013 = vmatpush1.xpose.msra.mxu0 0.0
        %1014 = vmatprep.subr.mxu0 0.0
        %1015 = vmatpush1.xpose.msra.mxu0 0.0
        %1016 = vmatprep.subr.mxu0 0.0
        %1017 = vmatpush1.xpose.msra.mxu0 0.0
        %1018 = vmatprep.subr.mxu0 0.0
        %1019 = vmatpush1.xpose.msra.mxu0 0.0
        %1020 = vmatprep.subr.mxu0 0.0
        %1021 = vmatpush1.xpose.msra.mxu0 0.0
        %1022 = vmatprep.subr.mxu0 0.0
        %1023 = vmatpush1.xpose.msra.mxu0 0.0
        %1024 = vmatprep.subr.mxu0 0.0
        %1025 = vmatpush1.xpose.msra.mxu0 0.0
        %1026 = vmatprep.subr.mxu0 0.0
        %1027 = vmatpush1.xpose.msra.mxu0 0.0
        %1028 = vmatprep.subr.mxu0 0.0
        %1029 = vmatpush1.xpose.msra.mxu0 0.0
        %1030 = vmatprep.mubr.f32.mxu0 0.0
        %1031 = vmatmul.mubr.f32.gmra.mrb[0].mxu0 %v962
        %v1032 = vpop.f32.mrb[0].mxu0
        %v1033 = vadd.f32 0.0, %v1032
        %v1034 = vpop.f32.mrb[0].mxu0
        %1035 = vdwg.mxu0
        %v1036 = vsel %vm621, %v1033, -inf
        %1037 = vmax.xlane.f32.xlu0 %v1036
        %v1038 = vpop.xlane.xlu0 %1037
        %v1039 = vsub.f32 %v1033, %v1038
        %v1040 = vmul.f32 %v1039, 1.442695
        %v1041 = vpow.pop %v1040
        %v1042 = vsel %vm621, %v1041, 0.0
        %1043 = vadd.xlane.f32.xlu0 %v1042
        %v1044 = vpop.xlane.xlu0 %1043
        %v1045 = vrcp.pop %v1044
        %v1046 = vmul.f32 %v1041, %v1045
        %s1047 = scalar_lea.vmem %s531, 16 [#allocation12]
        %1048 = vst.msk [vmem:[%s1047] sm:$0xff] %vm621, %v1046
        %1049 = vrot.lane.b32.xlu0 %v615, 48
        %v1050 = vpop.permute.xlu0 %1049
        %v1053 = vsel %vm621, %v1046, 0
        %1055 = vmatprep.subr.mxu0 0.0
        %1056 = vmatpush1.msra.mxu0 %v1050
        %1057 = vmatprep.subr.mxu0 0.0
        %1058 = vmatpush1.msra.mxu0 0.0
        %1059 = vmatprep.subr.mxu0 0.0
        %1060 = vmatpush1.msra.mxu0 0.0
        %1061 = vmatprep.subr.mxu0 0.0
        %1062 = vmatpush1.msra.mxu0 0.0
        %1063 = vmatprep.subr.mxu0 0.0
        %1064 = vmatpush1.msra.mxu0 0.0
        %1065 = vmatprep.subr.mxu0 0.0
        %1066 = vmatpush1.msra.mxu0 0.0
        %1067 = vmatprep.subr.mxu0 0.0
        %1068 = vmatpush1.msra.mxu0 0.0
        %1069 = vmatprep.subr.mxu0 0.0
        %1070 = vmatpush1.msra.mxu0 0.0
        %1071 = vmatprep.subr.mxu0 0.0
        %1072 = vmatpush1.msra.mxu0 0.0
        %1073 = vmatprep.subr.mxu0 0.0
        %1074 = vmatpush1.msra.mxu0 0.0
        %1075 = vmatprep.subr.mxu0 0.0
        %1076 = vmatpush1.msra.mxu0 0.0
        %1077 = vmatprep.subr.mxu0 0.0
        %1078 = vmatpush1.msra.mxu0 0.0
        %1079 = vmatprep.subr.mxu0 0.0
        %1080 = vmatpush1.msra.mxu0 0.0
        %1081 = vmatprep.subr.mxu0 0.0
        %1082 = vmatpush1.msra.mxu0 0.0
        %1083 = vmatprep.subr.mxu0 0.0
        %1084 = vmatpush1.msra.mxu0 0.0
        %1085 = vmatprep.subr.mxu0 0.0
        %1086 = vmatpush1.msra.mxu0 0.0
        %1087 = vmatprep.subr.mxu0 0.0
        %1088 = vmatpush1.msra.mxu0 0.0
        %1089 = vmatprep.subr.mxu0 0.0
        %1090 = vmatpush1.msra.mxu0 0.0
        %1091 = vmatprep.subr.mxu0 0.0
        %1092 = vmatpush1.msra.mxu0 0.0
        %1093 = vmatprep.subr.mxu0 0.0
        %1094 = vmatpush1.msra.mxu0 0.0
        %1095 = vmatprep.subr.mxu0 0.0
        %1096 = vmatpush1.msra.mxu0 0.0
        %1097 = vmatprep.subr.mxu0 0.0
        %1098 = vmatpush1.msra.mxu0 0.0
        %1099 = vmatprep.subr.mxu0 0.0
        %1100 = vmatpush1.msra.mxu0 0.0
        %1101 = vmatprep.subr.mxu0 0.0
        %1102 = vmatpush1.msra.mxu0 0.0
        %1103 = vmatprep.subr.mxu0 0.0
        %1104 = vmatpush1.msra.mxu0 0.0
        %1105 = vmatprep.subr.mxu0 0.0
        %1106 = vmatpush1.msra.mxu0 0.0
        %1107 = vmatprep.subr.mxu0 0.0
        %1108 = vmatpush1.msra.mxu0 0.0
        %1109 = vmatprep.subr.mxu0 0.0
        %1110 = vmatpush1.msra.mxu0 0.0
        %1111 = vmatprep.subr.mxu0 0.0
        %1112 = vmatpush1.msra.mxu0 0.0
        %1113 = vmatprep.subr.mxu0 0.0
        %1114 = vmatpush1.msra.mxu0 0.0
        %1115 = vmatprep.subr.mxu0 0.0
        %1116 = vmatpush1.msra.mxu0 0.0
        %1117 = vmatprep.subr.mxu0 0.0
        %1118 = vmatpush1.msra.mxu0 0.0
        %1119 = vmatprep.mubr.f32.mxu0 0.0
        %1120 = vmatmul.mubr.f32.gmra.mrb[0].mxu0 %v1053
        %v1121 = vpop.f32.mrb[0].mxu0
        %v1122 = vadd.f32 0.0, %v1121
        %v1123 = vpop.f32.mrb[0].mxu0
        %1124 = vdwg.mxu0
        %1126 = vrot.lane.b32.xlu0 %v1122, 16
        %v1127 = vpop.permute.xlu0 %1126
        %vm1129 = vcmask 195712
        %1130 = vst.msk [vmem:[#allocation2] sm:$0xff] %vm1129, %v1127
        %1131 = vrot.lane.b32.xlu0 %v615, 104
        %v1132 = vpop.permute.xlu0 %1131
        %1133 = vrot.lane.b32.xlu0 %v615, 72
        %v1134 = vpop.permute.xlu0 %1133
        %v1135 = vsel %vm621, %v1132, 0
        %v1137 = vsel %vm621, %v1134, 0
        %1139 = vmatprep.subr.mxu0 0.0
        %1140 = vmatpush1.xpose.msra.mxu0 %v1137
        %1141 = vmatprep.subr.mxu0 0.0
        %1142 = vmatpush1.xpose.msra.mxu0 0.0
        %1143 = vmatprep.subr.mxu0 0.0
        %1144 = vmatpush1.xpose.msra.mxu0 0.0
        %1145 = vmatprep.subr.mxu0 0.0
        %1146 = vmatpush1.xpose.msra.mxu0 0.0
        %1147 = vmatprep.subr.mxu0 0.0
        %1148 = vmatpush1.xpose.msra.mxu0 0.0
        %1149 = vmatprep.subr.mxu0 0.0
        %1150 = vmatpush1.xpose.msra.mxu0 0.0
        %1151 = vmatprep.subr.mxu0 0.0
        %1152 = vmatpush1.xpose.msra.mxu0 0.0
        %1153 = vmatprep.subr.mxu0 0.0
        %1154 = vmatpush1.xpose.msra.mxu0 0.0
        %1155 = vmatprep.subr.mxu0 0.0
        %1156 = vmatpush1.xpose.msra.mxu0 0.0
        %1157 = vmatprep.subr.mxu0 0.0
        %1158 = vmatpush1.xpose.msra.mxu0 0.0
        %1159 = vmatprep.subr.mxu0 0.0
        %1160 = vmatpush1.xpose.msra.mxu0 0.0
        %1161 = vmatprep.subr.mxu0 0.0
        %1162 = vmatpush1.xpose.msra.mxu0 0.0
        %1163 = vmatprep.subr.mxu0 0.0
        %1164 = vmatpush1.xpose.msra.mxu0 0.0
        %1165 = vmatprep.subr.mxu0 0.0
        %1166 = vmatpush1.xpose.msra.mxu0 0.0
        %1167 = vmatprep.subr.mxu0 0.0
        %1168 = vmatpush1.xpose.msra.mxu0 0.0
        %1169 = vmatprep.subr.mxu0 0.0
        %1170 = vmatpush1.xpose.msra.mxu0 0.0
        %1171 = vmatprep.subr.mxu0 0.0
        %1172 = vmatpush1.xpose.msra.mxu0 0.0
        %1173 = vmatprep.subr.mxu0 0.0
        %1174 = vmatpush1.xpose.msra.mxu0 0.0
        %1175 = vmatprep.subr.mxu0 0.0
        %1176 = vmatpush1.xpose.msra.mxu0 0.0
        %1177 = vmatprep.subr.mxu0 0.0
        %1178 = vmatpush1.xpose.msra.mxu0 0.0
        %1179 = vmatprep.subr.mxu0 0.0
        %1180 = vmatpush1.xpose.msra.mxu0 0.0
        %1181 = vmatprep.subr.mxu0 0.0
        %1182 = vmatpush1.xpose.msra.mxu0 0.0
        %1183 = vmatprep.subr.mxu0 0.0
        %1184 = vmatpush1.xpose.msra.mxu0 0.0
        %1185 = vmatprep.subr.mxu0 0.0
        %1186 = vmatpush1.xpose.msra.mxu0 0.0
        %1187 = vmatprep.subr.mxu0 0.0
        %1188 = vmatpush1.xpose.msra.mxu0 0.0
        %1189 = vmatprep.subr.mxu0 0.0
        %1190 = vmatpush1.xpose.msra.mxu0 0.0
        %1191 = vmatprep.subr.mxu0 0.0
        %1192 = vmatpush1.xpose.msra.mxu0 0.0
        %1193 = vmatprep.subr.mxu0 0.0
        %1194 = vmatpush1.xpose.msra.mxu0 0.0
        %1195 = vmatprep.subr.mxu0 0.0
        %1196 = vmatpush1.xpose.msra.mxu0 0.0
        %1197 = vmatprep.subr.mxu0 0.0
        %1198 = vmatpush1.xpose.msra.mxu0 0.0
        %1199 = vmatprep.subr.mxu0 0.0
        %1200 = vmatpush1.xpose.msra.mxu0 0.0
        %1201 = vmatprep.subr.mxu0 0.0
        %1202 = vmatpush1.xpose.msra.mxu0 0.0
        %1203 = vmatprep.mubr.f32.mxu0 0.0
        %1204 = vmatmul.mubr.f32.gmra.mrb[0].mxu0 %v1135
        %v1205 = vpop.f32.mrb[0].mxu0
        %v1206 = vadd.f32 0.0, %v1205
        %v1207 = vpop.f32.mrb[0].mxu0
        %1208 = vdwg.mxu0
        %v1209 = vsel %vm621, %v1206, -inf
        %1210 = vmax.xlane.f32.xlu0 %v1209
        %v1211 = vpop.xlane.xlu0 %1210
        %v1212 = vsub.f32 %v1206, %v1211
        %v1213 = vmul.f32 %v1212, 1.442695
        %v1214 = vpow.pop %v1213
        %v1215 = vsel %vm621, %v1214, 0.0
        %1216 = vadd.xlane.f32.xlu0 %v1215
        %v1217 = vpop.xlane.xlu0 %1216
        %v1218 = vrcp.pop %v1217
        %v1219 = vmul.f32 %v1214, %v1218
        %s1220 = scalar_lea.vmem %s531, 24 [#allocation12]
        %1221 = vst.msk [vmem:[%s1220] sm:$0xff] %vm621, %v1219
        %1222 = vrot.lane.b32.xlu0 %v615, 40
        %v1223 = vpop.permute.xlu0 %1222
        %v1226 = vsel %vm621, %v1219, 0
        %1228 = vmatprep.subr.mxu0 0.0
        %1229 = vmatpush1.msra.mxu0 %v1223
        %1230 = vmatprep.subr.mxu0 0.0
        %1231 = vmatpush1.msra.mxu0 0.0
        %1232 = vmatprep.subr.mxu0 0.0
        %1233 = vmatpush1.msra.mxu0 0.0
        %1234 = vmatprep.subr.mxu0 0.0
        %1235 = vmatpush1.msra.mxu0 0.0
        %1236 = vmatprep.subr.mxu0 0.0
        %1237 = vmatpush1.msra.mxu0 0.0
        %1238 = vmatprep.subr.mxu0 0.0
        %1239 = vmatpush1.msra.mxu0 0.0
        %1240 = vmatprep.subr.mxu0 0.0
        %1241 = vmatpush1.msra.mxu0 0.0
        %1242 = vmatprep.subr.mxu0 0.0
        %1243 = vmatpush1.msra.mxu0 0.0
        %1244 = vmatprep.subr.mxu0 0.0
        %1245 = vmatpush1.msra.mxu0 0.0
        %1246 = vmatprep.subr.mxu0 0.0
        %1247 = vmatpush1.msra.mxu0 0.0
        %1248 = vmatprep.subr.mxu0 0.0
        %1249 = vmatpush1.msra.mxu0 0.0
        %1250 = vmatprep.subr.mxu0 0.0
        %1251 = vmatpush1.msra.mxu0 0.0
        %1252 = vmatprep.subr.mxu0 0.0
        %1253 = vmatpush1.msra.mxu0 0.0
        %1254 = vmatprep.subr.mxu0 0.0
        %1255 = vmatpush1.msra.mxu0 0.0
        %1256 = vmatprep.subr.mxu0 0.0
        %1257 = vmatpush1.msra.mxu0 0.0
        %1258 = vmatprep.subr.mxu0 0.0
        %1259 = vmatpush1.msra.mxu0 0.0
        %1260 = vmatprep.subr.mxu0 0.0
        %1261 = vmatpush1.msra.mxu0 0.0
        %1262 = vmatprep.subr.mxu0 0.0
        %1263 = vmatpush1.msra.mxu0 0.0
        %1264 = vmatprep.subr.mxu0 0.0
        %1265 = vmatpush1.msra.mxu0 0.0
        %1266 = vmatprep.subr.mxu0 0.0
        %1267 = vmatpush1.msra.mxu0 0.0
        %1268 = vmatprep.subr.mxu0 0.0
        %1269 = vmatpush1.msra.mxu0 0.0
        %1270 = vmatprep.subr.mxu0 0.0
        %1271 = vmatpush1.msra.mxu0 0.0
        %1272 = vmatprep.subr.mxu0 0.0
        %1273 = vmatpush1.msra.mxu0 0.0
        %1274 = vmatprep.subr.mxu0 0.0
        %1275 = vmatpush1.msra.mxu0 0.0
        %1276 = vmatprep.subr.mxu0 0.0
        %1277 = vmatpush1.msra.mxu0 0.0
        %1278 = vmatprep.subr.mxu0 0.0
        %1279 = vmatpush1.msra.mxu0 0.0
        %1280 = vmatprep.subr.mxu0 0.0
        %1281 = vmatpush1.msra.mxu0 0.0
        %1282 = vmatprep.subr.mxu0 0.0
        %1283 = vmatpush1.msra.mxu0 0.0
        %1284 = vmatprep.subr.mxu0 0.0
        %1285 = vmatpush1.msra.mxu0 0.0
        %1286 = vmatprep.subr.mxu0 0.0
        %1287 = vmatpush1.msra.mxu0 0.0
        %1288 = vmatprep.subr.mxu0 0.0
        %1289 = vmatpush1.msra.mxu0 0.0
        %1290 = vmatprep.subr.mxu0 0.0
        %1291 = vmatpush1.msra.mxu0 0.0
        %1292 = vmatprep.mubr.f32.mxu0 0.0
        %1293 = vmatmul.mubr.f32.gmra.mrb[0].mxu0 %v1226
        %v1294 = vpop.f32.mrb[0].mxu0
        %v1295 = vadd.f32 0.0, %v1294
        %v1296 = vpop.f32.mrb[0].mxu0
        %1297 = vdwg.mxu0
        %1299 = vrot.lane.b32.xlu0 %v1295, 24
        %v1300 = vpop.permute.xlu0 %1299
        %vm1302 = vcmask 261312
        %1303 = vst.msk [vmem:[#allocation2] sm:$0xff] %vm1302, %v1300
        %v1304 = vld [vmem:[#allocation2] sm:$0xff]
        %v1305 = vld [vmem:[%s3] sm:$0xff]
        %v1306 = vld [vmem:[%s3 + $0x8] sm:$0xff]
        %v1307 = vld [vmem:[%s3 + $0x10] sm:$0xff]
        %v1308 = vld [vmem:[%s3 + $0x18] sm:$0xff]
        %v1309 = vld [vmem:[%s4] sm:$0x1]
        %v1311 = vlaneseq
        %v1312 = vshrl.u32 %v1311, 7
        %v1313 = vsub.s32 0, %v1312
        %v1314 = vrot.slane %v1309, %v1313
        %v1317 = vsel %vm544, %v1304, 0
        %1319 = vmatprep.subr.mxu0 0.0
        %1320 = vmatpush1.msra.mxu0 %v1305
        %1321 = vmatprep.subr.mxu0 0.0
        %1322 = vmatpush1.msra.mxu0 %v1306
        %1323 = vmatprep.subr.mxu0 0.0
        %1324 = vmatpush1.msra.mxu0 %v1307
        %1325 = vmatprep.subr.mxu0 0.0
        %1326 = vmatpush1.msra.mxu0 %v1308
        %1327 = vmatprep.subr.mxu0 0.0
        %1328 = vmatpush1.msra.mxu0 0.0
        %1329 = vmatprep.subr.mxu0 0.0
        %1330 = vmatpush1.msra.mxu0 0.0
        %1331 = vmatprep.subr.mxu0 0.0
        %1332 = vmatpush1.msra.mxu0 0.0
        %1333 = vmatprep.subr.mxu0 0.0
        %1334 = vmatpush1.msra.mxu0 0.0
        %1335 = vmatprep.subr.mxu0 0.0
        %1336 = vmatpush1.msra.mxu0 0.0
        %1337 = vmatprep.subr.mxu0 0.0
        %1338 = vmatpush1.msra.mxu0 0.0
        %1339 = vmatprep.subr.mxu0 0.0
        %1340 = vmatpush1.msra.mxu0 0.0
        %1341 = vmatprep.subr.mxu0 0.0
        %1342 = vmatpush1.msra.mxu0 0.0
        %1343 = vmatprep.subr.mxu0 0.0
        %1344 = vmatpush1.msra.mxu0 0.0
        %1345 = vmatprep.subr.mxu0 0.0
        %1346 = vmatpush1.msra.mxu0 0.0
        %1347 = vmatprep.subr.mxu0 0.0
        %1348 = vmatpush1.msra.mxu0 0.0
        %1349 = vmatprep.subr.mxu0 0.0
        %1350 = vmatpush1.msra.mxu0 0.0
        %1351 = vmatprep.subr.mxu0 0.0
        %1352 = vmatpush1.msra.mxu0 0.0
        %1353 = vmatprep.subr.mxu0 0.0
        %1354 = vmatpush1.msra.mxu0 0.0
        %1355 = vmatprep.subr.mxu0 0.0
        %1356 = vmatpush1.msra.mxu0 0.0
        %1357 = vmatprep.subr.mxu0 0.0
        %1358 = vmatpush1.msra.mxu0 0.0
        %1359 = vmatprep.subr.mxu0 0.0
        %1360 = vmatpush1.msra.mxu0 0.0
        %1361 = vmatprep.subr.mxu0 0.0
        %1362 = vmatpush1.msra.mxu0 0.0
        %1363 = vmatprep.subr.mxu0 0.0
        %1364 = vmatpush1.msra.mxu0 0.0
        %1365 = vmatprep.subr.mxu0 0.0
        %1366 = vmatpush1.msra.mxu0 0.0
        %1367 = vmatprep.subr.mxu0 0.0
        %1368 = vmatpush1.msra.mxu0 0.0
        %1369 = vmatprep.subr.mxu0 0.0
        %1370 = vmatpush1.msra.mxu0 0.0
        %1371 = vmatprep.subr.mxu0 0.0
        %1372 = vmatpush1.msra.mxu0 0.0
        %1373 = vmatprep.subr.mxu0 0.0
        %1374 = vmatpush1.msra.mxu0 0.0
        %1375 = vmatprep.subr.mxu0 0.0
        %1376 = vmatpush1.msra.mxu0 0.0
        %1377 = vmatprep.subr.mxu0 0.0
        %1378 = vmatpush1.msra.mxu0 0.0
        %1379 = vmatprep.subr.mxu0 0.0
        %1380 = vmatpush1.msra.mxu0 0.0
        %1381 = vmatprep.subr.mxu0 0.0
        %1382 = vmatpush1.msra.mxu0 0.0
        %1383 = vmatprep.mubr.f32.mxu0 0.0
        %1384 = vmatmul.mubr.f32.gmra.mrb[0].mxu0 %v1317
        %v1385 = vpop.f32.mrb[0].mxu0
        %v1386 = vadd.f32 %v1314, %v1385
        %v1387 = vpop.f32.mrb[0].mxu0
        %1388 = vdwg.mxu0
        %v1389 = vadd.f32 %v1386, %v532
        %v1390 = vld [vmem:[#allocation6] sm:$0x1]
        %v1391 = vld [vmem:[#allocation8] sm:$0x1]
        %v1392 = vsel %vm544, %v1389, 0.0
        %1393 = vadd.xlane.f32.xlu0 %v1392
        %v1394 = vpop.xlane.xlu0 %1393
        %v1395 = vrcp.pop 32.0
        %v1396 = vmul.f32 %v1394, %v1395
        %v1397 = vsub.f32 %v1389, %v1396
        %v1398 = vmul.f32 %v1397, %v1397
        %v1399 = vsel %vm544, %v1398, 0.0
        %1400 = vadd.xlane.f32.xlu0 %v1399
        %v1401 = vpop.xlane.xlu0 %1400
        %v1402 = vmul.f32 %v1401, %v1395
        %v1403 = vadd.f32 %v1402, 1e-05
        %v1404 = vrsqrt.pop %v1403
        %v1405 = vmul.f32 %v1397, %v1404
        %v1407 = vlaneseq
        %v1408 = vshrl.u32 %v1407, 7
        %v1409 = vsub.s32 0, %v1408
        %v1410 = vrot.slane %v1390, %v1409
        %v1412 = vmul.f32 %v1405, %v1410
        %v1414 = vlaneseq
        %v1415 = vshrl.u32 %v1414, 7
        %v1416 = vsub.s32 0, %v1415
        %v1417 = vrot.slane %v1391, %v1416
        %v1419 = vadd.f32 %v1412, %v1417
        %v1420 = vld [vmem:[%s7] sm:$0xff]
        %v1421 = vld [vmem:[%s7 + $0x8] sm:$0xff]
        %v1422 = vld [vmem:[%s7 + $0x10] sm:$0xff]
        %v1423 = vld [vmem:[%s7 + $0x18] sm:$0xff]
        %v1424 = vld [vmem:[#allocation9] sm:$0x1]
        %v1426 = vlaneseq
        %v1427 = vshrl.u32 %v1426, 7
        %v1428 = vsub.s32 0, %v1427
        %v1429 = vrot.slane %v1424, %v1428
        %v1432 = vsel %vm544, %v1419, 0
        %1434 = vmatprep.subr.mxu0 0.0
        %1435 = vmatpush1.msra.mxu0 %v1420
        %1436 = vmatprep.subr.mxu0 0.0
        %1437 = vmatpush1.msra.mxu0 %v1421
        %1438 = vmatprep.subr.mxu0 0.0
        %1439 = vmatpush1.msra.mxu0 %v1422
        %1440 = vmatprep.subr.mxu0 0.0
        %1441 = vmatpush1.msra.mxu0 %v1423
        %1442 = vmatprep.subr.mxu0 0.0
        %1443 = vmatpush1.msra.mxu0 0.0
        %1444 = vmatprep.subr.mxu0 0.0
        %1445 = vmatpush1.msra.mxu0 0.0
        %1446 = vmatprep.subr.mxu0 0.0
        %1447 = vmatpush1.msra.mxu0 0.0
        %1448 = vmatprep.subr.mxu0 0.0
        %1449 = vmatpush1.msra.mxu0 0.0
        %1450 = vmatprep.subr.mxu0 0.0
        %1451 = vmatpush1.msra.mxu0 0.0
        %1452 = vmatprep.subr.mxu0 0.0
        %1453 = vmatpush1.msra.mxu0 0.0
        %1454 = vmatprep.subr.mxu0 0.0
        %1455 = vmatpush1.msra.mxu0 0.0
        %1456 = vmatprep.subr.mxu0 0.0
        %1457 = vmatpush1.msra.mxu0 0.0
        %1458 = vmatprep.subr.mxu0 0.0
        %1459 = vmatpush1.msra.mxu0 0.0
        %1460 = vmatprep.subr.mxu0 0.0
        %1461 = vmatpush1.msra.mxu0 0.0
        %1462 = vmatprep.subr.mxu0 0.0
        %1463 = vmatpush1.msra.mxu0 0.0
        %1464 = vmatprep.subr.mxu0 0.0
        %1465 = vmatpush1.msra.mxu0 0.0
        %1466 = vmatprep.subr.mxu0 0.0
        %1467 = vmatpush1.msra.mxu0 0.0
        %1468 = vmatprep.subr.mxu0 0.0
        %1469 = vmatpush1.msra.mxu0 0.0
        %1470 = vmatprep.subr.mxu0 0.0
        %1471 = vmatpush1.msra.mxu0 0.0
        %1472 = vmatprep.subr.mxu0 0.0
        %1473 = vmatpush1.msra.mxu0 0.0
        %1474 = vmatprep.subr.mxu0 0.0
        %1475 = vmatpush1.msra.mxu0 0.0
        %1476 = vmatprep.subr.mxu0 0.0
        %1477 = vmatpush1.msra.mxu0 0.0
        %1478 = vmatprep.subr.mxu0 0.0
        %1479 = vmatpush1.msra.mxu0 0.0
        %1480 = vmatprep.subr.mxu0 0.0
        %1481 = vmatpush1.msra.mxu0 0.0
        %1482 = vmatprep.subr.mxu0 0.0
        %1483 = vmatpush1.msra.mxu0 0.0
        %1484 = vmatprep.subr.mxu0 0.0
        %1485 = vmatpush1.msra.mxu0 0.0
        %1486 = vmatprep.subr.mxu0 0.0
        %1487 = vmatpush1.msra.mxu0 0.0
        %1488 = vmatprep.subr.mxu0 0.0
        %1489 = vmatpush1.msra.mxu0 0.0
        %1490 = vmatprep.subr.mxu0 0.0
        %1491 = vmatpush1.msra.mxu0 0.0
        %1492 = vmatprep.subr.mxu0 0.0
        %1493 = vmatpush1.msra.mxu0 0.0
        %1494 = vmatprep.subr.mxu0 0.0
        %1495 = vmatpush1.msra.mxu0 0.0
        %1496 = vmatprep.subr.mxu0 0.0
        %1497 = vmatpush1.msra.mxu0 0.0
        %1498 = vmatprep.mubr.f32.mxu0 0.0
        %1499 = vmatmul.mubr.f32.gmra.mrb[0].mxu0 %v1432
        %v1500 = vpop.f32.mrb[0].mxu0
        %v1501 = vadd.f32 %v1429, %v1500
        %v1502 = vpop.f32.mrb[0].mxu0
        %1503 = vdwg.mxu0
        %v1504 = vmax.f32 %v1501, 0.0
        %v1505 = vld [vmem:[%s9] sm:$0xff]
        %v1506 = vld [vmem:[%s9 + $0x8] sm:$0xff]
        %v1507 = vld [vmem:[%s9 + $0x10] sm:$0xff]
        %v1508 = vld [vmem:[%s9 + $0x18] sm:$0xff]
        %v1509 = vld [vmem:[%s9 + $0x20] sm:$0xff]
        %v1510 = vld [vmem:[%s9 + $0x28] sm:$0xff]
        %v1511 = vld [vmem:[%s9 + $0x30] sm:$0xff]
        %v1512 = vld [vmem:[%s9 + $0x38] sm:$0xff]
        %v1513 = vld [vmem:[%s10] sm:$0x1]
        %v1515 = vlaneseq
        %v1516 = vshrl.u32 %v1515, 7
        %v1517 = vsub.s32 0, %v1516
        %v1518 = vrot.slane %v1513, %v1517
        %vm1520 = vcmask 523264
        %v1522 = vsel %vm1520, %v1504, 0
        %1524 = vmatprep.subr.mxu0 0.0
        %1525 = vmatpush1.msra.mxu0 %v1505
        %1526 = vmatprep.subr.mxu0 0.0
        %1527 = vmatpush1.msra.mxu0 %v1506
        %1528 = vmatprep.subr.mxu0 0.0
        %1529 = vmatpush1.msra.mxu0 %v1507
        %1530 = vmatprep.subr.mxu0 0.0
        %1531 = vmatpush1.msra.mxu0 %v1508
        %1532 = vmatprep.subr.mxu0 0.0
        %1533 = vmatpush1.msra.mxu0 %v1509
        %1534 = vmatprep.subr.mxu0 0.0
        %1535 = vmatpush1.msra.mxu0 %v1510
        %1536 = vmatprep.subr.mxu0 0.0
        %1537 = vmatpush1.msra.mxu0 %v1511
        %1538 = vmatprep.subr.mxu0 0.0
        %1539 = vmatpush1.msra.mxu0 %v1512
        %1540 = vmatprep.subr.mxu0 0.0
        %1541 = vmatpush1.msra.mxu0 0.0
        %1542 = vmatprep.subr.mxu0 0.0
        %1543 = vmatpush1.msra.mxu0 0.0
        %1544 = vmatprep.subr.mxu0 0.0
        %1545 = vmatpush1.msra.mxu0 0.0
        %1546 = vmatprep.subr.mxu0 0.0
        %1547 = vmatpush1.msra.mxu0 0.0
        %1548 = vmatprep.subr.mxu0 0.0
        %1549 = vmatpush1.msra.mxu0 0.0
        %1550 = vmatprep.subr.mxu0 0.0
        %1551 = vmatpush1.msra.mxu0 0.0
        %1552 = vmatprep.subr.mxu0 0.0
        %1553 = vmatpush1.msra.mxu0 0.0
        %1554 = vmatprep.subr.mxu0 0.0
        %1555 = vmatpush1.msra.mxu0 0.0
        %1556 = vmatprep.subr.mxu0 0.0
        %1557 = vmatpush1.msra.mxu0 0.0
        %1558 = vmatprep.subr.mxu0 0.0
        %1559 = vmatpush1.msra.mxu0 0.0
        %1560 = vmatprep.subr.mxu0 0.0
        %1561 = vmatpush1.msra.mxu0 0.0
        %1562 = vmatprep.subr.mxu0 0.0
        %1563 = vmatpush1.msra.mxu0 0.0
        %1564 = vmatprep.subr.mxu0 0.0
        %1565 = vmatpush1.msra.mxu0 0.0
        %1566 = vmatprep.subr.mxu0 0.0
        %1567 = vmatpush1.msra.mxu0 0.0
        %1568 = vmatprep.subr.mxu0 0.0
        %1569 = vmatpush1.msra.mxu0 0.0
        %1570 = vmatprep.subr.mxu0 0.0
        %1571 = vmatpush1.msra.mxu0 0.0
        %1572 = vmatprep.subr.mxu0 0.0
        %1573 = vmatpush1.msra.mxu0 0.0
        %1574 = vmatprep.subr.mxu0 0.0
        %1575 = vmatpush1.msra.mxu0 0.0
        %1576 = vmatprep.subr.mxu0 0.0
        %1577 = vmatpush1.msra.mxu0 0.0
        %1578 = vmatprep.subr.mxu0 0.0
        %1579 = vmatpush1.msra.mxu0 0.0
        %1580 = vmatprep.subr.mxu0 0.0
        %1581 = vmatpush1.msra.mxu0 0.0
        %1582 = vmatprep.subr.mxu0 0.0
        %1583 = vmatpush1.msra.mxu0 0.0
        %1584 = vmatprep.subr.mxu0 0.0
        %1585 = vmatpush1.msra.mxu0 0.0
        %1586 = vmatprep.subr.mxu0 0.0
        %1587 = vmatpush1.msra.mxu0 0.0
        %1588 = vmatprep.mubr.f32.mxu0 0.0
        %1589 = vmatmul.mubr.f32.gmra.mrb[0].mxu0 %v1522
        %v1590 = vpop.f32.mrb[0].mxu0
        %v1591 = vadd.f32 %v1518, %v1590
        %v1592 = vpop.f32.mrb[0].mxu0
        %1593 = vdwg.mxu0
        %v1594 = vadd.f32 %v1591, %v1419
        %v1595 = vld [vmem:[%s11] sm:$0x1]
        %v1596 = vld [vmem:[%s12] sm:$0x1]
        %v1597 = vsel %vm544, %v1594, 0.0
        %1598 = vadd.xlane.f32.xlu0 %v1597
        %v1599 = vpop.xlane.xlu0 %1598
        %v1600 = vmul.f32 %v1599, %v1395
        %v1601 = vsub.f32 %v1594, %v1600
        %v1602 = vmul.f32 %v1601, %v1601
        %v1603 = vsel %vm544, %v1602, 0.0
        %1604 = vadd.xlane.f32.xlu0 %v1603
        %v1605 = vpop.xlane.xlu0 %1604
        %v1606 = vmul.f32 %v1605, %v1395
        %v1607 = vadd.f32 %v1606, 1e-05
        %v1608 = vrsqrt.pop %v1607
        %v1609 = vmul.f32 %v1601, %v1608
        %v1611 = vlaneseq
        %v1612 = vshrl.u32 %v1611, 7
        %v1613 = vsub.s32 0, %v1612
        %v1614 = vrot.slane %v1595, %v1613
        %v1616 = vmul.f32 %v1609, %v1614
        %v1618 = vlaneseq
        %v1619 = vshrl.u32 %v1618, 7
        %v1620 = vsub.s32 0, %v1619
        %v1621 = vrot.slane %v1596, %v1620
        %v1623 = vadd.f32 %v1616, %v1621
        %1624 = vst.msk [vmem:[%s524] sm:$0xff] %vm544, %v1623
        %s1625 = sand.u32 %s323, 1
        %s1626 = scalar_lea.sflag [#allocation5], %s1625
        %s1627 = sand.u32 %s323, 1
        %s1628 = smul.addr %s1627, 8
        %s1629 = scalar_lea.vmem [#allocation11], %s1628
        %s1630 = sand.u32 %s349, 1
        %s1631 = scalar_lea.sflag [#allocation13], %s1630
        %s1632 = sand.u32 %s349, 1
        %s1633 = smul.addr %s1632, 32
        %s1634 = scalar_lea.vmem [#allocation12], %s1633
        // Predicated region
        $region89: #{tpu_custom_call.1} parent=71 // pred_check
          %p1635 = pneg %p333
        $region90: #{tpu_custom_call.1} parent=71 // pred_check_branch
          %1637 = sbr.rel (%p1635) target = $region92
        $region91: #{tpu_custom_call.1} parent=71 // pred_region
          %s1639 = ssub.s32 128, 128
          %1640 = vsyncadd %s1626, %s1639
          %s1641 = smul.addr %s37, 128
          %s1642 = scalar_lea.hbm %s13, %s1641
          %s1644 = sshll.u32 %s1629, 4
          %s1645 = int_to_ptr.vmem [resolvable:$true] %s1644
          %1647 = dma.vmem_to_hbm [thread:$0]  %s1645, 128, %s1642, %s1626
        $region92: #{tpu_custom_call.1} parent=71 // pred_fallthru
          _
        // Predicated region
        $region93: #{tpu_custom_call.1} parent=71 // pred_check
          %p1648 = pneg %p359
        $region94: #{tpu_custom_call.1} parent=71 // pred_check_branch
          %1650 = sbr.rel (%p1648) target = $region96
        $region95: #{tpu_custom_call.1} parent=71 // pred_region
          %s1652 = ssub.s32 512, 512
          %1653 = vsyncadd %s1631, %s1652
          %s1654 = smul.addr %s37, 128
          %s1655 = scalar_lea.hbm %s14, %s1654
          %s1656 = sshll.u32 %s1634, 4
          %s1657 = int_to_ptr.vmem [resolvable:$true] %s1656
          %1662 = dma.vmem_to_hbm [thread:$0]  %s1657, 512, %s1655, %s1631, 128, 256, 8
        $region96: #{tpu_custom_call.1} parent=71 // pred_fallthru
          _
      $region72: #{tpu_custom_call.1} parent=5 // pred_fallthru
        _
      %p1663 = scmp.le.s32.totalorder 2, %s32
      // Predicated region
      $region97: #{tpu_custom_call.1} parent=5 // pred_check
        %p1664 = pneg %p1663
      $region98: #{tpu_custom_call.1} parent=5 // pred_check_branch
        %1666 = sbr.rel (%p1664) target = $region100
      $region99: #{tpu_custom_call.1} parent=5 // pred_region
        %s1667 = ssub.s32 %s32, 2
        // Predicated region
        $region101: #{tpu_custom_call.1} parent=99 // pred_check
          %p1668 = pneg %p339
        $region102: #{tpu_custom_call.1} parent=99 // pred_check_branch
          %1670 = sbr.rel (%p1668) target = $region104
        $region103: #{tpu_custom_call.1} parent=99 // pred_region
          %s1671 = sand.u32 %s324, 1
          %s1672 = scalar_lea.sflag [#allocation5], %s1671
          %s1673 = sand.u32 %s324, 1
          %s1674 = smul.addr %s1673, 8
          %s1675 = scalar_lea.vmem [#allocation11], %s1674
          %1676 = dma.done %s1672, 128
        $region104: #{tpu_custom_call.1} parent=99 // pred_fallthru
          _
        // Predicated region
        $region105: #{tpu_custom_call.1} parent=99 // pred_check
          %p1677 = pneg %p365
        $region106: #{tpu_custom_call.1} parent=99 // pred_check_branch
          %1679 = sbr.rel (%p1677) target = $region108
        $region107: #{tpu_custom_call.1} parent=99 // pred_region
          %s1680 = sand.u32 %s350, 1
          %s1681 = scalar_lea.sflag [#allocation13], %s1680
          %s1682 = sand.u32 %s350, 1
          %s1683 = smul.addr %s1682, 32
          %s1684 = scalar_lea.vmem [#allocation12], %s1683
          %1685 = dma.done %s1681, 512
        $region108: #{tpu_custom_call.1} parent=99 // pred_fallthru
          _
      $region100: #{tpu_custom_call.1} parent=5 // pred_fallthru
        _
    $region6: #{tpu_custom_call.1} parent=1 // loop_footer
      %s36 = sadd.s32 1, %s32
    $region7: #{tpu_custom_call.1} parent=1 // loop_footer_branch
      %31 = sbr.rel target = $region3
    $region8: #{tpu_custom_call.1} parent=1 // loop_exit
      _
    %1686 = vsyncpa [#allocation4], 1
    %s1687 = scalar_lea.sflag [#allocation4], 1
    %1688 = vsyncpa %s1687, 1
    %1689 = vsyncpa [#allocation7], 1
    %1690 = vsyncpa [#allocation10], 1
    %1691 = vsyncpa [#allocation5], 1
    %s1692 = scalar_lea.sflag [#allocation5], 1
    %1693 = vsyncpa %s1692, 1
    %1694 = vsyncpa [#allocation13], 1
    %s1695 = scalar_lea.sflag [#allocation13], 1
    %1696 = vsyncpa %s1695, 1

// kernel: tpu_custom_call.1
$region0: #{tpu_custom_call.1}
  #allocation0 [shape = 'u32[]', space=smem, size = 0x4, offset = 0x4, fixed_abs, tag = 'smem constant byte address 0x4 - core index']
  #allocation1 [shape = 'u32[144,128]{1,0:T(1,128)}', space=vmem, size = 0x12000, scoped, tag = 'internal scratch']
  #allocation2 [shape = 'f32[8,32]{1,0:T(8,128)}', space=vmem, size = 0x1000, scoped, tag = 'scratch operand']
  %s0 = inlined_call_operand.hbm [shape: f32[2,8,32], index: 0, kind: input, shape index: {}]
  %s1 = inlined_call_operand.vmem [shape: f32[32,96], index: 1, kind: input, shape index: {}]
  %s2 = inlined_call_operand.vmem [shape: f32[1,96], index: 2, kind: input, shape index: {}]
  %s3 = inlined_call_operand.vmem [shape: f32[32,32], index: 3, kind: input, shape index: {}]
  %s4 = inlined_call_operand.vmem [shape: f32[1,32], index: 4, kind: input, shape index: {}]
  %s5 = inlined_call_operand.hbm [shape: f32[1,32], index: 5, kind: input, shape index: {}]
  %s6 = inlined_call_operand.hbm [shape: f32[1,32], index: 6, kind: input, shape index: {}]
  %s7 = inlined_call_operand.vmem [shape: f32[32,64], index: 7, kind: input, shape index: {}]
  %s8 = inlined_call_operand.hbm [shape: f32[1,64], index: 8, kind: input, shape index: {}]
  %s9 = inlined_call_operand.vmem [shape: f32[64,32], index: 9, kind: input, shape index: {}]
  %s10 = inlined_call_operand.vmem [shape: f32[1,32], index: 10, kind: input, shape index: {}]
  %s11 = inlined_call_operand.vmem [shape: f32[1,32], index: 11, kind: input, shape index: {}]
  %s12 = inlined_call_operand.vmem [shape: f32[1,32], index: 12, kind: input, shape index: {}]
  %s13 = inlined_call_operand.hbm [shape: f32[2,8,32], index: 13, kind: output, shape index: {0}]
  %s14 = inlined_call_operand.hbm [shape: f32[4,2,8,8], index: 14, kind: output, shape index: {1}]
  %15 = xla_tuple %s13, %s14
  %s16 = sld [smem:[#allocation0]]
  $region109: #{tpu_custom_call.1} parent=0
    _
  %s18 = ssub.s32 1, %s16
  %s19 = scalar_select 0, %s18, %s16
  $region1: #{tpu_custom_call.1} parent=0
    #allocation3 [shape = 'u8[8192]{0}', space=vmem, size = 0x2000, scoped, tag = 'input window, operand 0']
    #allocation4 [shape = 's32[2]{0}', space=sflag, size = 0x8, scoped, tag = 'scoped memory for tpu_custom_call.1']
    #allocation5 [shape = 's32[2]{0}', space=sflag, size = 0x8, scoped, tag = 'scoped memory for tpu_custom_call.1']
    #allocation6 [shape = 'u8[512]{0}', space=vmem, size = 0x400, scoped, tag = 'input window, operand 5, single buffered']
    #allocation7 [shape = 's32[1]{0}', space=sflag, size = 0x4, scoped, tag = 'scoped memory for tpu_custom_call.1']
    #allocation8 [shape = 'u8[512]{0}', space=vmem, size = 0x400, scoped, tag = 'input window, operand 6, single buffered']
    #allocation9 [shape = 'u8[512]{0}', space=vmem, size = 0x400, scoped, tag = 'input window, operand 8, single buffered']
    #allocation10 [shape = 's32[1]{0}', space=sflag, size = 0x4, scoped, tag = 'scoped memory for tpu_custom_call.1']
    #allocation11 [shape = 'u8[8192]{0}', space=vmem, size = 0x2000, scoped, tag = 'output window, operand 0']
    #allocation12 [shape = 'u8[32768]{0}', space=vmem, size = 0x8000, scoped, tag = 'output window, operand 1']
    #allocation13 [shape = 's32[2]{0}', space=sflag, size = 0x8, scoped, tag = 'scoped memory for tpu_custom_call.1']
    %20 = vsyncpa [#allocation4], 0
    %s21 = scalar_lea.sflag [#allocation4], 1
    %22 = vsyncpa %s21, 0
    %23 = vsyncpa [#allocation7], 0
    %24 = vsyncpa [#allocation10], 0
    %25 = vsyncpa [#allocation5], 0
    %s26 = scalar_lea.sflag [#allocation5], 1
    %27 = vsyncpa %s26, 0
    %28 = vsyncpa [#allocation13], 0
    %s29 = scalar_lea.sflag [#allocation13], 1
    %30 = vsyncpa %s29, 0
    loop: start=0, step=1, limit=4
    $region2: #{tpu_custom_call.1} parent=1 // loop_pre_header
      _
    $region3: #{tpu_custom_call.1} parent=1 // loop_header
      %s32 = sphi 0, %s36
      %p33 = scmp.ge.s32.totalorder %s32, 4
      %s42 = sphi 0, %s44
      %s45 = sphi 0, %s42
      %s46 = sphi 0, %s45
      %s62 = sphi 0, %s46
      %s66 = sphi 0, %s66
      %s68 = sphi 0, %s66
      %s69 = sphi 0, %s68
      %s83 = sphi 0, %s69
      %s87 = sphi 0, %s87
      %s89 = sphi 0, %s87
      %s90 = sphi 0, %s89
      %s104 = sphi 0, %s90
      %s108 = sphi 0, %s108
      %s110 = sphi 0, %s108
      %s111 = sphi 0, %s110
      %s125 = sphi 0, %s111
      %s129 = sphi 0, %s129
      %s131 = sphi 0, %s129
      %s132 = sphi 0, %s131
      %s146 = sphi 0, %s132
      %s150 = sphi 0, %s150
      %s152 = sphi 0, %s150
      %s153 = sphi 0, %s152
      %s167 = sphi 0, %s153
      %s171 = sphi 0, %s171
      %s173 = sphi 0, %s171
      %s174 = sphi 0, %s173
      %s188 = sphi 0, %s174
      %s192 = sphi 0, %s192
      %s194 = sphi 0, %s192
      %s195 = sphi 0, %s194
      %s209 = sphi 0, %s195
      %s213 = sphi 0, %s213
      %s215 = sphi 0, %s213
      %s216 = sphi 0, %s215
      %s230 = sphi 0, %s216
      %s234 = sphi 0, %s234
      %s236 = sphi 0, %s234
      %s237 = sphi 0, %s236
      %s251 = sphi 0, %s237
      %s255 = sphi 0, %s255
      %s257 = sphi 0, %s255
      %s258 = sphi 0, %s257
      %s272 = sphi 0, %s258
      %s276 = sphi 0, %s276
      %s278 = sphi 0, %s276
      %s279 = sphi 0, %s278
      %s293 = sphi 0, %s279
      %s297 = sphi 0, %s297
      %s299 = sphi 0, %s297
      %s300 = sphi 0, %s299
      %s314 = sphi 0, %s300
      %s320 = sphi 0, %s322
      %s323 = sphi 0, %s320
      %s324 = sphi 0, %s323
      %s340 = sphi 0, %s324
      %s346 = sphi 0, %s348
      %s349 = sphi 0, %s346
      %s350 = sphi 0, %s349
      %s366 = sphi 0, %s350
    $region4: #{tpu_custom_call.1} parent=1 // loop_header_branch
      %35 = sbr.rel (%p33) target = $region8
    $region5: #{tpu_custom_call.1} parent=1 // loop_body
      %s37 = ssub.s32 %s32, 1
      %s38 = ssub.s32 %s32, 2
      %s39 = sadd.s32 %s32, 1
      %s40 = ssub.s32 %s32, %s39
      %p41 = scmp.eq.s32.totalorder %s40, 0
      %s43 = sadd.s32 %s42, 1
      %s44 = scalar_select %p41, %s42, %s43
      %p47 = pneg %p41
      %p48 = scmp.eq.s32.totalorder %s32, 1
      %p49 = por %p47, %p48
      %p50 = scmp.ne.s32.totalorder %s42, %s45
      %p51 = scmp.eq.s32.totalorder %s32, 0
      %p52 = por %p50, %p51
      %p53 = scmp.ne.s32.totalorder %s42, %s45
      %p54 = scmp.eq.s32.totalorder %s37, 1
      %p55 = por %p53, %p54
      %p56 = scmp.ne.s32.totalorder %s45, %s46
      %p57 = scmp.eq.s32.totalorder %s37, 0
      %p58 = por %p56, %p57
      %p59 = scmp.ne.s32.totalorder %s45, %s46
      %p60 = scmp.eq.s32.totalorder %s38, 1
      %p61 = por %p59, %p60
      %p63 = scmp.ne.s32.totalorder %s46, %s62
      %p64 = scmp.eq.s32.totalorder %s38, 0
      %p65 = por %p63, %p64
      %s67 = sadd.s32 %s66, 1
      %p70 = scmp.eq.s32.totalorder %s32, 1
      %p71 = scmp.ne.s32.totalorder %s66, %s68
      %p72 = scmp.eq.s32.totalorder %s32, 0
      %p73 = por %p71, %p72
      %p74 = scmp.ne.s32.totalorder %s66, %s68
      %p75 = scmp.eq.s32.totalorder %s37, 1
      %p76 = por %p74, %p75
      %p77 = scmp.ne.s32.totalorder %s68, %s69
      %p78 = scmp.eq.s32.totalorder %s37, 0
      %p79 = por %p77, %p78
      %p80 = scmp.ne.s32.totalorder %s68, %s69
      %p81 = scmp.eq.s32.totalorder %s38, 1
      %p82 = por %p80, %p81
      %p84 = scmp.ne.s32.totalorder %s69, %s83
      %p85 = scmp.eq.s32.totalorder %s38, 0
      %p86 = por %p84, %p85
      %s88 = sadd.s32 %s87, 1
      %p91 = scmp.eq.s32.totalorder %s32, 1
      %p92 = scmp.ne.s32.totalorder %s87, %s89
      %p93 = scmp.eq.s32.totalorder %s32, 0
      %p94 = por %p92, %p93
      %p95 = scmp.ne.s32.totalorder %s87, %s89
      %p96 = scmp.eq.s32.totalorder %s37, 1
      %p97 = por %p95, %p96
      %p98 = scmp.ne.s32.totalorder %s89, %s90
      %p99 = scmp.eq.s32.totalorder %s37, 0
      %p100 = por %p98, %p99
      %p101 = scmp.ne.s32.totalorder %s89, %s90
      %p102 = scmp.eq.s32.totalorder %s38, 1
      %p103 = por %p101, %p102
      %p105 = scmp.ne.s32.totalorder %s90, %s104
      %p106 = scmp.eq.s32.totalorder %s38, 0
      %p107 = por %p105, %p106
      %s109 = sadd.s32 %s108, 1
      %p112 = scmp.eq.s32.totalorder %s32, 1
      %p113 = scmp.ne.s32.totalorder %s108, %s110
      %p114 = scmp.eq.s32.totalorder %s32, 0
      %p115 = por %p113, %p114
      %p116 = scmp.ne.s32.totalorder %s108, %s110
      %p117 = scmp.eq.s32.totalorder %s37, 1
      %p118 = por %p116, %p117
      %p119 = scmp.ne.s32.totalorder %s110, %s111
      %p120 = scmp.eq.s32.totalorder %s37, 0
      %p121 = por %p119, %p120
      %p122 = scmp.ne.s32.totalorder %s110, %s111
      %p123 = scmp.eq.s32.totalorder %s38, 1
      %p124 = por %p122, %p123
      %p126 = scmp.ne.s32.totalorder %s111, %s125
      %p127 = scmp.eq.s32.totalorder %s38, 0
      %p128 = por %p126, %p127
      %s130 = sadd.s32 %s129, 1
      %p133 = scmp.eq.s32.totalorder %s32, 1
      %p134 = scmp.ne.s32.totalorder %s129, %s131
      %p135 = scmp.eq.s32.totalorder %s32, 0
      %p136 = por %p134, %p135
      %p137 = scmp.ne.s32.totalorder %s129, %s131
      %p138 = scmp.eq.s32.totalorder %s37, 1
      %p139 = por %p137, %p138
      %p140 = scmp.ne.s32.totalorder %s131, %s132
      %p141 = scmp.eq.s32.totalorder %s37, 0
      %p142 = por %p140, %p141
      %p143 = scmp.ne.s32.totalorder %s131, %s132
      %p144 = scmp.eq.s32.totalorder %s38, 1
      %p145 = por %p143, %p144
      %p147 = scmp.ne.s32.totalorder %s132, %s146
      %p148 = scmp.eq.s32.totalorder %s38, 0
      %p149 = por %p147, %p148
      %s151 = sadd.s32 %s150, 1
      %p154 = scmp.eq.s32.totalorder %s32, 1
      %p155 = scmp.ne.s32.totalorder %s150, %s152
      %p156 = scmp.eq.s32.totalorder %s32, 0
      %p157 = por %p155, %p156
      %p158 = scmp.ne.s32.totalorder %s150, %s152
      %p159 = scmp.eq.s32.totalorder %s37, 1
      %p160 = por %p158, %p159
      %p161 = scmp.ne.s32.totalorder %s152, %s153
      %p162 = scmp.eq.s32.totalorder %s37, 0
      %p163 = por %p161, %p162
      %p164 = scmp.ne.s32.totalorder %s152, %s153
      %p165 = scmp.eq.s32.totalorder %s38, 1
      %p166 = por %p164, %p165
      %p168 = scmp.ne.s32.totalorder %s153, %s167
      %p169 = scmp.eq.s32.totalorder %s38, 0
      %p170 = por %p168, %p169
      %s172 = sadd.s32 %s171, 1
      %p175 = scmp.eq.s32.totalorder %s32, 1
      %p176 = scmp.ne.s32.totalorder %s171, %s173
      %p177 = scmp.eq.s32.totalorder %s32, 0
      %p178 = por %p176, %p177
      %p179 = scmp.ne.s32.totalorder %s171, %s173
      %p180 = scmp.eq.s32.totalorder %s37, 1
      %p181 = por %p179, %p180
      %p182 = scmp.ne.s32.totalorder %s173, %s174
      %p183 = scmp.eq.s32.totalorder %s37, 0
      %p184 = por %p182, %p183
      %p185 = scmp.ne.s32.totalorder %s173, %s174
      %p186 = scmp.eq.s32.totalorder %s38, 1
      %p187 = por %p185, %p186
      %p189 = scmp.ne.s32.totalorder %s174, %s188
      %p190 = scmp.eq.s32.totalorder %s38, 0
      %p191 = por %p189, %p190
      %s193 = sadd.s32 %s192, 1
      %p196 = scmp.eq.s32.totalorder %s32, 1
      %p197 = scmp.ne.s32.totalorder %s192, %s194
      %p198 = scmp.eq.s32.totalorder %s32, 0
      %p199 = por %p197, %p198
      %p200 = scmp.ne.s32.totalorder %s192, %s194
      %p201 = scmp.eq.s32.totalorder %s37, 1
      %p202 = por %p200, %p201
      %p203 = scmp.ne.s32.totalorder %s194, %s195
      %p204 = scmp.eq.s32.totalorder %s37, 0
      %p205 = por %p203, %p204
      %p206 = scmp.ne.s32.totalorder %s194, %s195
      %p207 = scmp.eq.s32.totalorder %s38, 1
      %p208 = por %p206, %p207
      %p210 = scmp.ne.s32.totalorder %s195, %s209
      %p211 = scmp.eq.s32.totalorder %s38, 0
      %p212 = por %p210, %p211
      %s214 = sadd.s32 %s213, 1
      %p217 = scmp.eq.s32.totalorder %s32, 1
      %p218 = scmp.ne.s32.totalorder %s213, %s215
      %p219 = scmp.eq.s32.totalorder %s32, 0
      %p220 = por %p218, %p219
      %p221 = scmp.ne.s32.totalorder %s213, %s215
      %p222 = scmp.eq.s32.totalorder %s37, 1
      %p223 = por %p221, %p222
      %p224 = scmp.ne.s32.totalorder %s215, %s216
      %p225 = scmp.eq.s32.totalorder %s37, 0
      %p226 = por %p224, %p225
      %p227 = scmp.ne.s32.totalorder %s215, %s216
      %p228 = scmp.eq.s32.totalorder %s38, 1
      %p229 = por %p227, %p228
      %p231 = scmp.ne.s32.totalorder %s216, %s230
      %p232 = scmp.eq.s32.totalorder %s38, 0
      %p233 = por %p231, %p232
      %s235 = sadd.s32 %s234, 1
      %p238 = scmp.eq.s32.totalorder %s32, 1
      %p239 = scmp.ne.s32.totalorder %s234, %s236
      %p240 = scmp.eq.s32.totalorder %s32, 0
      %p241 = por %p239, %p240
      %p242 = scmp.ne.s32.totalorder %s234, %s236
      %p243 = scmp.eq.s32.totalorder %s37, 1
      %p244 = por %p242, %p243
      %p245 = scmp.ne.s32.totalorder %s236, %s237
      %p246 = scmp.eq.s32.totalorder %s37, 0
      %p247 = por %p245, %p246
      %p248 = scmp.ne.s32.totalorder %s236, %s237
      %p249 = scmp.eq.s32.totalorder %s38, 1
      %p250 = por %p248, %p249
      %p252 = scmp.ne.s32.totalorder %s237, %s251
      %p253 = scmp.eq.s32.totalorder %s38, 0
      %p254 = por %p252, %p253
      %s256 = sadd.s32 %s255, 1
      %p259 = scmp.eq.s32.totalorder %s32, 1
      %p260 = scmp.ne.s32.totalorder %s255, %s257
      %p261 = scmp.eq.s32.totalorder %s32, 0
      %p262 = por %p260, %p261
      %p263 = scmp.ne.s32.totalorder %s255, %s257
      %p264 = scmp.eq.s32.totalorder %s37, 1
      %p265 = por %p263, %p264
      %p266 = scmp.ne.s32.totalorder %s257, %s258
      %p267 = scmp.eq.s32.totalorder %s37, 0
      %p268 = por %p266, %p267
      %p269 = scmp.ne.s32.totalorder %s257, %s258
      %p270 = scmp.eq.s32.totalorder %s38, 1
      %p271 = por %p269, %p270
      %p273 = scmp.ne.s32.totalorder %s258, %s272
      %p274 = scmp.eq.s32.totalorder %s38, 0
      %p275 = por %p273, %p274
      %s277 = sadd.s32 %s276, 1
      %p280 = scmp.eq.s32.totalorder %s32, 1
      %p281 = scmp.ne.s32.totalorder %s276, %s278
      %p282 = scmp.eq.s32.totalorder %s32, 0
      %p283 = por %p281, %p282
      %p284 = scmp.ne.s32.totalorder %s276, %s278
      %p285 = scmp.eq.s32.totalorder %s37, 1
      %p286 = por %p284, %p285
      %p287 = scmp.ne.s32.totalorder %s278, %s279
      %p288 = scmp.eq.s32.totalorder %s37, 0
      %p289 = por %p287, %p288
      %p290 = scmp.ne.s32.totalorder %s278, %s279
      %p291 = scmp.eq.s32.totalorder %s38, 1
      %p292 = por %p290, %p291
      %p294 = scmp.ne.s32.totalorder %s279, %s293
      %p295 = scmp.eq.s32.totalorder %s38, 0
      %p296 = por %p294, %p295
      %s298 = sadd.s32 %s297, 1
      %p301 = scmp.eq.s32.totalorder %s32, 1
      %p302 = scmp.ne.s32.totalorder %s297, %s299
      %p303 = scmp.eq.s32.totalorder %s32, 0
      %p304 = por %p302, %p303
      %p305 = scmp.ne.s32.totalorder %s297, %s299
      %p306 = scmp.eq.s32.totalorder %s37, 1
      %p307 = por %p305, %p306
      %p308 = scmp.ne.s32.totalorder %s299, %s300
      %p309 = scmp.eq.s32.totalorder %s37, 0
      %p310 = por %p308, %p309
      %p311 = scmp.ne.s32.totalorder %s299, %s300
      %p312 = scmp.eq.s32.totalorder %s38, 1
      %p313 = por %p311, %p312
      %p315 = scmp.ne.s32.totalorder %s300, %s314
      %p316 = scmp.eq.s32.totalorder %s38, 0
      %p317 = por %p315, %p316
      %s318 = ssub.s32 %s32, %s39
      %p319 = scmp.eq.s32.totalorder %s318, 0
      %s321 = sadd.s32 %s320, 1
      %s322 = scalar_select %p319, %s320, %s321
      %p325 = pneg %p319
      %p326 = scmp.eq.s32.totalorder %s32, 1
      %p327 = por %p325, %p326
      %p328 = scmp.ne.s32.totalorder %s320, %s323
      %p329 = scmp.eq.s32.totalorder %s32, 0
      %p330 = por %p328, %p329
      %p331 = scmp.ne.s32.totalorder %s320, %s323
      %p332 = scmp.eq.s32.totalorder %s37, 1
      %p333 = por %p331, %p332
      %p334 = scmp.ne.s32.totalorder %s323, %s324
      %p335 = scmp.eq.s32.totalorder %s37, 0
      %p336 = por %p334, %p335
      %p337 = scmp.ne.s32.totalorder %s323, %s324
      %p338 = scmp.eq.s32.totalorder %s38, 1
      %p339 = por %p337, %p338
      %p341 = scmp.ne.s32.totalorder %s324, %s340
      %p342 = scmp.eq.s32.totalorder %s38, 0
      %p343 = por %p341, %p342
      %s344 = ssub.s32 %s32, %s39
      %p345 = scmp.eq.s32.totalorder %s344, 0
      %s347 = sadd.s32 %s346, 1
      %s348 = scalar_select %p345, %s346, %s347
      %p351 = pneg %p345
      %p352 = scmp.eq.s32.totalorder %s32, 1
      %p353 = por %p351, %p352
      %p354 = scmp.ne.s32.totalorder %s346, %s349
      %p355 = scmp.eq.s32.totalorder %s32, 0
      %p356 = por %p354, %p355
      %p357 = scmp.ne.s32.totalorder %s346, %s349
      %p358 = scmp.eq.s32.totalorder %s37, 1
      %p359 = por %p357, %p358
      %p360 = scmp.ne.s32.totalorder %s349, %s350
      %p361 = scmp.eq.s32.totalorder %s37, 0
      %p362 = por %p360, %p361
      %p363 = scmp.ne.s32.totalorder %s349, %s350
      %p364 = scmp.eq.s32.totalorder %s38, 1
      %p365 = por %p363, %p364
      %p367 = scmp.ne.s32.totalorder %s350, %s366
      %p368 = scmp.eq.s32.totalorder %s38, 0
      %p369 = por %p367, %p368
      %p370 = scmp.le.s32.totalorder 1, %s32
      %p371 = scmp.lt.s32.totalorder %s32, 3
      %p372 = pnand %p370, %p371
      %p373 = pneg %p372
      // Predicated region
      $region9: #{tpu_custom_call.1} parent=5 // pred_check
        _
      $region10: #{tpu_custom_call.1} parent=5 // pred_check_branch
        %375 = sbr.rel (%p372) target = $region12
      $region11: #{tpu_custom_call.1} parent=5 // pred_region
        %s376 = ssub.s32 %s32, 1
        // Predicated region
        $region13: #{tpu_custom_call.1} parent=11 // pred_check
          %p377 = pneg %p79
        $region14: #{tpu_custom_call.1} parent=11 // pred_check_branch
          %379 = sbr.rel (%p377) target = $region16
        $region15: #{tpu_custom_call.1} parent=11 // pred_region
          _
        $region16: #{tpu_custom_call.1} parent=11 // pred_fallthru
          _
        // Predicated region
        $region17: #{tpu_custom_call.1} parent=11 // pred_check
          %p380 = pneg %p100
        $region18: #{tpu_custom_call.1} parent=11 // pred_check_branch
          %382 = sbr.rel (%p380) target = $region20
        $region19: #{tpu_custom_call.1} parent=11 // pred_region
          _
        $region20: #{tpu_custom_call.1} parent=11 // pred_fallthru
          _
        // Predicated region
        $region21: #{tpu_custom_call.1} parent=11 // pred_check
          %p383 = pneg %p121
        $region22: #{tpu_custom_call.1} parent=11 // pred_check_branch
          %385 = sbr.rel (%p383) target = $region24
        $region23: #{tpu_custom_call.1} parent=11 // pred_region
          _
        $region24: #{tpu_custom_call.1} parent=11 // pred_fallthru
          _
        // Predicated region
        $region25: #{tpu_custom_call.1} parent=11 // pred_check
          %p386 = pneg %p142
        $region26: #{tpu_custom_call.1} parent=11 // pred_check_branch
          %388 = sbr.rel (%p386) target = $region28
        $region27: #{tpu_custom_call.1} parent=11 // pred_region
          _
        $region28: #{tpu_custom_call.1} parent=11 // pred_fallthru
          _
        // Predicated region
        $region29: #{tpu_custom_call.1} parent=11 // pred_check
          %p389 = pneg %p163
        $region30: #{tpu_custom_call.1} parent=11 // pred_check_branch
          %391 = sbr.rel (%p389) target = $region32
        $region31: #{tpu_custom_call.1} parent=11 // pred_region
          %s393 = ssub.s32 16, 16
          %394 = vsyncadd [#allocation7], %s393
          %s396 = sshll.u32 [#allocation6], 4
          %s397 = int_to_ptr.vmem [resolvable:$true] %s396
          %399 = dma.hbm_to_vmem [thread:$0]  %s5, 16, %s397, [#allocation7]
        $region32: #{tpu_custom_call.1} parent=11 // pred_fallthru
          _
        // Predicated region
        $region33: #{tpu_custom_call.1} parent=11 // pred_check
          %p400 = pneg %p184
        $region34: #{tpu_custom_call.1} parent=11 // pred_check_branch
          %402 = sbr.rel (%p400) target = $region36
        $region35: #{tpu_custom_call.1} parent=11 // pred_region
          %s404 = ssub.s32 16, 16
          %405 = vsyncadd [#allocation7], %s404
          %s407 = sshll.u32 [#allocation8], 4
          %s408 = int_to_ptr.vmem [resolvable:$true] %s407
          %410 = dma.hbm_to_vmem [thread:$0]  %s6, 16, %s408, [#allocation7]
        $region36: #{tpu_custom_call.1} parent=11 // pred_fallthru
          _
        // Predicated region
        $region37: #{tpu_custom_call.1} parent=11 // pred_check
          %p411 = pneg %p205
        $region38: #{tpu_custom_call.1} parent=11 // pred_check_branch
          %413 = sbr.rel (%p411) target = $region40
        $region39: #{tpu_custom_call.1} parent=11 // pred_region
          _
        $region40: #{tpu_custom_call.1} parent=11 // pred_fallthru
          _
        // Predicated region
        $region41: #{tpu_custom_call.1} parent=11 // pred_check
          %p414 = pneg %p226
        $region42: #{tpu_custom_call.1} parent=11 // pred_check_branch
          %416 = sbr.rel (%p414) target = $region44
        $region43: #{tpu_custom_call.1} parent=11 // pred_region
          %s418 = ssub.s32 16, 16
          %419 = vsyncadd [#allocation10], %s418
          %s421 = sshll.u32 [#allocation9], 4
          %s422 = int_to_ptr.vmem [resolvable:$true] %s421
          %424 = dma.hbm_to_vmem [thread:$0]  %s8, 16, %s422, [#allocation10]
        $region44: #{tpu_custom_call.1} parent=11 // pred_fallthru
          _
        // Predicated region
        $region45: #{tpu_custom_call.1} parent=11 // pred_check
          %p425 = pneg %p247
        $region46: #{tpu_custom_call.1} parent=11 // pred_check_branch
          %427 = sbr.rel (%p425) target = $region48
        $region47: #{tpu_custom_call.1} parent=11 // pred_region
          _
        $region48: #{tpu_custom_call.1} parent=11 // pred_fallthru
          _
        // Predicated region
        $region49: #{tpu_custom_call.1} parent=11 // pred_check
          %p428 = pneg %p268
        $region50: #{tpu_custom_call.1} parent=11 // pred_check_branch
          %430 = sbr.rel (%p428) target = $region52
        $region51: #{tpu_custom_call.1} parent=11 // pred_region
          _
        $region52: #{tpu_custom_call.1} parent=11 // pred_fallthru
          _
        // Predicated region
        $region53: #{tpu_custom_call.1} parent=11 // pred_check
          %p431 = pneg %p289
        $region54: #{tpu_custom_call.1} parent=11 // pred_check_branch
          %433 = sbr.rel (%p431) target = $region56
        $region55: #{tpu_custom_call.1} parent=11 // pred_region
          _
        $region56: #{tpu_custom_call.1} parent=11 // pred_fallthru
          _
        // Predicated region
        $region57: #{tpu_custom_call.1} parent=11 // pred_check
          %p434 = pneg %p310
        $region58: #{tpu_custom_call.1} parent=11 // pred_check_branch
          %436 = sbr.rel (%p434) target = $region60
        $region59: #{tpu_custom_call.1} parent=11 // pred_region
          _
        $region60: #{tpu_custom_call.1} parent=11 // pred_fallthru
          _
      $region12: #{tpu_custom_call.1} parent=5 // pred_fallthru
        _
      %p437 = scmp.lt.s32.totalorder %s32, 2
      // Predicated region
      $region61: #{tpu_custom_call.1} parent=5 // pred_check
        %p438 = pneg %p437
      $region62: #{tpu_custom_call.1} parent=5 // pred_check_branch
        %440 = sbr.rel (%p438) target = $region64
      $region63: #{tpu_custom_call.1} parent=5 // pred_region
        // Predicated region
        $region65: #{tpu_custom_call.1} parent=63 // pred_check
          %p441 = pneg %p52
        $region66: #{tpu_custom_call.1} parent=63 // pred_check_branch
          %443 = sbr.rel (%p441) target = $region68
        $region67: #{tpu_custom_call.1} parent=63 // pred_region
          %s444 = sand.u32 %s42, 1
          %s445 = scalar_lea.sflag [#allocation4], %s444
          %s446 = sand.u32 %s42, 1
          %s447 = smul.addr %s446, 8
          %s448 = scalar_lea.vmem [#allocation3], %s447
          %s450 = ssub.s32 128, 128
          %451 = vsyncadd %s445, %s450
          %s452 = smul.addr %s32, 128
          %s453 = scalar_lea.hbm %s0, %s452
          %s455 = sshll.u32 %s448, 4
          %s456 = int_to_ptr.vmem [resolvable:$true] %s455
          %458 = dma.hbm_to_vmem [thread:$0]  %s453, 128, %s456, %s445
        $region68: #{tpu_custom_call.1} parent=63 // pred_fallthru
          _
      $region64: #{tpu_custom_call.1} parent=5 // pred_fallthru
        _
      %p459 = scmp.le.s32.totalorder 1, %s32
      %p460 = scmp.lt.s32.totalorder %s32, 3
      %p461 = pnand %p459, %p460
      %p462 = pneg %p461
      // Predicated region
      $region69: #{tpu_custom_call.1} parent=5 // pred_check
        _
      $region70: #{tpu_custom_call.1} parent=5 // pred_check_branch
        %464 = sbr.rel (%p461) target = $region72
      $region71: #{tpu_custom_call.1} parent=5 // pred_region
        %s465 = ssub.s32 %s32, 1
        %s466 = sand.u32 %s45, 1
        %s467 = scalar_lea.sflag [#allocation4], %s466
        %s468 = sand.u32 %s45, 1
        %s469 = smul.addr %s468, 8
        %s470 = scalar_lea.vmem [#allocation3], %s469
        // Predicated region
        $region73: #{tpu_custom_call.1} parent=71 // pred_check
          %p471 = pneg %p58
        $region74: #{tpu_custom_call.1} parent=71 // pred_check_branch
          %473 = sbr.rel (%p471) target = $region76
        $region75: #{tpu_custom_call.1} parent=71 // pred_region
          %474 = dma.done %s467, 128
        $region76: #{tpu_custom_call.1} parent=71 // pred_fallthru
          _
        // Predicated region
        $region77: #{tpu_custom_call.1} parent=71 // pred_check
          %p475 = pneg %p163
        $region78: #{tpu_custom_call.1} parent=71 // pred_check_branch
          %477 = sbr.rel (%p475) target = $region80
        $region79: #{tpu_custom_call.1} parent=71 // pred_region
          %478 = dma.done [#allocation7], 16
        $region80: #{tpu_custom_call.1} parent=71 // pred_fallthru
          _
        // Predicated region
        $region81: #{tpu_custom_call.1} parent=71 // pred_check
          %p479 = pneg %p184
        $region82: #{tpu_custom_call.1} parent=71 // pred_check_branch
          %481 = sbr.rel (%p479) target = $region84
        $region83: #{tpu_custom_call.1} parent=71 // pred_region
          %482 = dma.done [#allocation7], 16
        $region84: #{tpu_custom_call.1} parent=71 // pred_fallthru
          _
        // Predicated region
        $region85: #{tpu_custom_call.1} parent=71 // pred_check
          %p483 = pneg %p226
        $region86: #{tpu_custom_call.1} parent=71 // pred_check_branch
          %485 = sbr.rel (%p483) target = $region88
        $region87: #{tpu_custom_call.1} parent=71 // pred_region
          %486 = dma.done [#allocation10], 16
        $region88: #{tpu_custom_call.1} parent=71 // pred_fallthru
          _
        %s487 = sand.u32 %s45, 1
        %s488 = scalar_lea.sflag [#allocation4], %s487
        %s489 = sand.u32 %s45, 1
        %s490 = smul.addr %s489, 8
        %s491 = scalar_lea.vmem [#allocation3], %s490
        %p492 = pneg %p58
        %p493 = pneg %p55
        %p494 = pneg %p79
        %p495 = pneg %p76
        %p496 = pneg %p100
        %p497 = pneg %p97
        %p498 = pneg %p121
        %p499 = pneg %p118
        %p500 = pneg %p142
        %p501 = pneg %p139
        %p502 = pneg %p163
        %p503 = pneg %p160
        %p504 = pneg %p184
        %p505 = pneg %p181
        %p506 = pneg %p205
        %p507 = pneg %p202
        %p508 = pneg %p226
        %p509 = pneg %p223
        %p510 = pneg %p247
        %p511 = pneg %p244
        %p512 = pneg %p268
        %p513 = pneg %p265
        %p514 = pneg %p289
        %p515 = pneg %p286
        %p516 = pneg %p310
        %p517 = pneg %p307
        %p518 = pneg %p336
        %p519 = pneg %p333
        %s520 = sand.u32 %s323, 1
        %s521 = scalar_lea.sflag [#allocation5], %s520
        %s522 = sand.u32 %s323, 1
        %s523 = smul.addr %s522, 8
        %s524 = scalar_lea.vmem [#allocation11], %s523
        %p525 = pneg %p362
        %p526 = pneg %p359
        %s527 = sand.u32 %s349, 1
        %s528 = scalar_lea.sflag [#allocation13], %s527
        %s529 = sand.u32 %s349, 1
        %s530 = smul.addr %s529, 32
        %s531 = scalar_lea.vmem [#allocation12], %s530
        %v532 = vld [vmem:[%s470] sm:$0xff]
        %v533 = vld [vmem:[%s1] sm:$0xff]
        %v534 = vld [vmem:[%s1 + $0x8] sm:$0xff]
        %v535 = vld [vmem:[%s1 + $0x10] sm:$0xff]
        %v536 = vld [vmem:[%s1 + $0x18] sm:$0xff]
        %v537 = vld [vmem:[%s2] sm:$0x1]
        %v539 = vlaneseq
        %v540 = vshrl.u32 %v539, 7
        %v541 = vsub.s32 0, %v540
        %v542 = vrot.slane %v537, %v541
        %vm544 = vcmask 261120
        %v546 = vsel %vm544, %v532, 0
        %548 = vmatprep.subr.mxu0 0.0
        %549 = vmatpush1.msra.mxu0 %v533
        %550 = vmatprep.subr.mxu0 0.0
        %551 = vmatpush1.msra.mxu0 %v534
        %552 = vmatprep.subr.mxu0 0.0
        %553 = vmatpush1.msra.mxu0 %v535
        %554 = vmatprep.subr.mxu0 0.0
        %555 = vmatpush1.msra.mxu0 %v536
        %556 = vmatprep.subr.mxu0 0.0
        %557 = vmatpush1.msra.mxu0 0.0
        %558 = vmatprep.subr.mxu0 0.0
        %559 = vmatpush1.msra.mxu0 0.0
        %560 = vmatprep.subr.mxu0 0.0
        %561 = vmatpush1.msra.mxu0 0.0
        %562 = vmatprep.subr.mxu0 0.0
        %563 = vmatpush1.msra.mxu0 0.0
        %564 = vmatprep.subr.mxu0 0.0
        %565 = vmatpush1.msra.mxu0 0.0
        %566 = vmatprep.subr.mxu0 0.0
        %567 = vmatpush1.msra.mxu0 0.0
        %568 = vmatprep.subr.mxu0 0.0
        %569 = vmatpush1.msra.mxu0 0.0
        %570 = vmatprep.subr.mxu0 0.0
        %571 = vmatpush1.msra.mxu0 0.0
        %572 = vmatprep.subr.mxu0 0.0
        %573 = vmatpush1.msra.mxu0 0.0
        %574 = vmatprep.subr.mxu0 0.0
        %575 = vmatpush1.msra.mxu0 0.0
        %576 = vmatprep.subr.mxu0 0.0
        %577 = vmatpush1.msra.mxu0 0.0
        %578 = vmatprep.subr.mxu0 0.0
        %579 = vmatpush1.msra.mxu0 0.0
        %580 = vmatprep.subr.mxu0 0.0
        %581 = vmatpush1.msra.mxu0 0.0
        %582 = vmatprep.subr.mxu0 0.0
        %583 = vmatpush1.msra.mxu0 0.0
        %584 = vmatprep.subr.mxu0 0.0
        %585 = vmatpush1.msra.mxu0 0.0
        %586 = vmatprep.subr.mxu0 0.0
        %587 = vmatpush1.msra.mxu0 0.0
        %588 = vmatprep.subr.mxu0 0.0
        %589 = vmatpush1.msra.mxu0 0.0
        %590 = vmatprep.subr.mxu0 0.0
        %591 = vmatpush1.msra.mxu0 0.0
        %592 = vmatprep.subr.mxu0 0.0
        %593 = vmatpush1.msra.mxu0 0.0
        %594 = vmatprep.subr.mxu0 0.0
        %595 = vmatpush1.msra.mxu0 0.0
        %596 = vmatprep.subr.mxu0 0.0
        %597 = vmatpush1.msra.mxu0 0.0
        %598 = vmatprep.subr.mxu0 0.0
        %599 = vmatpush1.msra.mxu0 0.0
        %600 = vmatprep.subr.mxu0 0.0
        %601 = vmatpush1.msra.mxu0 0.0
        %602 = vmatprep.subr.mxu0 0.0
        %603 = vmatpush1.msra.mxu0 0.0
        %604 = vmatprep.subr.mxu0 0.0
        %605 = vmatpush1.msra.mxu0 0.0
        %606 = vmatprep.subr.mxu0 0.0
        %607 = vmatpush1.msra.mxu0 0.0
        %608 = vmatprep.subr.mxu0 0.0
        %609 = vmatpush1.msra.mxu0 0.0
        %610 = vmatprep.subr.mxu0 0.0
        %611 = vmatpush1.msra.mxu0 0.0
        %612 = vmatprep.mubr.f32.mxu0 0.0
        %613 = vmatmul.mubr.f32.gmra.mrb[0].mxu0 %v546
        %v614 = vpop.f32.mrb[0].mxu0
        %v615 = vadd.f32 %v542, %v614
        %v616 = vpop.f32.mrb[0].mxu0
        %617 = vdwg.mxu0
        %619 = vrot.lane.b32.xlu0 %v615, 96
        %v620 = vpop.permute.xlu0 %619
        %vm621 = vcmask 64512
        %v622 = vsel %vm621, %v615, 0
        %v624 = vsel %vm621, %v620, 0
        %626 = vmatprep.subr.mxu0 0.0
        %627 = vmatpush1.xpose.msra.mxu0 %v624
        %628 = vmatprep.subr.mxu0 0.0
        %629 = vmatpush1.xpose.msra.mxu0 0.0
        %630 = vmatprep.subr.mxu0 0.0
        %631 = vmatpush1.xpose.msra.mxu0 0.0
        %632 = vmatprep.subr.mxu0 0.0
        %633 = vmatpush1.xpose.msra.mxu0 0.0
        %634 = vmatprep.subr.mxu0 0.0
        %635 = vmatpush1.xpose.msra.mxu0 0.0
        %636 = vmatprep.subr.mxu0 0.0
        %637 = vmatpush1.xpose.msra.mxu0 0.0
        %638 = vmatprep.subr.mxu0 0.0
        %639 = vmatpush1.xpose.msra.mxu0 0.0
        %640 = vmatprep.subr.mxu0 0.0
        %641 = vmatpush1.xpose.msra.mxu0 0.0
        %642 = vmatprep.subr.mxu0 0.0
        %643 = vmatpush1.xpose.msra.mxu0 0.0
        %644 = vmatprep.subr.mxu0 0.0
        %645 = vmatpush1.xpose.msra.mxu0 0.0
        %646 = vmatprep.subr.mxu0 0.0
        %647 = vmatpush1.xpose.msra.mxu0 0.0
        %648 = vmatprep.subr.mxu0 0.0
        %649 = vmatpush1.xpose.msra.mxu0 0.0
        %650 = vmatprep.subr.mxu0 0.0
        %651 = vmatpush1.xpose.msra.mxu0 0.0
        %652 = vmatprep.subr.mxu0 0.0
        %653 = vmatpush1.xpose.msra.mxu0 0.0
        %654 = vmatprep.subr.mxu0 0.0
        %655 = vmatpush1.xpose.msra.mxu0 0.0
        %656 = vmatprep.subr.mxu0 0.0
        %657 = vmatpush1.xpose.msra.mxu0 0.0
        %658 = vmatprep.subr.mxu0 0.0
        %659 = vmatpush1.xpose.msra.mxu0 0.0
        %660 = vmatprep.subr.mxu0 0.0
        %661 = vmatpush1.xpose.msra.mxu0 0.0
        %662 = vmatprep.subr.mxu0 0.0
        %663 = vmatpush1.xpose.msra.mxu0 0.0
        %664 = vmatprep.subr.mxu0 0.0
        %665 = vmatpush1.xpose.msra.mxu0 0.0
        %666 = vmatprep.subr.mxu0 0.0
        %667 = vmatpush1.xpose.msra.mxu0 0.0
        %668 = vmatprep.subr.mxu0 0.0
        %669 = vmatpush1.xpose.msra.mxu0 0.0
        %670 = vmatprep.subr.mxu0 0.0
        %671 = vmatpush1.xpose.msra.mxu0 0.0
        %672 = vmatprep.subr.mxu0 0.0
        %673 = vmatpush1.xpose.msra.mxu0 0.0
        %674 = vmatprep.subr.mxu0 0.0
        %675 = vmatpush1.xpose.msra.mxu0 0.0
        %676 = vmatprep.subr.mxu0 0.0
        %677 = vmatpush1.xpose.msra.mxu0 0.0
        %678 = vmatprep.subr.mxu0 0.0
        %679 = vmatpush1.xpose.msra.mxu0 0.0
        %680 = vmatprep.subr.mxu0 0.0
        %681 = vmatpush1.xpose.msra.mxu0 0.0
        %682 = vmatprep.subr.mxu0 0.0
        %683 = vmatpush1.xpose.msra.mxu0 0.0
        %684 = vmatprep.subr.mxu0 0.0
        %685 = vmatpush1.xpose.msra.mxu0 0.0
        %686 = vmatprep.subr.mxu0 0.0
        %687 = vmatpush1.xpose.msra.mxu0 0.0
        %688 = vmatprep.subr.mxu0 0.0
        %689 = vmatpush1.xpose.msra.mxu0 0.0
        %690 = vmatprep.mubr.f32.mxu0 0.0
        %691 = vmatmul.mubr.f32.gmra.mrb[0].mxu0 %v622
        %v692 = vpop.f32.mrb[0].mxu0
        %v693 = vadd.f32 0.0, %v692
        %v694 = vpop.f32.mrb[0].mxu0
        %695 = vdwg.mxu0
        %v696 = vsel %vm621, %v693, -inf
        %697 = vmax.xlane.f32.xlu0 %v696
        %v698 = vpop.xlane.xlu0 %697
        %v699 = vsub.f32 %v693, %v698
        %v700 = vmul.f32 %v699, 1.442695
        %v701 = vpow.pop %v700
        %v702 = vsel %vm621, %v701, 0.0
        %703 = vadd.xlane.f32.xlu0 %v702
        %v704 = vpop.xlane.xlu0 %703
        %v705 = vrcp.pop %v704
        %v706 = vmul.f32 %v701, %v705
        %707 = vst.msk [vmem:[%s531] sm:$0xff] %vm621, %v706
        %708 = vrot.lane.b32.xlu0 %v615, 64
        %v709 = vpop.permute.xlu0 %708
        %v712 = vsel %vm621, %v706, 0
        %714 = vmatprep.subr.mxu0 0.0
        %715 = vmatpush1.msra.mxu0 %v709
        %716 = vmatprep.subr.mxu0 0.0
        %717 = vmatpush1.msra.mxu0 0.0
        %718 = vmatprep.subr.mxu0 0.0
        %719 = vmatpush1.msra.mxu0 0.0
        %720 = vmatprep.subr.mxu0 0.0
        %721 = vmatpush1.msra.mxu0 0.0
        %722 = vmatprep.subr.mxu0 0.0
        %723 = vmatpush1.msra.mxu0 0.0
        %724 = vmatprep.subr.mxu0 0.0
        %725 = vmatpush1.msra.mxu0 0.0
        %726 = vmatprep.subr.mxu0 0.0
        %727 = vmatpush1.msra.mxu0 0.0
        %728 = vmatprep.subr.mxu0 0.0
        %729 = vmatpush1.msra.mxu0 0.0
        %730 = vmatprep.subr.mxu0 0.0
        %731 = vmatpush1.msra.mxu0 0.0
        %732 = vmatprep.subr.mxu0 0.0
        %733 = vmatpush1.msra.mxu0 0.0
        %734 = vmatprep.subr.mxu0 0.0
        %735 = vmatpush1.msra.mxu0 0.0
        %736 = vmatprep.subr.mxu0 0.0
        %737 = vmatpush1.msra.mxu0 0.0
        %738 = vmatprep.subr.mxu0 0.0
        %739 = vmatpush1.msra.mxu0 0.0
        %740 = vmatprep.subr.mxu0 0.0
        %741 = vmatpush1.msra.mxu0 0.0
        %742 = vmatprep.subr.mxu0 0.0
        %743 = vmatpush1.msra.mxu0 0.0
        %744 = vmatprep.subr.mxu0 0.0
        %745 = vmatpush1.msra.mxu0 0.0
        %746 = vmatprep.subr.mxu0 0.0
        %747 = vmatpush1.msra.mxu0 0.0
        %748 = vmatprep.subr.mxu0 0.0
        %749 = vmatpush1.msra.mxu0 0.0
        %750 = vmatprep.subr.mxu0 0.0
        %751 = vmatpush1.msra.mxu0 0.0
        %752 = vmatprep.subr.mxu0 0.0
        %753 = vmatpush1.msra.mxu0 0.0
        %754 = vmatprep.subr.mxu0 0.0
        %755 = vmatpush1.msra.mxu0 0.0
        %756 = vmatprep.subr.mxu0 0.0
        %757 = vmatpush1.msra.mxu0 0.0
        %758 = vmatprep.subr.mxu0 0.0
        %759 = vmatpush1.msra.mxu0 0.0
        %760 = vmatprep.subr.mxu0 0.0
        %761 = vmatpush1.msra.mxu0 0.0
        %762 = vmatprep.subr.mxu0 0.0
        %763 = vmatpush1.msra.mxu0 0.0
        %764 = vmatprep.subr.mxu0 0.0
        %765 = vmatpush1.msra.mxu0 0.0
        %766 = vmatprep.subr.mxu0 0.0
        %767 = vmatpush1.msra.mxu0 0.0
        %768 = vmatprep.subr.mxu0 0.0
        %769 = vmatpush1.msra.mxu0 0.0
        %770 = vmatprep.subr.mxu0 0.0
        %771 = vmatpush1.msra.mxu0 0.0
        %772 = vmatprep.subr.mxu0 0.0
        %773 = vmatpush1.msra.mxu0 0.0
        %774 = vmatprep.subr.mxu0 0.0
        %775 = vmatpush1.msra.mxu0 0.0
        %776 = vmatprep.subr.mxu0 0.0
        %777 = vmatpush1.msra.mxu0 0.0
        %778 = vmatprep.mubr.f32.mxu0 0.0
        %779 = vmatmul.mubr.f32.gmra.mrb[0].mxu0 %v712
        %v780 = vpop.f32.mrb[0].mxu0
        %v781 = vadd.f32 0.0, %v780
        %v782 = vpop.f32.mrb[0].mxu0
        %783 = vdwg.mxu0
        %784 = vst.msk [vmem:[#allocation2] sm:$0xff] %vm621, %v781
        %785 = vrot.lane.b32.xlu0 %v615, 120
        %v786 = vpop.permute.xlu0 %785
        %787 = vrot.lane.b32.xlu0 %v615, 88
        %v788 = vpop.permute.xlu0 %787
        %v789 = vsel %vm621, %v786, 0
        %v791 = vsel %vm621, %v788, 0
        %793 = vmatprep.subr.mxu0 0.0
        %794 = vmatpush1.xpose.msra.mxu0 %v791
        %795 = vmatprep.subr.mxu0 0.0
        %796 = vmatpush1.xpose.msra.mxu0 0.0
        %797 = vmatprep.subr.mxu0 0.0
        %798 = vmatpush1.xpose.msra.mxu0 0.0
        %799 = vmatprep.subr.mxu0 0.0
        %800 = vmatpush1.xpose.msra.mxu0 0.0
        %801 = vmatprep.subr.mxu0 0.0
        %802 = vmatpush1.xpose.msra.mxu0 0.0
        %803 = vmatprep.subr.mxu0 0.0
        %804 = vmatpush1.xpose.msra.mxu0 0.0
        %805 = vmatprep.subr.mxu0 0.0
        %806 = vmatpush1.xpose.msra.mxu0 0.0
        %807 = vmatprep.subr.mxu0 0.0
        %808 = vmatpush1.xpose.msra.mxu0 0.0
        %809 = vmatprep.subr.mxu0 0.0
        %810 = vmatpush1.xpose.msra.mxu0 0.0
        %811 = vmatprep.subr.mxu0 0.0
        %812 = vmatpush1.xpose.msra.mxu0 0.0
        %813 = vmatprep.subr.mxu0 0.0
        %814 = vmatpush1.xpose.msra.mxu0 0.0
        %815 = vmatprep.subr.mxu0 0.0
        %816 = vmatpush1.xpose.msra.mxu0 0.0
        %817 = vmatprep.subr.mxu0 0.0
        %818 = vmatpush1.xpose.msra.mxu0 0.0
        %819 = vmatprep.subr.mxu0 0.0
        %820 = vmatpush1.xpose.msra.mxu0 0.0
        %821 = vmatprep.subr.mxu0 0.0
        %822 = vmatpush1.xpose.msra.mxu0 0.0
        %823 = vmatprep.subr.mxu0 0.0
        %824 = vmatpush1.xpose.msra.mxu0 0.0
        %825 = vmatprep.subr.mxu0 0.0
        %826 = vmatpush1.xpose.msra.mxu0 0.0
        %827 = vmatprep.subr.mxu0 0.0
        %828 = vmatpush1.xpose.msra.mxu0 0.0
        %829 = vmatprep.subr.mxu0 0.0
        %830 = vmatpush1.xpose.msra.mxu0 0.0
        %831 = vmatprep.subr.mxu0 0.0
        %832 = vmatpush1.xpose.msra.mxu0 0.0
        %833 = vmatprep.subr.mxu0 0.0
        %834 = vmatpush1.xpose.msra.mxu0 0.0
        %835 = vmatprep.subr.mxu0 0.0
        %836 = vmatpush1.xpose.msra.mxu0 0.0
        %837 = vmatprep.subr.mxu0 0.0
        %838 = vmatpush1.xpose.msra.mxu0 0.0
        %839 = vmatprep.subr.mxu0 0.0
        %840 = vmatpush1.xpose.msra.mxu0 0.0
        %841 = vmatprep.subr.mxu0 0.0
        %842 = vmatpush1.xpose.msra.mxu0 0.0
        %843 = vmatprep.subr.mxu0 0.0
        %844 = vmatpush1.xpose.msra.mxu0 0.0
        %845 = vmatprep.subr.mxu0 0.0
        %846 = vmatpush1.xpose.msra.mxu0 0.0
        %847 = vmatprep.subr.mxu0 0.0
        %848 = vmatpush1.xpose.msra.mxu0 0.0
        %849 = vmatprep.subr.mxu0 0.0
        %850 = vmatpush1.xpose.msra.mxu0 0.0
        %851 = vmatprep.subr.mxu0 0.0
        %852 = vmatpush1.xpose.msra.mxu0 0.0
        %853 = vmatprep.subr.mxu0 0.0
        %854 = vmatpush1.xpose.msra.mxu0 0.0
        %855 = vmatprep.subr.mxu0 0.0
        %856 = vmatpush1.xpose.msra.mxu0 0.0
        %857 = vmatprep.mubr.f32.mxu0 0.0
        %858 = vmatmul.mubr.f32.gmra.mrb[0].mxu0 %v789
        %v859 = vpop.f32.mrb[0].mxu0
        %v860 = vadd.f32 0.0, %v859
        %v861 = vpop.f32.mrb[0].mxu0
        %862 = vdwg.mxu0
        %v863 = vsel %vm621, %v860, -inf
        %864 = vmax.xlane.f32.xlu0 %v863
        %v865 = vpop.xlane.xlu0 %864
        %v866 = vsub.f32 %v860, %v865
        %v867 = vmul.f32 %v866, 1.442695
        %v868 = vpow.pop %v867
        %v869 = vsel %vm621, %v868, 0.0
        %870 = vadd.xlane.f32.xlu0 %v869
        %v871 = vpop.xlane.xlu0 %870
        %v872 = vrcp.pop %v871
        %v873 = vmul.f32 %v868, %v872
        %s874 = scalar_lea.vmem %s531, 8 [#allocation12]
        %875 = vst.msk [vmem:[%s874] sm:$0xff] %vm621, %v873
        %876 = vrot.lane.b32.xlu0 %v615, 56
        %v877 = vpop.permute.xlu0 %876
        %v880 = vsel %vm621, %v873, 0
        %882 = vmatprep.subr.mxu0 0.0
        %883 = vmatpush1.msra.mxu0 %v877
        %884 = vmatprep.subr.mxu0 0.0
        %885 = vmatpush1.msra.mxu0 0.0
        %886 = vmatprep.subr.mxu0 0.0
        %887 = vmatpush1.msra.mxu0 0.0
        %888 = vmatprep.subr.mxu0 0.0
        %889 = vmatpush1.msra.mxu0 0.0
        %890 = vmatprep.subr.mxu0 0.0
        %891 = vmatpush1.msra.mxu0 0.0
        %892 = vmatprep.subr.mxu0 0.0
        %893 = vmatpush1.msra.mxu0 0.0
        %894 = vmatprep.subr.mxu0 0.0
        %895 = vmatpush1.msra.mxu0 0.0
        %896 = vmatprep.subr.mxu0 0.0
        %897 = vmatpush1.msra.mxu0 0.0
        %898 = vmatprep.subr.mxu0 0.0
        %899 = vmatpush1.msra.mxu0 0.0
        %900 = vmatprep.subr.mxu0 0.0
        %901 = vmatpush1.msra.mxu0 0.0
        %902 = vmatprep.subr.mxu0 0.0
        %903 = vmatpush1.msra.mxu0 0.0
        %904 = vmatprep.subr.mxu0 0.0
        %905 = vmatpush1.msra.mxu0 0.0
        %906 = vmatprep.subr.mxu0 0.0
        %907 = vmatpush1.msra.mxu0 0.0
        %908 = vmatprep.subr.mxu0 0.0
        %909 = vmatpush1.msra.mxu0 0.0
        %910 = vmatprep.subr.mxu0 0.0
        %911 = vmatpush1.msra.mxu0 0.0
        %912 = vmatprep.subr.mxu0 0.0
        %913 = vmatpush1.msra.mxu0 0.0
        %914 = vmatprep.subr.mxu0 0.0
        %915 = vmatpush1.msra.mxu0 0.0
        %916 = vmatprep.subr.mxu0 0.0
        %917 = vmatpush1.msra.mxu0 0.0
        %918 = vmatprep.subr.mxu0 0.0
        %919 = vmatpush1.msra.mxu0 0.0
        %920 = vmatprep.subr.mxu0 0.0
        %921 = vmatpush1.msra.mxu0 0.0
        %922 = vmatprep.subr.mxu0 0.0
        %923 = vmatpush1.msra.mxu0 0.0
        %924 = vmatprep.subr.mxu0 0.0
        %925 = vmatpush1.msra.mxu0 0.0
        %926 = vmatprep.subr.mxu0 0.0
        %927 = vmatpush1.msra.mxu0 0.0
        %928 = vmatprep.subr.mxu0 0.0
        %929 = vmatpush1.msra.mxu0 0.0
        %930 = vmatprep.subr.mxu0 0.0
        %931 = vmatpush1.msra.mxu0 0.0
        %932 = vmatprep.subr.mxu0 0.0
        %933 = vmatpush1.msra.mxu0 0.0
        %934 = vmatprep.subr.mxu0 0.0
        %935 = vmatpush1.msra.mxu0 0.0
        %936 = vmatprep.subr.mxu0 0.0
        %937 = vmatpush1.msra.mxu0 0.0
        %938 = vmatprep.subr.mxu0 0.0
        %939 = vmatpush1.msra.mxu0 0.0
        %940 = vmatprep.subr.mxu0 0.0
        %941 = vmatpush1.msra.mxu0 0.0
        %942 = vmatprep.subr.mxu0 0.0
        %943 = vmatpush1.msra.mxu0 0.0
        %944 = vmatprep.subr.mxu0 0.0
        %945 = vmatpush1.msra.mxu0 0.0
        %946 = vmatprep.mubr.f32.mxu0 0.0
        %947 = vmatmul.mubr.f32.gmra.mrb[0].mxu0 %v880
        %v948 = vpop.f32.mrb[0].mxu0
        %v949 = vadd.f32 0.0, %v948
        %v950 = vpop.f32.mrb[0].mxu0
        %951 = vdwg.mxu0
        %953 = vrot.lane.b32.xlu0 %v949, 8
        %v954 = vpop.permute.xlu0 %953
        %vm956 = vcmask 130112
        %957 = vst.msk [vmem:[#allocation2] sm:$0xff] %vm956, %v954
        %958 = vrot.lane.b32.xlu0 %v615, 112
        %v959 = vpop.permute.xlu0 %958
        %960 = vrot.lane.b32.xlu0 %v615, 80
        %v961 = vpop.permute.xlu0 %960
        %v962 = vsel %vm621, %v959, 0
        %v964 = vsel %vm621, %v961, 0
        %966 = vmatprep.subr.mxu0 0.0
        %967 = vmatpush1.xpose.msra.mxu0 %v964
        %968 = vmatprep.subr.mxu0 0.0
        %969 = vmatpush1.xpose.msra.mxu0 0.0
        %970 = vmatprep.subr.mxu0 0.0
        %971 = vmatpush1.xpose.msra.mxu0 0.0
        %972 = vmatprep.subr.mxu0 0.0
        %973 = vmatpush1.xpose.msra.mxu0 0.0
        %974 = vmatprep.subr.mxu0 0.0
        %975 = vmatpush1.xpose.msra.mxu0 0.0
        %976 = vmatprep.subr.mxu0 0.0
        %977 = vmatpush1.xpose.msra.mxu0 0.0
        %978 = vmatprep.subr.mxu0 0.0
        %979 = vmatpush1.xpose.msra.mxu0 0.0
        %980 = vmatprep.subr.mxu0 0.0
        %981 = vmatpush1.xpose.msra.mxu0 0.0
        %982 = vmatprep.subr.mxu0 0.0
        %983 = vmatpush1.xpose.msra.mxu0 0.0
        %984 = vmatprep.subr.mxu0 0.0
        %985 = vmatpush1.xpose.msra.mxu0 0.0
        %986 = vmatprep.subr.mxu0 0.0
        %987 = vmatpush1.xpose.msra.mxu0 0.0
        %988 = vmatprep.subr.mxu0 0.0
        %989 = vmatpush1.xpose.msra.mxu0 0.0
        %990 = vmatprep.subr.mxu0 0.0
        %991 = vmatpush1.xpose.msra.mxu0 0.0
        %992 = vmatprep.subr.mxu0 0.0
        %993 = vmatpush1.xpose.msra.mxu0 0.0
        %994 = vmatprep.subr.mxu0 0.0
        %995 = vmatpush1.xpose.msra.mxu0 0.0
        %996 = vmatprep.subr.mxu0 0.0
        %997 = vmatpush1.xpose.msra.mxu0 0.0
        %998 = vmatprep.subr.mxu0 0.0
        %999 = vmatpush1.xpose.msra.mxu0 0.0
        %1000 = vmatprep.subr.mxu0 0.0
        %1001 = vmatpush1.xpose.msra.mxu0 0.0
        %1002 = vmatprep.subr.mxu0 0.0
        %1003 = vmatpush1.xpose.msra.mxu0 0.0
        %1004 = vmatprep.subr.mxu0 0.0
        %1005 = vmatpush1.xpose.msra.mxu0 0.0
        %1006 = vmatprep.subr.mxu0 0.0
        %1007 = vmatpush1.xpose.msra.mxu0 0.0
        %1008 = vmatprep.subr.mxu0 0.0
        %1009 = vmatpush1.xpose.msra.mxu0 0.0
        %1010 = vmatprep.subr.mxu0 0.0
        %1011 = vmatpush1.xpose.msra.mxu0 0.0
        %1012 = vmatprep.subr.mxu0 0.0
        %1013 = vmatpush1.xpose.msra.mxu0 0.0
        %1014 = vmatprep.subr.mxu0 0.0
        %1015 = vmatpush1.xpose.msra.mxu0 0.0
        %1016 = vmatprep.subr.mxu0 0.0
        %1017 = vmatpush1.xpose.msra.mxu0 0.0
        %1018 = vmatprep.subr.mxu0 0.0
        %1019 = vmatpush1.xpose.msra.mxu0 0.0
        %1020 = vmatprep.subr.mxu0 0.0
        %1021 = vmatpush1.xpose.msra.mxu0 0.0
        %1022 = vmatprep.subr.mxu0 0.0
        %1023 = vmatpush1.xpose.msra.mxu0 0.0
        %1024 = vmatprep.subr.mxu0 0.0
        %1025 = vmatpush1.xpose.msra.mxu0 0.0
        %1026 = vmatprep.subr.mxu0 0.0
        %1027 = vmatpush1.xpose.msra.mxu0 0.0
        %1028 = vmatprep.subr.mxu0 0.0
        %1029 = vmatpush1.xpose.msra.mxu0 0.0
        %1030 = vmatprep.mubr.f32.mxu0 0.0
        %1031 = vmatmul.mubr.f32.gmra.mrb[0].mxu0 %v962
        %v1032 = vpop.f32.mrb[0].mxu0
        %v1033 = vadd.f32 0.0, %v1032
        %v1034 = vpop.f32.mrb[0].mxu0
        %1035 = vdwg.mxu0
        %v1036 = vsel %vm621, %v1033, -inf
        %1037 = vmax.xlane.f32.xlu0 %v1036
        %v1038 = vpop.xlane.xlu0 %1037
        %v1039 = vsub.f32 %v1033, %v1038
        %v1040 = vmul.f32 %v1039, 1.442695
        %v1041 = vpow.pop %v1040
        %v1042 = vsel %vm621, %v1041, 0.0
        %1043 = vadd.xlane.f32.xlu0 %v1042
        %v1044 = vpop.xlane.xlu0 %1043
        %v1045 = vrcp.pop %v1044
        %v1046 = vmul.f32 %v1041, %v1045
        %s1047 = scalar_lea.vmem %s531, 16 [#allocation12]
        %1048 = vst.msk [vmem:[%s1047] sm:$0xff] %vm621, %v1046
        %1049 = vrot.lane.b32.xlu0 %v615, 48
        %v1050 = vpop.permute.xlu0 %1049
        %v1053 = vsel %vm621, %v1046, 0
        %1055 = vmatprep.subr.mxu0 0.0
        %1056 = vmatpush1.msra.mxu0 %v1050
        %1057 = vmatprep.subr.mxu0 0.0
        %1058 = vmatpush1.msra.mxu0 0.0
        %1059 = vmatprep.subr.mxu0 0.0
        %1060 = vmatpush1.msra.mxu0 0.0
        %1061 = vmatprep.subr.mxu0 0.0
        %1062 = vmatpush1.msra.mxu0 0.0
        %1063 = vmatprep.subr.mxu0 0.0
        %1064 = vmatpush1.msra.mxu0 0.0
        %1065 = vmatprep.subr.mxu0 0.0
        %1066 = vmatpush1.msra.mxu0 0.0
        %1067 = vmatprep.subr.mxu0 0.0
        %1068 = vmatpush1.msra.mxu0 0.0
        %1069 = vmatprep.subr.mxu0 0.0
        %1070 = vmatpush1.msra.mxu0 0.0
        %1071 = vmatprep.subr.mxu0 0.0
        %1072 = vmatpush1.msra.mxu0 0.0
        %1073 = vmatprep.subr.mxu0 0.0
        %1074 = vmatpush1.msra.mxu0 0.0
        %1075 = vmatprep.subr.mxu0 0.0
        %1076 = vmatpush1.msra.mxu0 0.0
        %1077 = vmatprep.subr.mxu0 0.0
        %1078 = vmatpush1.msra.mxu0 0.0
        %1079 = vmatprep.subr.mxu0 0.0
        %1080 = vmatpush1.msra.mxu0 0.0
        %1081 = vmatprep.subr.mxu0 0.0
        %1082 = vmatpush1.msra.mxu0 0.0
        %1083 = vmatprep.subr.mxu0 0.0
        %1084 = vmatpush1.msra.mxu0 0.0
        %1085 = vmatprep.subr.mxu0 0.0
        %1086 = vmatpush1.msra.mxu0 0.0
        %1087 = vmatprep.subr.mxu0 0.0
        %1088 = vmatpush1.msra.mxu0 0.0
        %1089 = vmatprep.subr.mxu0 0.0
        %1090 = vmatpush1.msra.mxu0 0.0
        %1091 = vmatprep.subr.mxu0 0.0
        %1092 = vmatpush1.msra.mxu0 0.0
        %1093 = vmatprep.subr.mxu0 0.0
        %1094 = vmatpush1.msra.mxu0 0.0
        %1095 = vmatprep.subr.mxu0 0.0
        %1096 = vmatpush1.msra.mxu0 0.0
        %1097 = vmatprep.subr.mxu0 0.0
        %1098 = vmatpush1.msra.mxu0 0.0
        %1099 = vmatprep.subr.mxu0 0.0
        %1100 = vmatpush1.msra.mxu0 0.0
        %1101 = vmatprep.subr.mxu0 0.0
        %1102 = vmatpush1.msra.mxu0 0.0
        %1103 = vmatprep.subr.mxu0 0.0
        %1104 = vmatpush1.msra.mxu0 0.0
        %1105 = vmatprep.subr.mxu0 0.0
        %1106 = vmatpush1.msra.mxu0 0.0
        %1107 = vmatprep.subr.mxu0 0.0
        %1108 = vmatpush1.msra.mxu0 0.0
        %1109 = vmatprep.subr.mxu0 0.0
        %1110 = vmatpush1.msra.mxu0 0.0
        %1111 = vmatprep.subr.mxu0 0.0
        %1112 = vmatpush1.msra.mxu0 0.0
        %1113 = vmatprep.subr.mxu0 0.0
        %1114 = vmatpush1.msra.mxu0 0.0
        %1115 = vmatprep.subr.mxu0 0.0
        %1116 = vmatpush1.msra.mxu0 0.0
        %1117 = vmatprep.subr.mxu0 0.0
        %1118 = vmatpush1.msra.mxu0 0.0
        %1119 = vmatprep.mubr.f32.mxu0 0.0
        %1120 = vmatmul.mubr.f32.gmra.mrb[0].mxu0 %v1053
        %v1121 = vpop.f32.mrb[0].mxu0
        %v1122 = vadd.f32 0.0, %v1121
        %v1123 = vpop.f32.mrb[0].mxu0
        %1124 = vdwg.mxu0
        %1126 = vrot.lane.b32.xlu0 %v1122, 16
        %v1127 = vpop.permute.xlu0 %1126
        %vm1129 = vcmask 195712
        %1130 = vst.msk [vmem:[#allocation2] sm:$0xff] %vm1129, %v1127
        %1131 = vrot.lane.b32.xlu0 %v615, 104
        %v1132 = vpop.permute.xlu0 %1131
        %1133 = vrot.lane.b32.xlu0 %v615, 72
        %v1134 = vpop.permute.xlu0 %1133
        %v1135 = vsel %vm621, %v1132, 0
        %v1137 = vsel %vm621, %v1134, 0
        %1139 = vmatprep.subr.mxu0 0.0
        %1140 = vmatpush1.xpose.msra.mxu0 %v1137
        %1141 = vmatprep.subr.mxu0 0.0
        %1142 = vmatpush1.xpose.msra.mxu0 0.0
        %1143 = vmatprep.subr.mxu0 0.0
        %1144 = vmatpush1.xpose.msra.mxu0 0.0
        %1145 = vmatprep.subr.mxu0 0.0
        %1146 = vmatpush1.xpose.msra.mxu0 0.0
        %1147 = vmatprep.subr.mxu0 0.0
        %1148 = vmatpush1.xpose.msra.mxu0 0.0
        %1149 = vmatprep.subr.mxu0 0.0
        %1150 = vmatpush1.xpose.msra.mxu0 0.0
        %1151 = vmatprep.subr.mxu0 0.0
        %1152 = vmatpush1.xpose.msra.mxu0 0.0
        %1153 = vmatprep.subr.mxu0 0.0
        %1154 = vmatpush1.xpose.msra.mxu0 0.0
        %1155 = vmatprep.subr.mxu0 0.0
        %1156 = vmatpush1.xpose.msra.mxu0 0.0
        %1157 = vmatprep.subr.mxu0 0.0
        %1158 = vmatpush1.xpose.msra.mxu0 0.0
        %1159 = vmatprep.subr.mxu0 0.0
        %1160 = vmatpush1.xpose.msra.mxu0 0.0
        %1161 = vmatprep.subr.mxu0 0.0
        %1162 = vmatpush1.xpose.msra.mxu0 0.0
        %1163 = vmatprep.subr.mxu0 0.0
        %1164 = vmatpush1.xpose.msra.mxu0 0.0
        %1165 = vmatprep.subr.mxu0 0.0
        %1166 = vmatpush1.xpose.msra.mxu0 0.0
        %1167 = vmatprep.subr.mxu0 0.0
        %1168 = vmatpush1.xpose.msra.mxu0 0.0
        %1169 = vmatprep.subr.mxu0 0.0
        %1170 = vmatpush1.xpose.msra.mxu0 0.0
        %1171 = vmatprep.subr.mxu0 0.0
        %1172 = vmatpush1.xpose.msra.mxu0 0.0
        %1173 = vmatprep.subr.mxu0 0.0
        %1174 = vmatpush1.xpose.msra.mxu0 0.0
        %1175 = vmatprep.subr.mxu0 0.0
        %1176 = vmatpush1.xpose.msra.mxu0 0.0
        %1177 = vmatprep.subr.mxu0 0.0
        %1178 = vmatpush1.xpose.msra.mxu0 0.0
        %1179 = vmatprep.subr.mxu0 0.0
        %1180 = vmatpush1.xpose.msra.mxu0 0.0
        %1181 = vmatprep.subr.mxu0 0.0
        %1182 = vmatpush1.xpose.msra.mxu0 0.0
        %1183 = vmatprep.subr.mxu0 0.0
        %1184 = vmatpush1.xpose.msra.mxu0 0.0
        %1185 = vmatprep.subr.mxu0 0.0
        %1186 = vmatpush1.xpose.msra.mxu0 0.0
        %1187 = vmatprep.subr.mxu0 0.0
        %1188 = vmatpush1.xpose.msra.mxu0 0.0
        %1189 = vmatprep.subr.mxu0 0.0
        %1190 = vmatpush1.xpose.msra.mxu0 0.0
        %1191 = vmatprep.subr.mxu0 0.0
        %1192 = vmatpush1.xpose.msra.mxu0 0.0
        %1193 = vmatprep.subr.mxu0 0.0
        %1194 = vmatpush1.xpose.msra.mxu0 0.0
        %1195 = vmatprep.subr.mxu0 0.0
        %1196 = vmatpush1.xpose.msra.mxu0 0.0
        %1197 = vmatprep.subr.mxu0 0.0
        %1198 = vmatpush1.xpose.msra.mxu0 0.0
        %1199 = vmatprep.subr.mxu0 0.0
        %1200 = vmatpush1.xpose.msra.mxu0 0.0
        %1201 = vmatprep.subr.mxu0 0.0
        %1202 = vmatpush1.xpose.msra.mxu0 0.0
        %1203 = vmatprep.mubr.f32.mxu0 0.0
        %1204 = vmatmul.mubr.f32.gmra.mrb[0].mxu0 %v1135
        %v1205 = vpop.f32.mrb[0].mxu0
        %v1206 = vadd.f32 0.0, %v1205
        %v1207 = vpop.f32.mrb[0].mxu0
        %1208 = vdwg.mxu0
        %v1209 = vsel %vm621, %v1206, -inf
        %1210 = vmax.xlane.f32.xlu0 %v1209
        %v1211 = vpop.xlane.xlu0 %1210
        %v1212 = vsub.f32 %v1206, %v1211
        %v1213 = vmul.f32 %v1212, 1.442695
        %v1214 = vpow.pop %v1213
        %v1215 = vsel %vm621, %v1214, 0.0
        %1216 = vadd.xlane.f32.xlu0 %v1215
        %v1217 = vpop.xlane.xlu0 %1216
        %v1218 = vrcp.pop %v1217
        %v1219 = vmul.f32 %v1214, %v1218
        %s1220 = scalar_lea.vmem %s531, 24 [#allocation12]
        %1221 = vst.msk [vmem:[%s1220] sm:$0xff] %vm621, %v1219
        %1222 = vrot.lane.b32.xlu0 %v615, 40
        %v1223 = vpop.permute.xlu0 %1222
        %v1226 = vsel %vm621, %v1219, 0
        %1228 = vmatprep.subr.mxu0 0.0
        %1229 = vmatpush1.msra.mxu0 %v1223
        %1230 = vmatprep.subr.mxu0 0.0
        %1231 = vmatpush1.msra.mxu0 0.0
        %1232 = vmatprep.subr.mxu0 0.0
        %1233 = vmatpush1.msra.mxu0 0.0
        %1234 = vmatprep.subr.mxu0 0.0
        %1235 = vmatpush1.msra.mxu0 0.0
        %1236 = vmatprep.subr.mxu0 0.0
        %1237 = vmatpush1.msra.mxu0 0.0
        %1238 = vmatprep.subr.mxu0 0.0
        %1239 = vmatpush1.msra.mxu0 0.0
        %1240 = vmatprep.subr.mxu0 0.0
        %1241 = vmatpush1.msra.mxu0 0.0
        %1242 = vmatprep.subr.mxu0 0.0
        %1243 = vmatpush1.msra.mxu0 0.0
        %1244 = vmatprep.subr.mxu0 0.0
        %1245 = vmatpush1.msra.mxu0 0.0
        %1246 = vmatprep.subr.mxu0 0.0
        %1247 = vmatpush1.msra.mxu0 0.0
        %1248 = vmatprep.subr.mxu0 0.0
        %1249 = vmatpush1.msra.mxu0 0.0
        %1250 = vmatprep.subr.mxu0 0.0
        %1251 = vmatpush1.msra.mxu0 0.0
        %1252 = vmatprep.subr.mxu0 0.0
        %1253 = vmatpush1.msra.mxu0 0.0
        %1254 = vmatprep.subr.mxu0 0.0
        %1255 = vmatpush1.msra.mxu0 0.0
        %1256 = vmatprep.subr.mxu0 0.0
        %1257 = vmatpush1.msra.mxu0 0.0
        %1258 = vmatprep.subr.mxu0 0.0
        %1259 = vmatpush1.msra.mxu0 0.0
        %1260 = vmatprep.subr.mxu0 0.0
        %1261 = vmatpush1.msra.mxu0 0.0
        %1262 = vmatprep.subr.mxu0 0.0
        %1263 = vmatpush1.msra.mxu0 0.0
        %1264 = vmatprep.subr.mxu0 0.0
        %1265 = vmatpush1.msra.mxu0 0.0
        %1266 = vmatprep.subr.mxu0 0.0
        %1267 = vmatpush1.msra.mxu0 0.0
        %1268 = vmatprep.subr.mxu0 0.0
        %1269 = vmatpush1.msra.mxu0 0.0
        %1270 = vmatprep.subr.mxu0 0.0
        %1271 = vmatpush1.msra.mxu0 0.0
        %1272 = vmatprep.subr.mxu0 0.0
        %1273 = vmatpush1.msra.mxu0 0.0
        %1274 = vmatprep.subr.mxu0 0.0
        %1275 = vmatpush1.msra.mxu0 0.0
        %1276 = vmatprep.subr.mxu0 0.0
        %1277 = vmatpush1.msra.mxu0 0.0
        %1278 = vmatprep.subr.mxu0 0.0
        %1279 = vmatpush1.msra.mxu0 0.0
        %1280 = vmatprep.subr.mxu0 0.0
        %1281 = vmatpush1.msra.mxu0 0.0
        %1282 = vmatprep.subr.mxu0 0.0
        %1283 = vmatpush1.msra.mxu0 0.0
        %1284 = vmatprep.subr.mxu0 0.0
        %1285 = vmatpush1.msra.mxu0 0.0
        %1286 = vmatprep.subr.mxu0 0.0
        %1287 = vmatpush1.msra.mxu0 0.0
        %1288 = vmatprep.subr.mxu0 0.0
        %1289 = vmatpush1.msra.mxu0 0.0
        %1290 = vmatprep.subr.mxu0 0.0
        %1291 = vmatpush1.msra.mxu0 0.0
        %1292 = vmatprep.mubr.f32.mxu0 0.0
        %1293 = vmatmul.mubr.f32.gmra.mrb[0].mxu0 %v1226
        %v1294 = vpop.f32.mrb[0].mxu0
        %v1295 = vadd.f32 0.0, %v1294
        %v1296 = vpop.f32.mrb[0].mxu0
        %1297 = vdwg.mxu0
        %1299 = vrot.lane.b32.xlu0 %v1295, 24
        %v1300 = vpop.permute.xlu0 %1299
        %vm1302 = vcmask 261312
        %1303 = vst.msk [vmem:[#allocation2] sm:$0xff] %vm1302, %v1300
        %v1304 = vld [vmem:[#allocation2] sm:$0xff]
        %v1305 = vld [vmem:[%s3] sm:$0xff]
        %v1306 = vld [vmem:[%s3 + $0x8] sm:$0xff]
        %v1307 = vld [vmem:[%s3 + $0x10] sm:$0xff]
        %v1308 = vld [vmem:[%s3 + $0x18] sm:$0xff]
        %v1309 = vld [vmem:[%s4] sm:$0x1]
        %v1311 = vlaneseq
        %v1312 = vshrl.u32 %v1311, 7
        %v1313 = vsub.s32 0, %v1312
        %v1314 = vrot.slane %v1309, %v1313
        %v1317 = vsel %vm544, %v1304, 0
        %1319 = vmatprep.subr.mxu0 0.0
        %1320 = vmatpush1.msra.mxu0 %v1305
        %1321 = vmatprep.subr.mxu0 0.0
        %1322 = vmatpush1.msra.mxu0 %v1306
        %1323 = vmatprep.subr.mxu0 0.0
        %1324 = vmatpush1.msra.mxu0 %v1307
        %1325 = vmatprep.subr.mxu0 0.0
        %1326 = vmatpush1.msra.mxu0 %v1308
        %1327 = vmatprep.subr.mxu0 0.0
        %1328 = vmatpush1.msra.mxu0 0.0
        %1329 = vmatprep.subr.mxu0 0.0
        %1330 = vmatpush1.msra.mxu0 0.0
        %1331 = vmatprep.subr.mxu0 0.0
        %1332 = vmatpush1.msra.mxu0 0.0
        %1333 = vmatprep.subr.mxu0 0.0
        %1334 = vmatpush1.msra.mxu0 0.0
        %1335 = vmatprep.subr.mxu0 0.0
        %1336 = vmatpush1.msra.mxu0 0.0
        %1337 = vmatprep.subr.mxu0 0.0
        %1338 = vmatpush1.msra.mxu0 0.0
        %1339 = vmatprep.subr.mxu0 0.0
        %1340 = vmatpush1.msra.mxu0 0.0
        %1341 = vmatprep.subr.mxu0 0.0
        %1342 = vmatpush1.msra.mxu0 0.0
        %1343 = vmatprep.subr.mxu0 0.0
        %1344 = vmatpush1.msra.mxu0 0.0
        %1345 = vmatprep.subr.mxu0 0.0
        %1346 = vmatpush1.msra.mxu0 0.0
        %1347 = vmatprep.subr.mxu0 0.0
        %1348 = vmatpush1.msra.mxu0 0.0
        %1349 = vmatprep.subr.mxu0 0.0
        %1350 = vmatpush1.msra.mxu0 0.0
        %1351 = vmatprep.subr.mxu0 0.0
        %1352 = vmatpush1.msra.mxu0 0.0
        %1353 = vmatprep.subr.mxu0 0.0
        %1354 = vmatpush1.msra.mxu0 0.0
        %1355 = vmatprep.subr.mxu0 0.0
        %1356 = vmatpush1.msra.mxu0 0.0
        %1357 = vmatprep.subr.mxu0 0.0
        %1358 = vmatpush1.msra.mxu0 0.0
        %1359 = vmatprep.subr.mxu0 0.0
        %1360 = vmatpush1.msra.mxu0 0.0
        %1361 = vmatprep.subr.mxu0 0.0
        %1362 = vmatpush1.msra.mxu0 0.0
        %1363 = vmatprep.subr.mxu0 0.0
        %1364 = vmatpush1.msra.mxu0 0.0
        %1365 = vmatprep.subr.mxu0 0.0
        %1366 = vmatpush1.msra.mxu0 0.0
        %1367 = vmatprep.subr.mxu0 0.0
        %1368 = vmatpush1.msra.mxu0 0.0
        %1369 = vmatprep.subr.mxu0 0.0
        %1370 = vmatpush1.msra.mxu0 0.0
        %1371 = vmatprep.subr.mxu0 0.0
        %1372 = vmatpush1.msra.mxu0 0.0
        %1373 = vmatprep.subr.mxu0 0.0
        %1374 = vmatpush1.msra.mxu0 0.0
        %1375 = vmatprep.subr.mxu0 0.0
        %1376 = vmatpush1.msra.mxu0 0.0
        %1377 = vmatprep.subr.mxu0 0.0
        %1378 = vmatpush1.msra.mxu0 0.0
        %1379 = vmatprep.subr.mxu0 0.0
        %1380 = vmatpush1.msra.mxu0 0.0
        %1381 = vmatprep.subr.mxu0 0.0
        %1382 = vmatpush1.msra.mxu0 0.0
        %1383 = vmatprep.mubr.f32.mxu0 0.0
        %1384 = vmatmul.mubr.f32.gmra.mrb[0].mxu0 %v1317
        %v1385 = vpop.f32.mrb[0].mxu0
        %v1386 = vadd.f32 %v1314, %v1385
        %v1387 = vpop.f32.mrb[0].mxu0
        %1388 = vdwg.mxu0
        %v1389 = vadd.f32 %v1386, %v532
        %v1390 = vld [vmem:[#allocation6] sm:$0x1]
        %v1391 = vld [vmem:[#allocation8] sm:$0x1]
        %v1392 = vsel %vm544, %v1389, 0.0
        %1393 = vadd.xlane.f32.xlu0 %v1392
        %v1394 = vpop.xlane.xlu0 %1393
        %v1395 = vrcp.pop 32.0
        %v1396 = vmul.f32 %v1394, %v1395
        %v1397 = vsub.f32 %v1389, %v1396
        %v1398 = vmul.f32 %v1397, %v1397
        %v1399 = vsel %vm544, %v1398, 0.0
        %1400 = vadd.xlane.f32.xlu0 %v1399
        %v1401 = vpop.xlane.xlu0 %1400
        %v1402 = vmul.f32 %v1401, %v1395
        %v1403 = vadd.f32 %v1402, 1e-05
        %v1404 = vrsqrt.pop %v1403
        %v1405 = vmul.f32 %v1397, %v1404
        %v1407 = vlaneseq
        %v1408 = vshrl.u32 %v1407, 7
        %v1409 = vsub.s32 0, %v1408
        %v1410 = vrot.slane %v1390, %v1409
        %v1412 = vmul.f32 %v1405, %v1410
        %v1414 = vlaneseq
        %v1415 = vshrl.u32 %v1414, 7
        %v1416 = vsub.s32 0, %v1415
        %v1417 = vrot.slane %v1391, %v1416
        %v1419 = vadd.f32 %v1412, %v1417
        %v1420 = vld [vmem:[%s7] sm:$0xff]
        %v1421 = vld [vmem:[%s7 + $0x8] sm:$0xff]
        %v1422 = vld [vmem:[%s7 + $0x10] sm:$0xff]
        %v1423 = vld [vmem:[%s7 + $0x18] sm:$0xff]
        %v1424 = vld [vmem:[#allocation9] sm:$0x1]
        %v1426 = vlaneseq
        %v1427 = vshrl.u32 %v1426, 7
        %v1428 = vsub.s32 0, %v1427
        %v1429 = vrot.slane %v1424, %v1428
        %v1432 = vsel %vm544, %v1419, 0
        %1434 = vmatprep.subr.mxu0 0.0
        %1435 = vmatpush1.msra.mxu0 %v1420
        %1436 = vmatprep.subr.mxu0 0.0
        %1437 = vmatpush1.msra.mxu0 %v1421
        %1438 = vmatprep.subr.mxu0 0.0
        %1439 = vmatpush1.msra.mxu0 %v1422
        %1440 = vmatprep.subr.mxu0 0.0
        %1441 = vmatpush1.msra.mxu0 %v1423
        %1442 = vmatprep.subr.mxu0 0.0
        %1443 = vmatpush1.msra.mxu0 0.0
        %1444 = vmatprep.subr.mxu0 0.0
        %1445 = vmatpush1.msra.mxu0 0.0
        %1446 = vmatprep.subr.mxu0 0.0
        %1447 = vmatpush1.msra.mxu0 0.0
        %1448 = vmatprep.subr.mxu0 0.0
        %1449 = vmatpush1.msra.mxu0 0.0
        %1450 = vmatprep.subr.mxu0 0.0
        %1451 = vmatpush1.msra.mxu0 0.0
        %1452 = vmatprep.subr.mxu0 0.0
        %1453 = vmatpush1.msra.mxu0 0.0
        %1454 = vmatprep.subr.mxu0 0.0
        %1455 = vmatpush1.msra.mxu0 0.0
        %1456 = vmatprep.subr.mxu0 0.0
        %1457 = vmatpush1.msra.mxu0 0.0
        %1458 = vmatprep.subr.mxu0 0.0
        %1459 = vmatpush1.msra.mxu0 0.0
        %1460 = vmatprep.subr.mxu0 0.0
        %1461 = vmatpush1.msra.mxu0 0.0
        %1462 = vmatprep.subr.mxu0 0.0
        %1463 = vmatpush1.msra.mxu0 0.0
        %1464 = vmatprep.subr.mxu0 0.0
        %1465 = vmatpush1.msra.mxu0 0.0
        %1466 = vmatprep.subr.mxu0 0.0
        %1467 = vmatpush1.msra.mxu0 0.0
        %1468 = vmatprep.subr.mxu0 0.0
        %1469 = vmatpush1.msra.mxu0 0.0
        %1470 = vmatprep.subr.mxu0 0.0
        %1471 = vmatpush1.msra.mxu0 0.0
        %1472 = vmatprep.subr.mxu0 0.0
        %1473 = vmatpush1.msra.mxu0 0.0
        %1474 = vmatprep.subr.mxu0 0.0
        %1475 = vmatpush1.msra.mxu0 0.0
        %1476 = vmatprep.subr.mxu0 0.0
        %1477 = vmatpush1.msra.mxu0 0.0
        %1478 = vmatprep.subr.mxu0 0.0
        %1479 = vmatpush1.msra.mxu0 0.0
        %1480 = vmatprep.subr.mxu0 0.0
        %1481 = vmatpush1.msra.mxu0 0.0
        %1482 = vmatprep.subr.mxu0 0.0
        %1483 = vmatpush1.msra.mxu0 0.0
        %1484 = vmatprep.subr.mxu0 0.0
        %1485 = vmatpush1.msra.mxu0 0.0
        %1486 = vmatprep.subr.mxu0 0.0
        %1487 = vmatpush1.msra.mxu0 0.0
        %1488 = vmatprep.subr.mxu0 0.0
        %1489 = vmatpush1.msra.mxu0 0.0
        %1490 = vmatprep.subr.mxu0 0.0
        %1491 = vmatpush1.msra.mxu0 0.0
        %1492 = vmatprep.subr.mxu0 0.0
        %1493 = vmatpush1.msra.mxu0 0.0
        %1494 = vmatprep.subr.mxu0 0.0
        %1495 = vmatpush1.msra.mxu0 0.0
        %1496 = vmatprep.subr.mxu0 0.0
        %1497 = vmatpush1.msra.mxu0 0.0
        %1498 = vmatprep.mubr.f32.mxu0 0.0
        %1499 = vmatmul.mubr.f32.gmra.mrb[0].mxu0 %v1432
        %v1500 = vpop.f32.mrb[0].mxu0
        %v1501 = vadd.f32 %v1429, %v1500
        %v1502 = vpop.f32.mrb[0].mxu0
        %1503 = vdwg.mxu0
        %v1504 = vmax.f32 %v1501, 0.0
        %v1505 = vld [vmem:[%s9] sm:$0xff]
        %v1506 = vld [vmem:[%s9 + $0x8] sm:$0xff]
        %v1507 = vld [vmem:[%s9 + $0x10] sm:$0xff]
        %v1508 = vld [vmem:[%s9 + $0x18] sm:$0xff]
        %v1509 = vld [vmem:[%s9 + $0x20] sm:$0xff]
        %v1510 = vld [vmem:[%s9 + $0x28] sm:$0xff]
        %v1511 = vld [vmem:[%s9 + $0x30] sm:$0xff]
        %v1512 = vld [vmem:[%s9 + $0x38] sm:$0xff]
        %v1513 = vld [vmem:[%s10] sm:$0x1]
        %v1515 = vlaneseq
        %v1516 = vshrl.u32 %v1515, 7
        %v1517 = vsub.s32 0, %v1516
        %v1518 = vrot.slane %v1513, %v1517
        %vm1520 = vcmask 523264
        %v1522 = vsel %vm1520, %v1504, 0
        %1524 = vmatprep.subr.mxu0 0.0
        %1525 = vmatpush1.msra.mxu0 %v1505
        %1526 = vmatprep.subr.mxu0 0.0
        %1527 = vmatpush1.msra.mxu0 %v1506
        %1528 = vmatprep.subr.mxu0 0.0
        %1529 = vmatpush1.msra.mxu0 %v1507
        %1530 = vmatprep.subr.mxu0 0.0
        %1531 = vmatpush1.msra.mxu0 %v1508
        %1532 = vmatprep.subr.mxu0 0.0
        %1533 = vmatpush1.msra.mxu0 %v1509
        %1534 = vmatprep.subr.mxu0 0.0
        %1535 = vmatpush1.msra.mxu0 %v1510
        %1536 = vmatprep.subr.mxu0 0.0
        %1537 = vmatpush1.msra.mxu0 %v1511
        %1538 = vmatprep.subr.mxu0 0.0
        %1539 = vmatpush1.msra.mxu0 %v1512
        %1540 = vmatprep.subr.mxu0 0.0
        %1541 = vmatpush1.msra.mxu0 0.0
        %1542 = vmatprep.subr.mxu0 0.0
        %1543 = vmatpush1.msra.mxu0 0.0
        %1544 = vmatprep.subr.mxu0 0.0
        %1545 = vmatpush1.msra.mxu0 0.0
        %1546 = vmatprep.subr.mxu0 0.0
        %1547 = vmatpush1.msra.mxu0 0.0
        %1548 = vmatprep.subr.mxu0 0.0
        %1549 = vmatpush1.msra.mxu0 0.0
        %1550 = vmatprep.subr.mxu0 0.0
        %1551 = vmatpush1.msra.mxu0 0.0
        %1552 = vmatprep.subr.mxu0 0.0
        %1553 = vmatpush1.msra.mxu0 0.0
        %1554 = vmatprep.subr.mxu0 0.0
        %1555 = vmatpush1.msra.mxu0 0.0
        %1556 = vmatprep.subr.mxu0 0.0
        %1557 = vmatpush1.msra.mxu0 0.0
        %1558 = vmatprep.subr.mxu0 0.0
        %1559 = vmatpush1.msra.mxu0 0.0
        %1560 = vmatprep.subr.mxu0 0.0
        %1561 = vmatpush1.msra.mxu0 0.0
        %1562 = vmatprep.subr.mxu0 0.0
        %1563 = vmatpush1.msra.mxu0 0.0
        %1564 = vmatprep.subr.mxu0 0.0
        %1565 = vmatpush1.msra.mxu0 0.0
        %1566 = vmatprep.subr.mxu0 0.0
        %1567 = vmatpush1.msra.mxu0 0.0
        %1568 = vmatprep.subr.mxu0 0.0
        %1569 = vmatpush1.msra.mxu0 0.0
        %1570 = vmatprep.subr.mxu0 0.0
        %1571 = vmatpush1.msra.mxu0 0.0
        %1572 = vmatprep.subr.mxu0 0.0
        %1573 = vmatpush1.msra.mxu0 0.0
        %1574 = vmatprep.subr.mxu0 0.0
        %1575 = vmatpush1.msra.mxu0 0.0
        %1576 = vmatprep.subr.mxu0 0.0
        %1577 = vmatpush1.msra.mxu0 0.0
        %1578 = vmatprep.subr.mxu0 0.0
        %1579 = vmatpush1.msra.mxu0 0.0
        %1580 = vmatprep.subr.mxu0 0.0
        %1581 = vmatpush1.msra.mxu0 0.0
        %1582 = vmatprep.subr.mxu0 0.0
        %1583 = vmatpush1.msra.mxu0 0.0
        %1584 = vmatprep.subr.mxu0 0.0
        %1585 = vmatpush1.msra.mxu0 0.0
        %1586 = vmatprep.subr.mxu0 0.0
        %1587 = vmatpush1.msra.mxu0 0.0
        %1588 = vmatprep.mubr.f32.mxu0 0.0
        %1589 = vmatmul.mubr.f32.gmra.mrb[0].mxu0 %v1522
        %v1590 = vpop.f32.mrb[0].mxu0
        %v1591 = vadd.f32 %v1518, %v1590
        %v1592 = vpop.f32.mrb[0].mxu0
        %1593 = vdwg.mxu0
        %v1594 = vadd.f32 %v1591, %v1419
        %v1595 = vld [vmem:[%s11] sm:$0x1]
        %v1596 = vld [vmem:[%s12] sm:$0x1]
        %v1597 = vsel %vm544, %v1594, 0.0
        %1598 = vadd.xlane.f32.xlu0 %v1597
        %v1599 = vpop.xlane.xlu0 %1598
        %v1600 = vmul.f32 %v1599, %v1395
        %v1601 = vsub.f32 %v1594, %v1600
        %v1602 = vmul.f32 %v1601, %v1601
        %v1603 = vsel %vm544, %v1602, 0.0
        %1604 = vadd.xlane.f32.xlu0 %v1603
        %v1605 = vpop.xlane.xlu0 %1604
        %v1606 = vmul.f32 %v1605, %v1395
        %v1607 = vadd.f32 %v1606, 1e-05
        %v1608 = vrsqrt.pop %v1607
        %v1609 = vmul.f32 %v1601, %v1608
        %v1611 = vlaneseq
        %v1612 = vshrl.u32 %v1611, 7
        %v1613 = vsub.s32 0, %v1612
        %v1614 = vrot.slane %v1595, %v1613
        %v1616 = vmul.f32 %v1609, %v1614
        %v1618 = vlaneseq
        %v1619 = vshrl.u32 %v1618, 7
        %v1620 = vsub.s32 0, %v1619
        %v1621 = vrot.slane %v1596, %v1620
        %v1623 = vadd.f32 %v1616, %v1621
        %1624 = vst.msk [vmem:[%s524] sm:$0xff] %vm544, %v1623
        %s1625 = sand.u32 %s323, 1
        %s1626 = scalar_lea.sflag [#allocation5], %s1625
        %s1627 = sand.u32 %s323, 1
        %s1628 = smul.addr %s1627, 8
        %s1629 = scalar_lea.vmem [#allocation11], %s1628
        %s1630 = sand.u32 %s349, 1
        %s1631 = scalar_lea.sflag [#allocation13], %s1630
        %s1632 = sand.u32 %s349, 1
        %s1633 = smul.addr %s1632, 32
        %s1634 = scalar_lea.vmem [#allocation12], %s1633
        // Predicated region
        $region89: #{tpu_custom_call.1} parent=71 // pred_check
          %p1635 = pneg %p333
        $region90: #{tpu_custom_call.1} parent=71 // pred_check_branch
          %1637 = sbr.rel (%p1635) target = $region92
        $region91: #{tpu_custom_call.1} parent=71 // pred_region
          %s1639 = ssub.s32 128, 128
          %1640 = vsyncadd %s1626, %s1639
          %s1641 = smul.addr %s37, 128
          %s1642 = scalar_lea.hbm %s13, %s1641
          %s1644 = sshll.u32 %s1629, 4
          %s1645 = int_to_ptr.vmem [resolvable:$true] %s1644
          %1647 = dma.vmem_to_hbm [thread:$0]  %s1645, 128, %s1642, %s1626
        $region92: #{tpu_custom_call.1} parent=71 // pred_fallthru
          _
        // Predicated region
        $region93: #{tpu_custom_call.1} parent=71 // pred_check
          %p1648 = pneg %p359
        $region94: #{tpu_custom_call.1} parent=71 // pred_check_branch
          %1650 = sbr.rel (%p1648) target = $region96
        $region95: #{tpu_custom_call.1} parent=71 // pred_region
          %s1652 = ssub.s32 512, 512
          %1653 = vsyncadd %s1631, %s1652
          %s1654 = smul.addr %s37, 128
          %s1655 = scalar_lea.hbm %s14, %s1654
          %s1656 = sshll.u32 %s1634, 4
          %s1657 = int_to_ptr.vmem [resolvable:$true] %s1656
          %1662 = dma.vmem_to_hbm [thread:$0]  %s1657, 512, %s1655, %s1631, 128, 256, 8
        $region96: #{tpu_custom_call.1} parent=71 // pred_fallthru
          _
      $region72: #{tpu_custom_call.1} parent=5 // pred_fallthru
        _
      %p1663 = scmp.le.s32.totalorder 2, %s32
      // Predicated region
      $region97: #{tpu_custom_call.1} parent=5 // pred_check
        %p1664 = pneg %p1663
      $region98: #{tpu_custom_call.1} parent=5 // pred_check_branch
        %1666 = sbr.rel (%p1664) target = $region100
      $region99: #{tpu_custom_call.1} parent=5 // pred_region
        %s1667 = ssub.s32 %s32, 2
        // Predicated region
        $region101: #{tpu_custom_call.1} parent=99 // pred_check
          %p1668 = pneg %p339
        $region102: #{tpu_custom_call.1} parent=99 // pred_check_branch
          %1670 = sbr.rel (%p1668) target = $region104
        $region103: #{tpu_custom_call.1} parent=99 // pred_region
          %s1671 = sand.u32 %s324, 1
          %s1672 = scalar_lea.sflag [#allocation5], %s1671
          %s1673 = sand.u32 %s324, 1
          %s1674 = smul.addr %s1673, 8
          %s1675 = scalar_lea.vmem [#allocation11], %s1674
          %1676 = dma.done %s1672, 128
        $region104: #{tpu_custom_call.1} parent=99 // pred_fallthru
          _
        // Predicated region
        $region105: #{tpu_custom_call.1} parent=99 // pred_check
          %p1677 = pneg %p365
        $region106: #{tpu_custom_call.1} parent=99 // pred_check_branch
          %1679 = sbr.rel (%p1677) target = $region108
        $region107: #{tpu_custom_call.1} parent=99 // pred_region
          %s1680 = sand.u32 %s350, 1
          %s1681 = scalar_lea.sflag [#allocation13], %s1680
          %s1682 = sand.u32 %s350, 1
          %s1683 = smul.addr %s1682, 32
          %s1684 = scalar_lea.vmem [#allocation12], %s1683
          %1685 = dma.done %s1681, 512
        $region108: #{tpu_custom_call.1} parent=99 // pred_fallthru
          _
      $region100: #{tpu_custom_call.1} parent=5 // pred_fallthru
        _
    $region6: #{tpu_custom_call.1} parent=1 // loop_footer
      %s36 = sadd.s32 1, %s32
    $region7: #{tpu_custom_call.1} parent=1 // loop_footer_branch
      %31 = sbr.rel target = $region3
    $region8: #{tpu_custom_call.1} parent=1 // loop_exit
      _
    %1686 = vsyncpa [#allocation4], 1
    %s1687 = scalar_lea.sflag [#allocation4], 1
    %1688 = vsyncpa %s1687, 1
    %1689 = vsyncpa [#allocation7], 1
    %1690 = vsyncpa [#allocation10], 1
    %1691 = vsyncpa [#allocation5], 1
    %s1692 = scalar_lea.sflag [#allocation5], 1
    %1693 = vsyncpa %s1692, 1
    %1694 = vsyncpa [#allocation13], 1
    %s1695 = scalar_lea.sflag [#allocation13], 1
    %1696 = vsyncpa %s1695, 1

</llo_original>
